<compile_context>
chip_gen: v6e
topology: v6e:2x2x1
jax: 0.10.0
libtpu: 0.0.40
codegen_flags: <defaults>
</compile_context>

<pallas_src>
import functools

import jax
import jax.numpy as jnp
from jax.experimental import pallas as pl
from jax.experimental.pallas import tpu as pltpu


def _vmem_spec():
    return pl.BlockSpec(memory_space=pltpu.MemorySpace.VMEM)


def _round_up(x, m):
    return ((x + m - 1) // m) * m


# ------------------------- fused seq2seq kernel (factory bakes static dims) -------------------------
def _make_kernel(*, L, N, T, B, H, Td, Epad, Wlane, L4, r1):
    L2 = L // 2
    # conv weight slab row offsets (all multiples of 8 by construction)
    o_w20 = r1
    o_w21 = o_w20 + Wlane
    o_w30 = o_w21 + Wlane
    o_w31 = o_w30 + Wlane
    # rnn/dense weight slab row offsets
    o_enc_wih = 0
    o_enc_whh = o_enc_wih + L4 * Wlane
    o_dec_wih = o_enc_whh + H
    o_dec_whh = o_dec_wih + Epad
    o_wd = o_dec_whh + H

    def kernel(x_ref, dec_x_ref, conv_w_ref, rnn_w_ref, bias_ref, out_ref):
        f32 = jnp.float32

        b1 = bias_ref[0:1, :]
        b2 = bias_ref[1:2, :]
        b3 = bias_ref[2:3, :]
        enc_b = bias_ref[3:4, :]
        dec_b = bias_ref[4:5, :]
        bd = bias_ref[5:6, :]

        def shift_add(y0, y1):
            # y[l] = y0[l] + y1[l+1] per row-block of N; last block gets only y0
            # (padding='same' k=2 pads one zero on the RIGHT). Static slices, no zero-fill copy.
            Ltot = y0.shape[0]
            head = y0[: Ltot - N, :] + y1[N:, :]
            tail = y0[Ltot - N:, :]
            return jnp.concatenate([head, tail], axis=0)

        def maxpool2(x, Lcur):
            # MaxPool1d(kernel=2, stride=2) along the (leading, flat) length dim.
            C = x.shape[-1]
            x4 = x.reshape(Lcur // 2, 2, N, C)
            return jnp.max(x4, axis=1).reshape((Lcur // 2) * N, C)

        # ----- conv stack: flat (L*N, Wlane) activations, 128-lane dense (zero-padded cols) -----
        # conv1: two-tap im2col was done in glue -> a single matmul here.
        w1 = conv_w_ref[0:r1, :]
        y = jnp.maximum(jnp.dot(x_ref[...], w1, preferred_element_type=f32) + b1, 0.0)
        y = maxpool2(y, L)                                           # (L2*N, Wlane)

        y0 = jnp.dot(y, conv_w_ref[o_w20:o_w20 + Wlane, :], preferred_element_type=f32)
        y1 = jnp.dot(y, conv_w_ref[o_w21:o_w21 + Wlane, :], preferred_element_type=f32)
        y = jnp.maximum(shift_add(y0, y1) + b2, 0.0)
        y = maxpool2(y, L2)                                          # (L4*N, Wlane)

        y0 = jnp.dot(y, conv_w_ref[o_w30:o_w30 + Wlane, :], preferred_element_type=f32)
        y1 = jnp.dot(y, conv_w_ref[o_w31:o_w31 + Wlane, :], preferred_element_type=f32)
        y = jnp.maximum(shift_add(y0, y1) + b3, 0.0)                 # (L4*N, Wlane) conv3 out

        # ----- encoder input projection: sum_l y[l] @ W_ih[l], tree-reassociated -----
        parts = [
            jnp.dot(y[l * N:(l + 1) * N, :],
                    rnn_w_ref[o_enc_wih + l * Wlane:o_enc_wih + (l + 1) * Wlane, :],
                    preferred_element_type=f32)
            for l in range(L4)
        ]
        while len(parts) > 1:
            nxt = [parts[i] + parts[i + 1] for i in range(0, len(parts) - 1, 2)]
            if len(parts) % 2:
                nxt.append(parts[-1])
            parts = nxt
        gx_enc = parts[0] + enc_b                                    # (T*B, Wlane), rows t-major

        # ----- decoder input projection: one (Td*B, Epad) @ (Epad, Wlane) matmul -----
        gx_dec = (jnp.dot(dec_x_ref[...], rnn_w_ref[o_dec_wih:o_dec_wih + Epad, :],
                          preferred_element_type=f32) + dec_b)       # (Td*B, Wlane)

        # ----- LSTM recurrences: fully unrolled, bf16 operands on the recurrent dot -----
        enc_whh = rnn_w_ref[o_enc_whh:o_enc_whh + H, :].astype(jnp.bfloat16)
        dec_whh = rnn_w_ref[o_dec_whh:o_dec_whh + H, :].astype(jnp.bfloat16)
        wd = rnn_w_ref[o_wd:o_wd + H, :]

        def sigmoid(v):
            # tanh form: one EUP push + VPU FMAs (no divide on the serial path).
            return 0.5 * jnp.tanh(0.5 * v) + 0.5

        def lstm_step(gx_t, h, c, whh_bf16):
            g = gx_t + jnp.dot(h.astype(jnp.bfloat16), whh_bf16,
                               preferred_element_type=f32)
            sg = sigmoid(g)                      # full lane-width activations, slice after
            tg = jnp.tanh(g)
            i = sg[:, 0:H]
            f = sg[:, H:2 * H]
            o = sg[:, 3 * H:4 * H]
            gg = tg[:, 2 * H:3 * H]
            c_new = f * c + i * gg
            h_new = o * jnp.tanh(c_new)
            return h_new, c_new

        h = jnp.zeros((B, H), f32)
        c = jnp.zeros((B, H), f32)
        for t in range(T):                       # static unroll, state stays in vregs
            h, c = lstm_step(gx_enc[t * B:(t + 1) * B, :], h, c, enc_whh)

        for t in range(Td):
            h, c = lstm_step(gx_dec[t * B:(t + 1) * B, :], h, c, dec_whh)
            # Per-step vocab projection + lane-dense (Wlane=128-wide) store; off the
            # recurrence dependency chain, no hseq scratch.
            out_ref[t * B:(t + 1) * B, :] = (
                jnp.dot(h, wd, preferred_element_type=f32) + bd)

    return kernel


# ------------------------- parameters -------------------------
def init_params(key, vocab, n_channels, input_depth, num_units, embed_size=10):
    L = input_depth // n_channels
    enc_in = 128 * (L // 4)
    keys = jax.random.split(key, 18)
    s = 0.05

    def rn(k, shape):
        return jax.random.normal(k, shape, jnp.float32) * s

    return dict(
        # conv weights stored as two (Cin, Cout) taps (PyTorch (Cout, Cin, 2) transposed)
        w1_0=rn(keys[0], (n_channels, 32)), w1_1=rn(keys[1], (n_channels, 32)),
        b1=rn(keys[2], (1, 32)),
        w2_0=rn(keys[3], (32, 64)), w2_1=rn(keys[4], (32, 64)), b2=rn(keys[5], (1, 64)),
        w3_0=rn(keys[6], (64, 128)), w3_1=rn(keys[7], (64, 128)), b3=rn(keys[8], (1, 128)),
        embed=rn(keys[9], (vocab, embed_size)),
        enc_w_ih=rn(keys[10], (enc_in, 4 * num_units)),     # feature order f = c*(L//4)+l
        enc_w_hh=rn(keys[11], (num_units, 4 * num_units)),
        enc_b=rn(keys[12], (1, 4 * num_units)),             # b_ih + b_hh combined
        dec_w_ih=rn(keys[13], (embed_size, 4 * num_units)),
        dec_w_hh=rn(keys[14], (num_units, 4 * num_units)),
        dec_b=rn(keys[15], (1, 4 * num_units)),
        dense_w=rn(keys[16], (num_units, vocab)),
        dense_b=rn(keys[17], (1, vocab)),
    )


# ------------------------- forward (glue + single pallas_call) -------------------------
@functools.partial(jax.jit, static_argnames=("n_channels", "max_time", "num_units"))
def seq2seq_forward(params, inputs, dec_inputs, *, n_channels, max_time, num_units):
    B, T, Din = inputs.shape
    assert T == max_time
    assert Din % n_channels == 0
    Cin = n_channels
    L = Din // Cin
    assert L % 4 == 0, "input_depth // n_channels must be divisible by 4 (two maxpools)"
    L4 = L // 4
    N = B * T
    H = num_units
    assert H % 8 == 0
    G = 4 * H
    V = params["dense_w"].shape[1]
    Vpad = _round_up(V, 128)
    Wlane = _round_up(max(G, Vpad, 128), 128)   # shared lane width of all packed slabs
    E = params["embed"].shape[1]
    Epad = _round_up(E, 8)
    Td = dec_inputs.shape[1]
    r1 = _round_up(2 * Cin, 8)
    f32 = jnp.float32

    def padw(w, rows, cols):
        return jnp.pad(w.astype(f32), ((0, rows - w.shape[0]), (0, cols - w.shape[1])))

    # Conv input in (L, N, Cin) layout with rows t-major (n = t*B + b), two-tap im2col
    # done here so conv1 is a single in-kernel matmul.
    x_lnc = jnp.transpose(inputs.reshape(B, T, Cin, L), (3, 1, 0, 2)).reshape(L, N, Cin)
    x_next = jnp.concatenate([x_lnc[1:], jnp.zeros_like(x_lnc[:1])], axis=0)
    x_im2col = jnp.concatenate([x_lnc, x_next], axis=-1).reshape(L * N, 2 * Cin)
    x_im2col = jnp.pad(x_im2col, ((0, 0), (0, r1 - 2 * Cin)))

    # Conv-weight slab (rows, Wlane); K padded to Wlane so activations stay 128-lane dense.
    w1cat = jnp.concatenate([params["w1_0"], params["w1_1"]], axis=0)   # (2*Cin, 32)
    conv_w = jnp.concatenate([
        padw(w1cat, r1, Wlane),
        padw(params["w2_0"], Wlane, Wlane),
        padw(params["w2_1"], Wlane, Wlane),
        padw(params["w3_0"], Wlane, Wlane),
        padw(params["w3_1"], Wlane, Wlane),
    ], axis=0)

    # RNN / dense weight slab. enc_w_ih permuted from torch's flatten order f = c*L4 + l
    # into per-position (L4, 128, G) blocks consumed by the in-kernel sum-over-l matmuls.
    enc_wih = jnp.transpose(params["enc_w_ih"].reshape(128, L4, G), (1, 0, 2))
    enc_wih = jnp.pad(enc_wih, ((0, 0), (0, Wlane - 128), (0, Wlane - G)))
    enc_wih = enc_wih.reshape(L4 * Wlane, Wlane)
    rnn_w = jnp.concatenate([
        enc_wih,
        padw(params["enc_w_hh"], H, Wlane),
        padw(params["dec_w_ih"], Epad, Wlane),
        padw(params["dec_w_hh"], H, Wlane),
        padw(params["dense_w"], H, Wlane),
    ], axis=0)

    # All biases in one (8, Wlane) slab.
    def padb(b):
        return jnp.pad(b.astype(f32), ((0, 0), (0, Wlane - b.shape[1])))
    biases = jnp.concatenate([
        padb(params["b1"]), padb(params["b2"]), padb(params["b3"]),
        padb(params["enc_b"]), padb(params["dec_b"]), padb(params["dense_b"]),
        jnp.zeros((2, Wlane), f32),
    ], axis=0)

    # Decoder embedding lookup (gather) stays in XLA glue; rows t-major to match layout.
    emb = jnp.take(params["embed"], dec_inputs, axis=0)                 # (B, Td, E)
    dec_x = jnp.transpose(emb, (1, 0, 2)).reshape(Td * B, E)
    dec_x = jnp.pad(dec_x, ((0, 0), (0, Epad - E)))

    kernel = _make_kernel(L=L, N=N, T=T, B=B, H=H, Td=Td,
                          Epad=Epad, Wlane=Wlane, L4=L4, r1=r1)

    out_flat = pl.pallas_call(
        kernel,
        out_shape=jax.ShapeDtypeStruct((Td * B, Wlane), f32),
        in_specs=[_vmem_spec()] * 5,
        out_specs=_vmem_spec(),
    )(x_im2col, dec_x, conv_w, rnn_w, biases)

    # (Td*B, Wlane) -> (B, Td, V)
    return jnp.transpose(out_flat.reshape(Td, B, Wlane)[..., :V], (1, 0, 2))


if __name__ == "__main__":
    # Small config consistent with the module's constraints:
    # input_depth % n_channels == 0 and (input_depth // n_channels) % 4 == 0
    n_channels = 4
    input_depth = 64        # -> per-sample length L = 16, encoder input = 128*4 = 512
    num_units = 32
    max_time = 8
    vocab = 12              # len(char2numY)
    B = 2

    key = jax.random.PRNGKey(0)
    k_params, k_in, k_dec = jax.random.split(key, 3)
    params = init_params(k_params, vocab, n_channels, input_depth, num_units)

    inputs = jax.random.normal(k_in, (B, max_time, input_depth), jnp.float32)
    dec_inputs = jax.random.randint(k_dec, (B, max_time), 0, vocab, jnp.int32)

    logits = seq2seq_forward(params, inputs, dec_inputs,
                             n_channels=n_channels, max_time=max_time,
                             num_units=num_units)
    jax.block_until_ready(logits)
    assert logits.shape == (B, max_time, vocab), logits.shape
    assert bool(jnp.all(jnp.isfinite(logits)))
    print("KERNEL_OK")
</pallas_src>

<mosaic_0001>
module attributes {stable_mosaic.version = 11 : i64} {
  func.func @kernel(%arg0: memref<256x8xf32, #tpu.memory_space<vmem>>, %arg1: memref<16x16xf32, #tpu.memory_space<vmem>>, %arg2: memref<520x128xf32, #tpu.memory_space<vmem>>, %arg3: memref<624x128xf32, #tpu.memory_space<vmem>>, %arg4: memref<8x128xf32, #tpu.memory_space<vmem>>, %arg5: memref<16x128xf32, #tpu.memory_space<vmem>>) attributes {dimension_semantics = [], scalar_prefetch = 0 : i64, scratch_operands = 0 : i64, tpu.core_type = #tpu.core_type<tc>} {
    %c0 = arith.constant 0 : index
    %c0_0 = arith.constant 0 : index
    %0 = vector.load %arg4[%c0, %c0_0] : memref<8x128xf32, #tpu.memory_space<vmem>>, vector<1x128xf32>
    %c1 = arith.constant 1 : index
    %c0_1 = arith.constant 0 : index
    %1 = vector.load %arg4[%c1, %c0_1] : memref<8x128xf32, #tpu.memory_space<vmem>>, vector<1x128xf32>
    %c2 = arith.constant 2 : index
    %c0_2 = arith.constant 0 : index
    %2 = vector.load %arg4[%c2, %c0_2] : memref<8x128xf32, #tpu.memory_space<vmem>>, vector<1x128xf32>
    %c3 = arith.constant 3 : index
    %c0_3 = arith.constant 0 : index
    %3 = vector.load %arg4[%c3, %c0_3] : memref<8x128xf32, #tpu.memory_space<vmem>>, vector<1x128xf32>
    %c4 = arith.constant 4 : index
    %c0_4 = arith.constant 0 : index
    %4 = vector.load %arg4[%c4, %c0_4] : memref<8x128xf32, #tpu.memory_space<vmem>>, vector<1x128xf32>
    %c5 = arith.constant 5 : index
    %c0_5 = arith.constant 0 : index
    %5 = vector.load %arg4[%c5, %c0_5] : memref<8x128xf32, #tpu.memory_space<vmem>>, vector<1x128xf32>
    %c0_6 = arith.constant 0 : index
    %c0_7 = arith.constant 0 : index
    %6 = vector.load %arg2[%c0_6, %c0_7] : memref<520x128xf32, #tpu.memory_space<vmem>>, vector<8x128xf32>
    %c0_8 = arith.constant 0 : index
    %c0_9 = arith.constant 0 : index
    %7 = vector.load %arg0[%c0_8, %c0_9] : memref<256x8xf32, #tpu.memory_space<vmem>>, vector<256x8xf32>
    %cst = arith.constant dense<0.000000e+00> : vector<256x128xf32>
    %8 = tpu.matmul %7, %6, %cst {dimension_numbers = #tpu.dot_dimension_numbers<[1], [0], [0], [1], [0, 0, 1, 1], [], []>} : vector<256x8xf32>, vector<8x128xf32>, vector<256x128xf32> -> vector<256x128xf32>
    %9 = vector.broadcast %0 : vector<1x128xf32> to vector<256x128xf32>
    %10 = arith.addf %8, %9 : vector<256x128xf32>
    %cst_10 = arith.constant 0.000000e+00 : f32
    %11 = vector.broadcast %cst_10 : f32 to vector<256x128xf32>
    %12 = arith.maximumf %10, %11 : vector<256x128xf32>
    %13 = vector.shape_cast %12 : vector<256x128xf32> to vector<8x2x16x128xf32>
    %cst_11 = arith.constant dense<0xFF800000> : vector<8x16x128xf32>
    %14 = vector.multi_reduction <maximumf>, %13, %cst_11 [1] : vector<8x2x16x128xf32> to vector<8x16x128xf32>
    %15 = vector.shape_cast %14 : vector<8x16x128xf32> to vector<128x128xf32>
    %c8 = arith.constant 8 : index
    %c0_12 = arith.constant 0 : index
    %16 = vector.load %arg2[%c8, %c0_12] : memref<520x128xf32, #tpu.memory_space<vmem>>, vector<128x128xf32>
    %cst_13 = arith.constant dense<0.000000e+00> : vector<128x128xf32>
    %17 = tpu.matmul %15, %16, %cst_13 {dimension_numbers = #tpu.dot_dimension_numbers<[1], [0], [0], [1], [0, 0, 1, 1], [], []>} : vector<128x128xf32>, vector<128x128xf32>, vector<128x128xf32> -> vector<128x128xf32>
    %c136 = arith.constant 136 : index
    %c0_14 = arith.constant 0 : index
    %18 = vector.load %arg2[%c136, %c0_14] : memref<520x128xf32, #tpu.memory_space<vmem>>, vector<128x128xf32>
    %cst_15 = arith.constant dense<0.000000e+00> : vector<128x128xf32>
    %19 = tpu.matmul %15, %18, %cst_15 {dimension_numbers = #tpu.dot_dimension_numbers<[1], [0], [0], [1], [0, 0, 1, 1], [], []>} : vector<128x128xf32>, vector<128x128xf32>, vector<128x128xf32> -> vector<128x128xf32>
    %20 = vector.extract_strided_slice %17 {offsets = [0, 0], sizes = [112, 128], strides = [1, 1]} : vector<128x128xf32> to vector<112x128xf32>
    %21 = vector.extract_strided_slice %19 {offsets = [16, 0], sizes = [112, 128], strides = [1, 1]} : vector<128x128xf32> to vector<112x128xf32>
    %22 = arith.addf %20, %21 : vector<112x128xf32>
    %23 = vector.extract_strided_slice %17 {offsets = [112, 0], sizes = [16, 128], strides = [1, 1]} : vector<128x128xf32> to vector<16x128xf32>
    %24 = tpu.concatenate %22, %23 in 0 : vector<112x128xf32>, vector<16x128xf32> -> vector<128x128xf32>
    %25 = vector.broadcast %1 : vector<1x128xf32> to vector<128x128xf32>
    %26 = arith.addf %24, %25 : vector<128x128xf32>
    %cst_16 = arith.constant 0.000000e+00 : f32
    %27 = vector.broadcast %cst_16 : f32 to vector<128x128xf32>
    %28 = arith.maximumf %26, %27 : vector<128x128xf32>
    %29 = vector.shape_cast %28 : vector<128x128xf32> to vector<4x2x16x128xf32>
    %cst_17 = arith.constant dense<0xFF800000> : vector<4x16x128xf32>
    %30 = vector.multi_reduction <maximumf>, %29, %cst_17 [1] : vector<4x2x16x128xf32> to vector<4x16x128xf32>
    %31 = vector.shape_cast %30 : vector<4x16x128xf32> to vector<64x128xf32>
    %c264 = arith.constant 264 : index
    %c0_18 = arith.constant 0 : index
    %32 = vector.load %arg2[%c264, %c0_18] : memref<520x128xf32, #tpu.memory_space<vmem>>, vector<128x128xf32>
    %cst_19 = arith.constant dense<0.000000e+00> : vector<64x128xf32>
    %33 = tpu.matmul %31, %32, %cst_19 {dimension_numbers = #tpu.dot_dimension_numbers<[1], [0], [0], [1], [0, 0, 1, 1], [], []>} : vector<64x128xf32>, vector<128x128xf32>, vector<64x128xf32> -> vector<64x128xf32>
    %c392 = arith.constant 392 : index
    %c0_20 = arith.constant 0 : index
    %34 = vector.load %arg2[%c392, %c0_20] : memref<520x128xf32, #tpu.memory_space<vmem>>, vector<128x128xf32>
    %cst_21 = arith.constant dense<0.000000e+00> : vector<64x128xf32>
    %35 = tpu.matmul %31, %34, %cst_21 {dimension_numbers = #tpu.dot_dimension_numbers<[1], [0], [0], [1], [0, 0, 1, 1], [], []>} : vector<64x128xf32>, vector<128x128xf32>, vector<64x128xf32> -> vector<64x128xf32>
    %36 = vector.extract_strided_slice %33 {offsets = [0, 0], sizes = [48, 128], strides = [1, 1]} : vector<64x128xf32> to vector<48x128xf32>
    %37 = vector.extract_strided_slice %35 {offsets = [16, 0], sizes = [48, 128], strides = [1, 1]} : vector<64x128xf32> to vector<48x128xf32>
    %38 = arith.addf %36, %37 : vector<48x128xf32>
    %39 = vector.extract_strided_slice %33 {offsets = [48, 0], sizes = [16, 128], strides = [1, 1]} : vector<64x128xf32> to vector<16x128xf32>
    %40 = tpu.concatenate %38, %39 in 0 : vector<48x128xf32>, vector<16x128xf32> -> vector<64x128xf32>
    %41 = vector.broadcast %2 : vector<1x128xf32> to vector<64x128xf32>
    %42 = arith.addf %40, %41 : vector<64x128xf32>
    %cst_22 = arith.constant 0.000000e+00 : f32
    %43 = vector.broadcast %cst_22 : f32 to vector<64x128xf32>
    %44 = arith.maximumf %42, %43 : vector<64x128xf32>
    %45 = vector.extract_strided_slice %44 {offsets = [0, 0], sizes = [16, 128], strides = [1, 1]} : vector<64x128xf32> to vector<16x128xf32>
    %c0_23 = arith.constant 0 : index
    %c0_24 = arith.constant 0 : index
    %46 = vector.load %arg3[%c0_23, %c0_24] : memref<624x128xf32, #tpu.memory_space<vmem>>, vector<128x128xf32>
    %cst_25 = arith.constant dense<0.000000e+00> : vector<16x128xf32>
    %47 = tpu.matmul %45, %46, %cst_25 {dimension_numbers = #tpu.dot_dimension_numbers<[1], [0], [0], [1], [0, 0, 1, 1], [], []>} : vector<16x128xf32>, vector<128x128xf32>, vector<16x128xf32> -> vector<16x128xf32>
    %48 = vector.extract_strided_slice %44 {offsets = [16, 0], sizes = [16, 128], strides = [1, 1]} : vector<64x128xf32> to vector<16x128xf32>
    %c128 = arith.constant 128 : index
    %c0_26 = arith.constant 0 : index
    %49 = vector.load %arg3[%c128, %c0_26] : memref<624x128xf32, #tpu.memory_space<vmem>>, vector<128x128xf32>
    %cst_27 = arith.constant dense<0.000000e+00> : vector<16x128xf32>
    %50 = tpu.matmul %48, %49, %cst_27 {dimension_numbers = #tpu.dot_dimension_numbers<[1], [0], [0], [1], [0, 0, 1, 1], [], []>} : vector<16x128xf32>, vector<128x128xf32>, vector<16x128xf32> -> vector<16x128xf32>
    %51 = vector.extract_strided_slice %44 {offsets = [32, 0], sizes = [16, 128], strides = [1, 1]} : vector<64x128xf32> to vector<16x128xf32>
    %c256 = arith.constant 256 : index
    %c0_28 = arith.constant 0 : index
    %52 = vector.load %arg3[%c256, %c0_28] : memref<624x128xf32, #tpu.memory_space<vmem>>, vector<128x128xf32>
    %cst_29 = arith.constant dense<0.000000e+00> : vector<16x128xf32>
    %53 = tpu.matmul %51, %52, %cst_29 {dimension_numbers = #tpu.dot_dimension_numbers<[1], [0], [0], [1], [0, 0, 1, 1], [], []>} : vector<16x128xf32>, vector<128x128xf32>, vector<16x128xf32> -> vector<16x128xf32>
    %54 = vector.extract_strided_slice %44 {offsets = [48, 0], sizes = [16, 128], strides = [1, 1]} : vector<64x128xf32> to vector<16x128xf32>
    %c384 = arith.constant 384 : index
    %c0_30 = arith.constant 0 : index
    %55 = vector.load %arg3[%c384, %c0_30] : memref<624x128xf32, #tpu.memory_space<vmem>>, vector<128x128xf32>
    %cst_31 = arith.constant dense<0.000000e+00> : vector<16x128xf32>
    %56 = tpu.matmul %54, %55, %cst_31 {dimension_numbers = #tpu.dot_dimension_numbers<[1], [0], [0], [1], [0, 0, 1, 1], [], []>} : vector<16x128xf32>, vector<128x128xf32>, vector<16x128xf32> -> vector<16x128xf32>
    %57 = arith.addf %47, %50 : vector<16x128xf32>
    %58 = arith.addf %53, %56 : vector<16x128xf32>
    %59 = arith.addf %57, %58 : vector<16x128xf32>
    %60 = vector.broadcast %3 : vector<1x128xf32> to vector<16x128xf32>
    %61 = arith.addf %59, %60 : vector<16x128xf32>
    %c0_32 = arith.constant 0 : index
    %c0_33 = arith.constant 0 : index
    %62 = vector.load %arg1[%c0_32, %c0_33] : memref<16x16xf32, #tpu.memory_space<vmem>>, vector<16x16xf32>
    %c544 = arith.constant 544 : index
    %c0_34 = arith.constant 0 : index
    %63 = vector.load %arg3[%c544, %c0_34] : memref<624x128xf32, #tpu.memory_space<vmem>>, vector<16x128xf32>
    %cst_35 = arith.constant dense<0.000000e+00> : vector<16x128xf32>
    %64 = tpu.matmul %62, %63, %cst_35 {dimension_numbers = #tpu.dot_dimension_numbers<[1], [0], [0], [1], [0, 0, 1, 1], [], []>} : vector<16x16xf32>, vector<16x128xf32>, vector<16x128xf32> -> vector<16x128xf32>
    %65 = vector.broadcast %4 : vector<1x128xf32> to vector<16x128xf32>
    %66 = arith.addf %64, %65 : vector<16x128xf32>
    %c512 = arith.constant 512 : index
    %c0_36 = arith.constant 0 : index
    %67 = vector.load %arg3[%c512, %c0_36] : memref<624x128xf32, #tpu.memory_space<vmem>>, vector<32x128xf32>
    %68 = arith.truncf %67 : vector<32x128xf32> to vector<32x128xbf16>
    %c560 = arith.constant 560 : index
    %c0_37 = arith.constant 0 : index
    %69 = vector.load %arg3[%c560, %c0_37] : memref<624x128xf32, #tpu.memory_space<vmem>>, vector<32x128xf32>
    %70 = arith.truncf %69 : vector<32x128xf32> to vector<32x128xbf16>
    %c592 = arith.constant 592 : index
    %c0_38 = arith.constant 0 : index
    %71 = vector.load %arg3[%c592, %c0_38] : memref<624x128xf32, #tpu.memory_space<vmem>>, vector<32x128xf32>
    %cst_39 = arith.constant 0.000000e+00 : f32
    %72 = vector.broadcast %cst_39 : f32 to vector<2x32xf32>
    %cst_40 = arith.constant 0.000000e+00 : f32
    %73 = vector.broadcast %cst_40 : f32 to vector<2x32xf32>
    %74 = vector.extract_strided_slice %61 {offsets = [0, 0], sizes = [2, 128], strides = [1, 1]} : vector<16x128xf32> to vector<2x128xf32>
    %75 = arith.truncf %72 : vector<2x32xf32> to vector<2x32xbf16>
    %cst_41 = arith.constant dense<0.000000e+00> : vector<2x128xf32>
    %76 = tpu.matmul %75, %68, %cst_41 {dimension_numbers = #tpu.dot_dimension_numbers<[1], [0], [0], [1], [0, 0, 1, 1], [], []>} : vector<2x32xbf16>, vector<32x128xbf16>, vector<2x128xf32> -> vector<2x128xf32>
    %77 = arith.addf %74, %76 : vector<2x128xf32>
    %cst_42 = arith.constant 5.000000e-01 : f32
    %78 = vector.broadcast %cst_42 : f32 to vector<2x128xf32>
    %79 = arith.mulf %78, %77 : vector<2x128xf32>
    %80 = math.tanh %79 : vector<2x128xf32>
    %cst_43 = arith.constant 5.000000e-01 : f32
    %81 = vector.broadcast %cst_43 : f32 to vector<2x128xf32>
    %82 = arith.mulf %81, %80 : vector<2x128xf32>
    %cst_44 = arith.constant 5.000000e-01 : f32
    %83 = vector.broadcast %cst_44 : f32 to vector<2x128xf32>
    %84 = arith.addf %82, %83 : vector<2x128xf32>
    %85 = math.tanh %77 : vector<2x128xf32>
    %86 = vector.extract_strided_slice %84 {offsets = [0, 0], sizes = [2, 32], strides = [1, 1]} : vector<2x128xf32> to vector<2x32xf32>
    %87 = vector.extract_strided_slice %84 {offsets = [0, 32], sizes = [2, 32], strides = [1, 1]} : vector<2x128xf32> to vector<2x32xf32>
    %88 = vector.extract_strided_slice %84 {offsets = [0, 96], sizes = [2, 32], strides = [1, 1]} : vector<2x128xf32> to vector<2x32xf32>
    %89 = vector.extract_strided_slice %85 {offsets = [0, 64], sizes = [2, 32], strides = [1, 1]} : vector<2x128xf32> to vector<2x32xf32>
    %90 = arith.mulf %87, %73 : vector<2x32xf32>
    %91 = arith.mulf %86, %89 : vector<2x32xf32>
    %92 = arith.addf %90, %91 : vector<2x32xf32>
    %93 = math.tanh %92 : vector<2x32xf32>
    %94 = arith.mulf %88, %93 : vector<2x32xf32>
    %95 = vector.extract_strided_slice %61 {offsets = [2, 0], sizes = [2, 128], strides = [1, 1]} : vector<16x128xf32> to vector<2x128xf32>
    %96 = arith.truncf %94 : vector<2x32xf32> to vector<2x32xbf16>
    %cst_45 = arith.constant dense<0.000000e+00> : vector<2x128xf32>
    %97 = tpu.matmul %96, %68, %cst_45 {dimension_numbers = #tpu.dot_dimension_numbers<[1], [0], [0], [1], [0, 0, 1, 1], [], []>} : vector<2x32xbf16>, vector<32x128xbf16>, vector<2x128xf32> -> vector<2x128xf32>
    %98 = arith.addf %95, %97 : vector<2x128xf32>
    %cst_46 = arith.constant 5.000000e-01 : f32
    %99 = vector.broadcast %cst_46 : f32 to vector<2x128xf32>
    %100 = arith.mulf %99, %98 : vector<2x128xf32>
    %101 = math.tanh %100 : vector<2x128xf32>
    %cst_47 = arith.constant 5.000000e-01 : f32
    %102 = vector.broadcast %cst_47 : f32 to vector<2x128xf32>
    %103 = arith.mulf %102, %101 : vector<2x128xf32>
    %cst_48 = arith.constant 5.000000e-01 : f32
    %104 = vector.broadcast %cst_48 : f32 to vector<2x128xf32>
    %105 = arith.addf %103, %104 : vector<2x128xf32>
    %106 = math.tanh %98 : vector<2x128xf32>
    %107 = vector.extract_strided_slice %105 {offsets = [0, 0], sizes = [2, 32], strides = [1, 1]} : vector<2x128xf32> to vector<2x32xf32>
    %108 = vector.extract_strided_slice %105 {offsets = [0, 32], sizes = [2, 32], strides = [1, 1]} : vector<2x128xf32> to vector<2x32xf32>
    %109 = vector.extract_strided_slice %105 {offsets = [0, 96], sizes = [2, 32], strides = [1, 1]} : vector<2x128xf32> to vector<2x32xf32>
    %110 = vector.extract_strided_slice %106 {offsets = [0, 64], sizes = [2, 32], strides = [1, 1]} : vector<2x128xf32> to vector<2x32xf32>
    %111 = arith.mulf %108, %92 : vector<2x32xf32>
    %112 = arith.mulf %107, %110 : vector<2x32xf32>
    %113 = arith.addf %111, %112 : vector<2x32xf32>
    %114 = math.tanh %113 : vector<2x32xf32>
    %115 = arith.mulf %109, %114 : vector<2x32xf32>
    %116 = vector.extract_strided_slice %61 {offsets = [4, 0], sizes = [2, 128], strides = [1, 1]} : vector<16x128xf32> to vector<2x128xf32>
    %117 = arith.truncf %115 : vector<2x32xf32> to vector<2x32xbf16>
    %cst_49 = arith.constant dense<0.000000e+00> : vector<2x128xf32>
    %118 = tpu.matmul %117, %68, %cst_49 {dimension_numbers = #tpu.dot_dimension_numbers<[1], [0], [0], [1], [0, 0, 1, 1], [], []>} : vector<2x32xbf16>, vector<32x128xbf16>, vector<2x128xf32> -> vector<2x128xf32>
    %119 = arith.addf %116, %118 : vector<2x128xf32>
    %cst_50 = arith.constant 5.000000e-01 : f32
    %120 = vector.broadcast %cst_50 : f32 to vector<2x128xf32>
    %121 = arith.mulf %120, %119 : vector<2x128xf32>
    %122 = math.tanh %121 : vector<2x128xf32>
    %cst_51 = arith.constant 5.000000e-01 : f32
    %123 = vector.broadcast %cst_51 : f32 to vector<2x128xf32>
    %124 = arith.mulf %123, %122 : vector<2x128xf32>
    %cst_52 = arith.constant 5.000000e-01 : f32
    %125 = vector.broadcast %cst_52 : f32 to vector<2x128xf32>
    %126 = arith.addf %124, %125 : vector<2x128xf32>
    %127 = math.tanh %119 : vector<2x128xf32>
    %128 = vector.extract_strided_slice %126 {offsets = [0, 0], sizes = [2, 32], strides = [1, 1]} : vector<2x128xf32> to vector<2x32xf32>
    %129 = vector.extract_strided_slice %126 {offsets = [0, 32], sizes = [2, 32], strides = [1, 1]} : vector<2x128xf32> to vector<2x32xf32>
    %130 = vector.extract_strided_slice %126 {offsets = [0, 96], sizes = [2, 32], strides = [1, 1]} : vector<2x128xf32> to vector<2x32xf32>
    %131 = vector.extract_strided_slice %127 {offsets = [0, 64], sizes = [2, 32], strides = [1, 1]} : vector<2x128xf32> to vector<2x32xf32>
    %132 = arith.mulf %129, %113 : vector<2x32xf32>
    %133 = arith.mulf %128, %131 : vector<2x32xf32>
    %134 = arith.addf %132, %133 : vector<2x32xf32>
    %135 = math.tanh %134 : vector<2x32xf32>
    %136 = arith.mulf %130, %135 : vector<2x32xf32>
    %137 = vector.extract_strided_slice %61 {offsets = [6, 0], sizes = [2, 128], strides = [1, 1]} : vector<16x128xf32> to vector<2x128xf32>
    %138 = arith.truncf %136 : vector<2x32xf32> to vector<2x32xbf16>
    %cst_53 = arith.constant dense<0.000000e+00> : vector<2x128xf32>
    %139 = tpu.matmul %138, %68, %cst_53 {dimension_numbers = #tpu.dot_dimension_numbers<[1], [0], [0], [1], [0, 0, 1, 1], [], []>} : vector<2x32xbf16>, vector<32x128xbf16>, vector<2x128xf32> -> vector<2x128xf32>
    %140 = arith.addf %137, %139 : vector<2x128xf32>
    %cst_54 = arith.constant 5.000000e-01 : f32
    %141 = vector.broadcast %cst_54 : f32 to vector<2x128xf32>
    %142 = arith.mulf %141, %140 : vector<2x128xf32>
    %143 = math.tanh %142 : vector<2x128xf32>
    %cst_55 = arith.constant 5.000000e-01 : f32
    %144 = vector.broadcast %cst_55 : f32 to vector<2x128xf32>
    %145 = arith.mulf %144, %143 : vector<2x128xf32>
    %cst_56 = arith.constant 5.000000e-01 : f32
    %146 = vector.broadcast %cst_56 : f32 to vector<2x128xf32>
    %147 = arith.addf %145, %146 : vector<2x128xf32>
    %148 = math.tanh %140 : vector<2x128xf32>
    %149 = vector.extract_strided_slice %147 {offsets = [0, 0], sizes = [2, 32], strides = [1, 1]} : vector<2x128xf32> to vector<2x32xf32>
    %150 = vector.extract_strided_slice %147 {offsets = [0, 32], sizes = [2, 32], strides = [1, 1]} : vector<2x128xf32> to vector<2x32xf32>
    %151 = vector.extract_strided_slice %147 {offsets = [0, 96], sizes = [2, 32], strides = [1, 1]} : vector<2x128xf32> to vector<2x32xf32>
    %152 = vector.extract_strided_slice %148 {offsets = [0, 64], sizes = [2, 32], strides = [1, 1]} : vector<2x128xf32> to vector<2x32xf32>
    %153 = arith.mulf %150, %134 : vector<2x32xf32>
    %154 = arith.mulf %149, %152 : vector<2x32xf32>
    %155 = arith.addf %153, %154 : vector<2x32xf32>
    %156 = math.tanh %155 : vector<2x32xf32>
    %157 = arith.mulf %151, %156 : vector<2x32xf32>
    %158 = vector.extract_strided_slice %61 {offsets = [8, 0], sizes = [2, 128], strides = [1, 1]} : vector<16x128xf32> to vector<2x128xf32>
    %159 = arith.truncf %157 : vector<2x32xf32> to vector<2x32xbf16>
    %cst_57 = arith.constant dense<0.000000e+00> : vector<2x128xf32>
    %160 = tpu.matmul %159, %68, %cst_57 {dimension_numbers = #tpu.dot_dimension_numbers<[1], [0], [0], [1], [0, 0, 1, 1], [], []>} : vector<2x32xbf16>, vector<32x128xbf16>, vector<2x128xf32> -> vector<2x128xf32>
    %161 = arith.addf %158, %160 : vector<2x128xf32>
    %cst_58 = arith.constant 5.000000e-01 : f32
    %162 = vector.broadcast %cst_58 : f32 to vector<2x128xf32>
    %163 = arith.mulf %162, %161 : vector<2x128xf32>
    %164 = math.tanh %163 : vector<2x128xf32>
    %cst_59 = arith.constant 5.000000e-01 : f32
    %165 = vector.broadcast %cst_59 : f32 to vector<2x128xf32>
    %166 = arith.mulf %165, %164 : vector<2x128xf32>
    %cst_60 = arith.constant 5.000000e-01 : f32
    %167 = vector.broadcast %cst_60 : f32 to vector<2x128xf32>
    %168 = arith.addf %166, %167 : vector<2x128xf32>
    %169 = math.tanh %161 : vector<2x128xf32>
    %170 = vector.extract_strided_slice %168 {offsets = [0, 0], sizes = [2, 32], strides = [1, 1]} : vector<2x128xf32> to vector<2x32xf32>
    %171 = vector.extract_strided_slice %168 {offsets = [0, 32], sizes = [2, 32], strides = [1, 1]} : vector<2x128xf32> to vector<2x32xf32>
    %172 = vector.extract_strided_slice %168 {offsets = [0, 96], sizes = [2, 32], strides = [1, 1]} : vector<2x128xf32> to vector<2x32xf32>
    %173 = vector.extract_strided_slice %169 {offsets = [0, 64], sizes = [2, 32], strides = [1, 1]} : vector<2x128xf32> to vector<2x32xf32>
    %174 = arith.mulf %171, %155 : vector<2x32xf32>
    %175 = arith.mulf %170, %173 : vector<2x32xf32>
    %176 = arith.addf %174, %175 : vector<2x32xf32>
    %177 = math.tanh %176 : vector<2x32xf32>
    %178 = arith.mulf %172, %177 : vector<2x32xf32>
    %179 = vector.extract_strided_slice %61 {offsets = [10, 0], sizes = [2, 128], strides = [1, 1]} : vector<16x128xf32> to vector<2x128xf32>
    %180 = arith.truncf %178 : vector<2x32xf32> to vector<2x32xbf16>
    %cst_61 = arith.constant dense<0.000000e+00> : vector<2x128xf32>
    %181 = tpu.matmul %180, %68, %cst_61 {dimension_numbers = #tpu.dot_dimension_numbers<[1], [0], [0], [1], [0, 0, 1, 1], [], []>} : vector<2x32xbf16>, vector<32x128xbf16>, vector<2x128xf32> -> vector<2x128xf32>
    %182 = arith.addf %179, %181 : vector<2x128xf32>
    %cst_62 = arith.constant 5.000000e-01 : f32
    %183 = vector.broadcast %cst_62 : f32 to vector<2x128xf32>
    %184 = arith.mulf %183, %182 : vector<2x128xf32>
    %185 = math.tanh %184 : vector<2x128xf32>
    %cst_63 = arith.constant 5.000000e-01 : f32
    %186 = vector.broadcast %cst_63 : f32 to vector<2x128xf32>
    %187 = arith.mulf %186, %185 : vector<2x128xf32>
    %cst_64 = arith.constant 5.000000e-01 : f32
    %188 = vector.broadcast %cst_64 : f32 to vector<2x128xf32>
    %189 = arith.addf %187, %188 : vector<2x128xf32>
    %190 = math.tanh %182 : vector<2x128xf32>
    %191 = vector.extract_strided_slice %189 {offsets = [0, 0], sizes = [2, 32], strides = [1, 1]} : vector<2x128xf32> to vector<2x32xf32>
    %192 = vector.extract_strided_slice %189 {offsets = [0, 32], sizes = [2, 32], strides = [1, 1]} : vector<2x128xf32> to vector<2x32xf32>
    %193 = vector.extract_strided_slice %189 {offsets = [0, 96], sizes = [2, 32], strides = [1, 1]} : vector<2x128xf32> to vector<2x32xf32>
    %194 = vector.extract_strided_slice %190 {offsets = [0, 64], sizes = [2, 32], strides = [1, 1]} : vector<2x128xf32> to vector<2x32xf32>
    %195 = arith.mulf %192, %176 : vector<2x32xf32>
    %196 = arith.mulf %191, %194 : vector<2x32xf32>
    %197 = arith.addf %195, %196 : vector<2x32xf32>
    %198 = math.tanh %197 : vector<2x32xf32>
    %199 = arith.mulf %193, %198 : vector<2x32xf32>
    %200 = vector.extract_strided_slice %61 {offsets = [12, 0], sizes = [2, 128], strides = [1, 1]} : vector<16x128xf32> to vector<2x128xf32>
    %201 = arith.truncf %199 : vector<2x32xf32> to vector<2x32xbf16>
    %cst_65 = arith.constant dense<0.000000e+00> : vector<2x128xf32>
    %202 = tpu.matmul %201, %68, %cst_65 {dimension_numbers = #tpu.dot_dimension_numbers<[1], [0], [0], [1], [0, 0, 1, 1], [], []>} : vector<2x32xbf16>, vector<32x128xbf16>, vector<2x128xf32> -> vector<2x128xf32>
    %203 = arith.addf %200, %202 : vector<2x128xf32>
    %cst_66 = arith.constant 5.000000e-01 : f32
    %204 = vector.broadcast %cst_66 : f32 to vector<2x128xf32>
    %205 = arith.mulf %204, %203 : vector<2x128xf32>
    %206 = math.tanh %205 : vector<2x128xf32>
    %cst_67 = arith.constant 5.000000e-01 : f32
    %207 = vector.broadcast %cst_67 : f32 to vector<2x128xf32>
    %208 = arith.mulf %207, %206 : vector<2x128xf32>
    %cst_68 = arith.constant 5.000000e-01 : f32
    %209 = vector.broadcast %cst_68 : f32 to vector<2x128xf32>
    %210 = arith.addf %208, %209 : vector<2x128xf32>
    %211 = math.tanh %203 : vector<2x128xf32>
    %212 = vector.extract_strided_slice %210 {offsets = [0, 0], sizes = [2, 32], strides = [1, 1]} : vector<2x128xf32> to vector<2x32xf32>
    %213 = vector.extract_strided_slice %210 {offsets = [0, 32], sizes = [2, 32], strides = [1, 1]} : vector<2x128xf32> to vector<2x32xf32>
    %214 = vector.extract_strided_slice %210 {offsets = [0, 96], sizes = [2, 32], strides = [1, 1]} : vector<2x128xf32> to vector<2x32xf32>
    %215 = vector.extract_strided_slice %211 {offsets = [0, 64], sizes = [2, 32], strides = [1, 1]} : vector<2x128xf32> to vector<2x32xf32>
    %216 = arith.mulf %213, %197 : vector<2x32xf32>
    %217 = arith.mulf %212, %215 : vector<2x32xf32>
    %218 = arith.addf %216, %217 : vector<2x32xf32>
    %219 = math.tanh %218 : vector<2x32xf32>
    %220 = arith.mulf %214, %219 : vector<2x32xf32>
    %221 = vector.extract_strided_slice %61 {offsets = [14, 0], sizes = [2, 128], strides = [1, 1]} : vector<16x128xf32> to vector<2x128xf32>
    %222 = arith.truncf %220 : vector<2x32xf32> to vector<2x32xbf16>
    %cst_69 = arith.constant dense<0.000000e+00> : vector<2x128xf32>
    %223 = tpu.matmul %222, %68, %cst_69 {dimension_numbers = #tpu.dot_dimension_numbers<[1], [0], [0], [1], [0, 0, 1, 1], [], []>} : vector<2x32xbf16>, vector<32x128xbf16>, vector<2x128xf32> -> vector<2x128xf32>
    %224 = arith.addf %221, %223 : vector<2x128xf32>
    %cst_70 = arith.constant 5.000000e-01 : f32
    %225 = vector.broadcast %cst_70 : f32 to vector<2x128xf32>
    %226 = arith.mulf %225, %224 : vector<2x128xf32>
    %227 = math.tanh %226 : vector<2x128xf32>
    %cst_71 = arith.constant 5.000000e-01 : f32
    %228 = vector.broadcast %cst_71 : f32 to vector<2x128xf32>
    %229 = arith.mulf %228, %227 : vector<2x128xf32>
    %cst_72 = arith.constant 5.000000e-01 : f32
    %230 = vector.broadcast %cst_72 : f32 to vector<2x128xf32>
    %231 = arith.addf %229, %230 : vector<2x128xf32>
    %232 = math.tanh %224 : vector<2x128xf32>
    %233 = vector.extract_strided_slice %231 {offsets = [0, 0], sizes = [2, 32], strides = [1, 1]} : vector<2x128xf32> to vector<2x32xf32>
    %234 = vector.extract_strided_slice %231 {offsets = [0, 32], sizes = [2, 32], strides = [1, 1]} : vector<2x128xf32> to vector<2x32xf32>
    %235 = vector.extract_strided_slice %231 {offsets = [0, 96], sizes = [2, 32], strides = [1, 1]} : vector<2x128xf32> to vector<2x32xf32>
    %236 = vector.extract_strided_slice %232 {offsets = [0, 64], sizes = [2, 32], strides = [1, 1]} : vector<2x128xf32> to vector<2x32xf32>
    %237 = arith.mulf %234, %218 : vector<2x32xf32>
    %238 = arith.mulf %233, %236 : vector<2x32xf32>
    %239 = arith.addf %237, %238 : vector<2x32xf32>
    %240 = math.tanh %239 : vector<2x32xf32>
    %241 = arith.mulf %235, %240 : vector<2x32xf32>
    %242 = vector.extract_strided_slice %66 {offsets = [0, 0], sizes = [2, 128], strides = [1, 1]} : vector<16x128xf32> to vector<2x128xf32>
    %243 = arith.truncf %241 : vector<2x32xf32> to vector<2x32xbf16>
    %cst_73 = arith.constant dense<0.000000e+00> : vector<2x128xf32>
    %244 = tpu.matmul %243, %70, %cst_73 {dimension_numbers = #tpu.dot_dimension_numbers<[1], [0], [0], [1], [0, 0, 1, 1], [], []>} : vector<2x32xbf16>, vector<32x128xbf16>, vector<2x128xf32> -> vector<2x128xf32>
    %245 = arith.addf %242, %244 : vector<2x128xf32>
    %cst_74 = arith.constant 5.000000e-01 : f32
    %246 = vector.broadcast %cst_74 : f32 to vector<2x128xf32>
    %247 = arith.mulf %246, %245 : vector<2x128xf32>
    %248 = math.tanh %247 : vector<2x128xf32>
    %cst_75 = arith.constant 5.000000e-01 : f32
    %249 = vector.broadcast %cst_75 : f32 to vector<2x128xf32>
    %250 = arith.mulf %249, %248 : vector<2x128xf32>
    %cst_76 = arith.constant 5.000000e-01 : f32
    %251 = vector.broadcast %cst_76 : f32 to vector<2x128xf32>
    %252 = arith.addf %250, %251 : vector<2x128xf32>
    %253 = math.tanh %245 : vector<2x128xf32>
    %254 = vector.extract_strided_slice %252 {offsets = [0, 0], sizes = [2, 32], strides = [1, 1]} : vector<2x128xf32> to vector<2x32xf32>
    %255 = vector.extract_strided_slice %252 {offsets = [0, 32], sizes = [2, 32], strides = [1, 1]} : vector<2x128xf32> to vector<2x32xf32>
    %256 = vector.extract_strided_slice %252 {offsets = [0, 96], sizes = [2, 32], strides = [1, 1]} : vector<2x128xf32> to vector<2x32xf32>
    %257 = vector.extract_strided_slice %253 {offsets = [0, 64], sizes = [2, 32], strides = [1, 1]} : vector<2x128xf32> to vector<2x32xf32>
    %258 = arith.mulf %255, %239 : vector<2x32xf32>
    %259 = arith.mulf %254, %257 : vector<2x32xf32>
    %260 = arith.addf %258, %259 : vector<2x32xf32>
    %261 = math.tanh %260 : vector<2x32xf32>
    %262 = arith.mulf %256, %261 : vector<2x32xf32>
    %cst_77 = arith.constant dense<0.000000e+00> : vector<2x128xf32>
    %263 = tpu.matmul %262, %71, %cst_77 {dimension_numbers = #tpu.dot_dimension_numbers<[1], [0], [0], [1], [0, 0, 1, 1], [], []>} : vector<2x32xf32>, vector<32x128xf32>, vector<2x128xf32> -> vector<2x128xf32>
    %264 = vector.broadcast %5 : vector<1x128xf32> to vector<2x128xf32>
    %265 = arith.addf %263, %264 : vector<2x128xf32>
    %c0_78 = arith.constant 0 : index
    %c0_79 = arith.constant 0 : index
    %266 = vector.load %arg5[%c0_78, %c0_79] : memref<16x128xf32, #tpu.memory_space<vmem>>, vector<2x128xf32>
    tpu.vector_store %arg5[%c0_78, %c0_79], %265 {strides = array<i32>} : memref<16x128xf32, #tpu.memory_space<vmem>>, vector<2x128xf32>,
    %267 = vector.extract_strided_slice %66 {offsets = [2, 0], sizes = [2, 128], strides = [1, 1]} : vector<16x128xf32> to vector<2x128xf32>
    %268 = arith.truncf %262 : vector<2x32xf32> to vector<2x32xbf16>
    %cst_80 = arith.constant dense<0.000000e+00> : vector<2x128xf32>
    %269 = tpu.matmul %268, %70, %cst_80 {dimension_numbers = #tpu.dot_dimension_numbers<[1], [0], [0], [1], [0, 0, 1, 1], [], []>} : vector<2x32xbf16>, vector<32x128xbf16>, vector<2x128xf32> -> vector<2x128xf32>
    %270 = arith.addf %267, %269 : vector<2x128xf32>
    %cst_81 = arith.constant 5.000000e-01 : f32
    %271 = vector.broadcast %cst_81 : f32 to vector<2x128xf32>
    %272 = arith.mulf %271, %270 : vector<2x128xf32>
    %273 = math.tanh %272 : vector<2x128xf32>
    %cst_82 = arith.constant 5.000000e-01 : f32
    %274 = vector.broadcast %cst_82 : f32 to vector<2x128xf32>
    %275 = arith.mulf %274, %273 : vector<2x128xf32>
    %cst_83 = arith.constant 5.000000e-01 : f32
    %276 = vector.broadcast %cst_83 : f32 to vector<2x128xf32>
    %277 = arith.addf %275, %276 : vector<2x128xf32>
    %278 = math.tanh %270 : vector<2x128xf32>
    %279 = vector.extract_strided_slice %277 {offsets = [0, 0], sizes = [2, 32], strides = [1, 1]} : vector<2x128xf32> to vector<2x32xf32>
    %280 = vector.extract_strided_slice %277 {offsets = [0, 32], sizes = [2, 32], strides = [1, 1]} : vector<2x128xf32> to vector<2x32xf32>
    %281 = vector.extract_strided_slice %277 {offsets = [0, 96], sizes = [2, 32], strides = [1, 1]} : vector<2x128xf32> to vector<2x32xf32>
    %282 = vector.extract_strided_slice %278 {offsets = [0, 64], sizes = [2, 32], strides = [1, 1]} : vector<2x128xf32> to vector<2x32xf32>
    %283 = arith.mulf %280, %260 : vector<2x32xf32>
    %284 = arith.mulf %279, %282 : vector<2x32xf32>
    %285 = arith.addf %283, %284 : vector<2x32xf32>
    %286 = math.tanh %285 : vector<2x32xf32>
    %287 = arith.mulf %281, %286 : vector<2x32xf32>
    %cst_84 = arith.constant dense<0.000000e+00> : vector<2x128xf32>
    %288 = tpu.matmul %287, %71, %cst_84 {dimension_numbers = #tpu.dot_dimension_numbers<[1], [0], [0], [1], [0, 0, 1, 1], [], []>} : vector<2x32xf32>, vector<32x128xf32>, vector<2x128xf32> -> vector<2x128xf32>
    %289 = vector.broadcast %5 : vector<1x128xf32> to vector<2x128xf32>
    %290 = arith.addf %288, %289 : vector<2x128xf32>
    %c2_85 = arith.constant 2 : index
    %c0_86 = arith.constant 0 : index
    %291 = vector.load %arg5[%c2_85, %c0_86] : memref<16x128xf32, #tpu.memory_space<vmem>>, vector<2x128xf32>
    tpu.vector_store %arg5[%c2_85, %c0_86], %290 {strides = array<i32>} : memref<16x128xf32, #tpu.memory_space<vmem>>, vector<2x128xf32>,
    %292 = vector.extract_strided_slice %66 {offsets = [4, 0], sizes = [2, 128], strides = [1, 1]} : vector<16x128xf32> to vector<2x128xf32>
    %293 = arith.truncf %287 : vector<2x32xf32> to vector<2x32xbf16>
    %cst_87 = arith.constant dense<0.000000e+00> : vector<2x128xf32>
    %294 = tpu.matmul %293, %70, %cst_87 {dimension_numbers = #tpu.dot_dimension_numbers<[1], [0], [0], [1], [0, 0, 1, 1], [], []>} : vector<2x32xbf16>, vector<32x128xbf16>, vector<2x128xf32> -> vector<2x128xf32>
    %295 = arith.addf %292, %294 : vector<2x128xf32>
    %cst_88 = arith.constant 5.000000e-01 : f32
    %296 = vector.broadcast %cst_88 : f32 to vector<2x128xf32>
    %297 = arith.mulf %296, %295 : vector<2x128xf32>
    %298 = math.tanh %297 : vector<2x128xf32>
    %cst_89 = arith.constant 5.000000e-01 : f32
    %299 = vector.broadcast %cst_89 : f32 to vector<2x128xf32>
    %300 = arith.mulf %299, %298 : vector<2x128xf32>
    %cst_90 = arith.constant 5.000000e-01 : f32
    %301 = vector.broadcast %cst_90 : f32 to vector<2x128xf32>
    %302 = arith.addf %300, %301 : vector<2x128xf32>
    %303 = math.tanh %295 : vector<2x128xf32>
    %304 = vector.extract_strided_slice %302 {offsets = [0, 0], sizes = [2, 32], strides = [1, 1]} : vector<2x128xf32> to vector<2x32xf32>
    %305 = vector.extract_strided_slice %302 {offsets = [0, 32], sizes = [2, 32], strides = [1, 1]} : vector<2x128xf32> to vector<2x32xf32>
    %306 = vector.extract_strided_slice %302 {offsets = [0, 96], sizes = [2, 32], strides = [1, 1]} : vector<2x128xf32> to vector<2x32xf32>
    %307 = vector.extract_strided_slice %303 {offsets = [0, 64], sizes = [2, 32], strides = [1, 1]} : vector<2x128xf32> to vector<2x32xf32>
    %308 = arith.mulf %305, %285 : vector<2x32xf32>
    %309 = arith.mulf %304, %307 : vector<2x32xf32>
    %310 = arith.addf %308, %309 : vector<2x32xf32>
    %311 = math.tanh %310 : vector<2x32xf32>
    %312 = arith.mulf %306, %311 : vector<2x32xf32>
    %cst_91 = arith.constant dense<0.000000e+00> : vector<2x128xf32>
    %313 = tpu.matmul %312, %71, %cst_91 {dimension_numbers = #tpu.dot_dimension_numbers<[1], [0], [0], [1], [0, 0, 1, 1], [], []>} : vector<2x32xf32>, vector<32x128xf32>, vector<2x128xf32> -> vector<2x128xf32>
    %314 = vector.broadcast %5 : vector<1x128xf32> to vector<2x128xf32>
    %315 = arith.addf %313, %314 : vector<2x128xf32>
    %c4_92 = arith.constant 4 : index
    %c0_93 = arith.constant 0 : index
    %316 = vector.load %arg5[%c4_92, %c0_93] : memref<16x128xf32, #tpu.memory_space<vmem>>, vector<2x128xf32>
    tpu.vector_store %arg5[%c4_92, %c0_93], %315 {strides = array<i32>} : memref<16x128xf32, #tpu.memory_space<vmem>>, vector<2x128xf32>,
    %317 = vector.extract_strided_slice %66 {offsets = [6, 0], sizes = [2, 128], strides = [1, 1]} : vector<16x128xf32> to vector<2x128xf32>
    %318 = arith.truncf %312 : vector<2x32xf32> to vector<2x32xbf16>
    %cst_94 = arith.constant dense<0.000000e+00> : vector<2x128xf32>
    %319 = tpu.matmul %318, %70, %cst_94 {dimension_numbers = #tpu.dot_dimension_numbers<[1], [0], [0], [1], [0, 0, 1, 1], [], []>} : vector<2x32xbf16>, vector<32x128xbf16>, vector<2x128xf32> -> vector<2x128xf32>
    %320 = arith.addf %317, %319 : vector<2x128xf32>
    %cst_95 = arith.constant 5.000000e-01 : f32
    %321 = vector.broadcast %cst_95 : f32 to vector<2x128xf32>
    %322 = arith.mulf %321, %320 : vector<2x128xf32>
    %323 = math.tanh %322 : vector<2x128xf32>
    %cst_96 = arith.constant 5.000000e-01 : f32
    %324 = vector.broadcast %cst_96 : f32 to vector<2x128xf32>
    %325 = arith.mulf %324, %323 : vector<2x128xf32>
    %cst_97 = arith.constant 5.000000e-01 : f32
    %326 = vector.broadcast %cst_97 : f32 to vector<2x128xf32>
    %327 = arith.addf %325, %326 : vector<2x128xf32>
    %328 = math.tanh %320 : vector<2x128xf32>
    %329 = vector.extract_strided_slice %327 {offsets = [0, 0], sizes = [2, 32], strides = [1, 1]} : vector<2x128xf32> to vector<2x32xf32>
    %330 = vector.extract_strided_slice %327 {offsets = [0, 32], sizes = [2, 32], strides = [1, 1]} : vector<2x128xf32> to vector<2x32xf32>
    %331 = vector.extract_strided_slice %327 {offsets = [0, 96], sizes = [2, 32], strides = [1, 1]} : vector<2x128xf32> to vector<2x32xf32>
    %332 = vector.extract_strided_slice %328 {offsets = [0, 64], sizes = [2, 32], strides = [1, 1]} : vector<2x128xf32> to vector<2x32xf32>
    %333 = arith.mulf %330, %310 : vector<2x32xf32>
    %334 = arith.mulf %329, %332 : vector<2x32xf32>
    %335 = arith.addf %333, %334 : vector<2x32xf32>
    %336 = math.tanh %335 : vector<2x32xf32>
    %337 = arith.mulf %331, %336 : vector<2x32xf32>
    %cst_98 = arith.constant dense<0.000000e+00> : vector<2x128xf32>
    %338 = tpu.matmul %337, %71, %cst_98 {dimension_numbers = #tpu.dot_dimension_numbers<[1], [0], [0], [1], [0, 0, 1, 1], [], []>} : vector<2x32xf32>, vector<32x128xf32>, vector<2x128xf32> -> vector<2x128xf32>
    %339 = vector.broadcast %5 : vector<1x128xf32> to vector<2x128xf32>
    %340 = arith.addf %338, %339 : vector<2x128xf32>
    %c6 = arith.constant 6 : index
    %c0_99 = arith.constant 0 : index
    %341 = vector.load %arg5[%c6, %c0_99] : memref<16x128xf32, #tpu.memory_space<vmem>>, vector<2x128xf32>
    tpu.vector_store %arg5[%c6, %c0_99], %340 {strides = array<i32>} : memref<16x128xf32, #tpu.memory_space<vmem>>, vector<2x128xf32>,
    %342 = vector.extract_strided_slice %66 {offsets = [8, 0], sizes = [2, 128], strides = [1, 1]} : vector<16x128xf32> to vector<2x128xf32>
    %343 = arith.truncf %337 : vector<2x32xf32> to vector<2x32xbf16>
    %cst_100 = arith.constant dense<0.000000e+00> : vector<2x128xf32>
    %344 = tpu.matmul %343, %70, %cst_100 {dimension_numbers = #tpu.dot_dimension_numbers<[1], [0], [0], [1], [0, 0, 1, 1], [], []>} : vector<2x32xbf16>, vector<32x128xbf16>, vector<2x128xf32> -> vector<2x128xf32>
    %345 = arith.addf %342, %344 : vector<2x128xf32>
    %cst_101 = arith.constant 5.000000e-01 : f32
    %346 = vector.broadcast %cst_101 : f32 to vector<2x128xf32>
    %347 = arith.mulf %346, %345 : vector<2x128xf32>
    %348 = math.tanh %347 : vector<2x128xf32>
    %cst_102 = arith.constant 5.000000e-01 : f32
    %349 = vector.broadcast %cst_102 : f32 to vector<2x128xf32>
    %350 = arith.mulf %349, %348 : vector<2x128xf32>
    %cst_103 = arith.constant 5.000000e-01 : f32
    %351 = vector.broadcast %cst_103 : f32 to vector<2x128xf32>
    %352 = arith.addf %350, %351 : vector<2x128xf32>
    %353 = math.tanh %345 : vector<2x128xf32>
    %354 = vector.extract_strided_slice %352 {offsets = [0, 0], sizes = [2, 32], strides = [1, 1]} : vector<2x128xf32> to vector<2x32xf32>
    %355 = vector.extract_strided_slice %352 {offsets = [0, 32], sizes = [2, 32], strides = [1, 1]} : vector<2x128xf32> to vector<2x32xf32>
    %356 = vector.extract_strided_slice %352 {offsets = [0, 96], sizes = [2, 32], strides = [1, 1]} : vector<2x128xf32> to vector<2x32xf32>
    %357 = vector.extract_strided_slice %353 {offsets = [0, 64], sizes = [2, 32], strides = [1, 1]} : vector<2x128xf32> to vector<2x32xf32>
    %358 = arith.mulf %355, %335 : vector<2x32xf32>
    %359 = arith.mulf %354, %357 : vector<2x32xf32>
    %360 = arith.addf %358, %359 : vector<2x32xf32>
    %361 = math.tanh %360 : vector<2x32xf32>
    %362 = arith.mulf %356, %361 : vector<2x32xf32>
    %cst_104 = arith.constant dense<0.000000e+00> : vector<2x128xf32>
    %363 = tpu.matmul %362, %71, %cst_104 {dimension_numbers = #tpu.dot_dimension_numbers<[1], [0], [0], [1], [0, 0, 1, 1], [], []>} : vector<2x32xf32>, vector<32x128xf32>, vector<2x128xf32> -> vector<2x128xf32>
    %364 = vector.broadcast %5 : vector<1x128xf32> to vector<2x128xf32>
    %365 = arith.addf %363, %364 : vector<2x128xf32>
    %c8_105 = arith.constant 8 : index
    %c0_106 = arith.constant 0 : index
    %366 = vector.load %arg5[%c8_105, %c0_106] : memref<16x128xf32, #tpu.memory_space<vmem>>, vector<2x128xf32>
    tpu.vector_store %arg5[%c8_105, %c0_106], %365 {strides = array<i32>} : memref<16x128xf32, #tpu.memory_space<vmem>>, vector<2x128xf32>,
    %367 = vector.extract_strided_slice %66 {offsets = [10, 0], sizes = [2, 128], strides = [1, 1]} : vector<16x128xf32> to vector<2x128xf32>
    %368 = arith.truncf %362 : vector<2x32xf32> to vector<2x32xbf16>
    %cst_107 = arith.constant dense<0.000000e+00> : vector<2x128xf32>
    %369 = tpu.matmul %368, %70, %cst_107 {dimension_numbers = #tpu.dot_dimension_numbers<[1], [0], [0], [1], [0, 0, 1, 1], [], []>} : vector<2x32xbf16>, vector<32x128xbf16>, vector<2x128xf32> -> vector<2x128xf32>
    %370 = arith.addf %367, %369 : vector<2x128xf32>
    %cst_108 = arith.constant 5.000000e-01 : f32
    %371 = vector.broadcast %cst_108 : f32 to vector<2x128xf32>
    %372 = arith.mulf %371, %370 : vector<2x128xf32>
    %373 = math.tanh %372 : vector<2x128xf32>
    %cst_109 = arith.constant 5.000000e-01 : f32
    %374 = vector.broadcast %cst_109 : f32 to vector<2x128xf32>
    %375 = arith.mulf %374, %373 : vector<2x128xf32>
    %cst_110 = arith.constant 5.000000e-01 : f32
    %376 = vector.broadcast %cst_110 : f32 to vector<2x128xf32>
    %377 = arith.addf %375, %376 : vector<2x128xf32>
    %378 = math.tanh %370 : vector<2x128xf32>
    %379 = vector.extract_strided_slice %377 {offsets = [0, 0], sizes = [2, 32], strides = [1, 1]} : vector<2x128xf32> to vector<2x32xf32>
    %380 = vector.extract_strided_slice %377 {offsets = [0, 32], sizes = [2, 32], strides = [1, 1]} : vector<2x128xf32> to vector<2x32xf32>
    %381 = vector.extract_strided_slice %377 {offsets = [0, 96], sizes = [2, 32], strides = [1, 1]} : vector<2x128xf32> to vector<2x32xf32>
    %382 = vector.extract_strided_slice %378 {offsets = [0, 64], sizes = [2, 32], strides = [1, 1]} : vector<2x128xf32> to vector<2x32xf32>
    %383 = arith.mulf %380, %360 : vector<2x32xf32>
    %384 = arith.mulf %379, %382 : vector<2x32xf32>
    %385 = arith.addf %383, %384 : vector<2x32xf32>
    %386 = math.tanh %385 : vector<2x32xf32>
    %387 = arith.mulf %381, %386 : vector<2x32xf32>
    %cst_111 = arith.constant dense<0.000000e+00> : vector<2x128xf32>
    %388 = tpu.matmul %387, %71, %cst_111 {dimension_numbers = #tpu.dot_dimension_numbers<[1], [0], [0], [1], [0, 0, 1, 1], [], []>} : vector<2x32xf32>, vector<32x128xf32>, vector<2x128xf32> -> vector<2x128xf32>
    %389 = vector.broadcast %5 : vector<1x128xf32> to vector<2x128xf32>
    %390 = arith.addf %388, %389 : vector<2x128xf32>
    %c10 = arith.constant 10 : index
    %c0_112 = arith.constant 0 : index
    %391 = vector.load %arg5[%c10, %c0_112] : memref<16x128xf32, #tpu.memory_space<vmem>>, vector<2x128xf32>
    tpu.vector_store %arg5[%c10, %c0_112], %390 {strides = array<i32>} : memref<16x128xf32, #tpu.memory_space<vmem>>, vector<2x128xf32>,
    %392 = vector.extract_strided_slice %66 {offsets = [12, 0], sizes = [2, 128], strides = [1, 1]} : vector<16x128xf32> to vector<2x128xf32>
    %393 = arith.truncf %387 : vector<2x32xf32> to vector<2x32xbf16>
    %cst_113 = arith.constant dense<0.000000e+00> : vector<2x128xf32>
    %394 = tpu.matmul %393, %70, %cst_113 {dimension_numbers = #tpu.dot_dimension_numbers<[1], [0], [0], [1], [0, 0, 1, 1], [], []>} : vector<2x32xbf16>, vector<32x128xbf16>, vector<2x128xf32> -> vector<2x128xf32>
    %395 = arith.addf %392, %394 : vector<2x128xf32>
    %cst_114 = arith.constant 5.000000e-01 : f32
    %396 = vector.broadcast %cst_114 : f32 to vector<2x128xf32>
    %397 = arith.mulf %396, %395 : vector<2x128xf32>
    %398 = math.tanh %397 : vector<2x128xf32>
    %cst_115 = arith.constant 5.000000e-01 : f32
    %399 = vector.broadcast %cst_115 : f32 to vector<2x128xf32>
    %400 = arith.mulf %399, %398 : vector<2x128xf32>
    %cst_116 = arith.constant 5.000000e-01 : f32
    %401 = vector.broadcast %cst_116 : f32 to vector<2x128xf32>
    %402 = arith.addf %400, %401 : vector<2x128xf32>
    %403 = math.tanh %395 : vector<2x128xf32>
    %404 = vector.extract_strided_slice %402 {offsets = [0, 0], sizes = [2, 32], strides = [1, 1]} : vector<2x128xf32> to vector<2x32xf32>
    %405 = vector.extract_strided_slice %402 {offsets = [0, 32], sizes = [2, 32], strides = [1, 1]} : vector<2x128xf32> to vector<2x32xf32>
    %406 = vector.extract_strided_slice %402 {offsets = [0, 96], sizes = [2, 32], strides = [1, 1]} : vector<2x128xf32> to vector<2x32xf32>
    %407 = vector.extract_strided_slice %403 {offsets = [0, 64], sizes = [2, 32], strides = [1, 1]} : vector<2x128xf32> to vector<2x32xf32>
    %408 = arith.mulf %405, %385 : vector<2x32xf32>
    %409 = arith.mulf %404, %407 : vector<2x32xf32>
    %410 = arith.addf %408, %409 : vector<2x32xf32>
    %411 = math.tanh %410 : vector<2x32xf32>
    %412 = arith.mulf %406, %411 : vector<2x32xf32>
    %cst_117 = arith.constant dense<0.000000e+00> : vector<2x128xf32>
    %413 = tpu.matmul %412, %71, %cst_117 {dimension_numbers = #tpu.dot_dimension_numbers<[1], [0], [0], [1], [0, 0, 1, 1], [], []>} : vector<2x32xf32>, vector<32x128xf32>, vector<2x128xf32> -> vector<2x128xf32>
    %414 = vector.broadcast %5 : vector<1x128xf32> to vector<2x128xf32>
    %415 = arith.addf %413, %414 : vector<2x128xf32>
    %c12 = arith.constant 12 : index
    %c0_118 = arith.constant 0 : index
    %416 = vector.load %arg5[%c12, %c0_118] : memref<16x128xf32, #tpu.memory_space<vmem>>, vector<2x128xf32>
    tpu.vector_store %arg5[%c12, %c0_118], %415 {strides = array<i32>} : memref<16x128xf32, #tpu.memory_space<vmem>>, vector<2x128xf32>,
    %417 = vector.extract_strided_slice %66 {offsets = [14, 0], sizes = [2, 128], strides = [1, 1]} : vector<16x128xf32> to vector<2x128xf32>
    %418 = arith.truncf %412 : vector<2x32xf32> to vector<2x32xbf16>
    %cst_119 = arith.constant dense<0.000000e+00> : vector<2x128xf32>
    %419 = tpu.matmul %418, %70, %cst_119 {dimension_numbers = #tpu.dot_dimension_numbers<[1], [0], [0], [1], [0, 0, 1, 1], [], []>} : vector<2x32xbf16>, vector<32x128xbf16>, vector<2x128xf32> -> vector<2x128xf32>
    %420 = arith.addf %417, %419 : vector<2x128xf32>
    %cst_120 = arith.constant 5.000000e-01 : f32
    %421 = vector.broadcast %cst_120 : f32 to vector<2x128xf32>
    %422 = arith.mulf %421, %420 : vector<2x128xf32>
    %423 = math.tanh %422 : vector<2x128xf32>
    %cst_121 = arith.constant 5.000000e-01 : f32
    %424 = vector.broadcast %cst_121 : f32 to vector<2x128xf32>
    %425 = arith.mulf %424, %423 : vector<2x128xf32>
    %cst_122 = arith.constant 5.000000e-01 : f32
    %426 = vector.broadcast %cst_122 : f32 to vector<2x128xf32>
    %427 = arith.addf %425, %426 : vector<2x128xf32>
    %428 = math.tanh %420 : vector<2x128xf32>
    %429 = vector.extract_strided_slice %427 {offsets = [0, 0], sizes = [2, 32], strides = [1, 1]} : vector<2x128xf32> to vector<2x32xf32>
    %430 = vector.extract_strided_slice %427 {offsets = [0, 32], sizes = [2, 32], strides = [1, 1]} : vector<2x128xf32> to vector<2x32xf32>
    %431 = vector.extract_strided_slice %427 {offsets = [0, 96], sizes = [2, 32], strides = [1, 1]} : vector<2x128xf32> to vector<2x32xf32>
    %432 = vector.extract_strided_slice %428 {offsets = [0, 64], sizes = [2, 32], strides = [1, 1]} : vector<2x128xf32> to vector<2x32xf32>
    %433 = arith.mulf %430, %410 : vector<2x32xf32>
    %434 = arith.mulf %429, %432 : vector<2x32xf32>
    %435 = arith.addf %433, %434 : vector<2x32xf32>
    %436 = math.tanh %435 : vector<2x32xf32>
    %437 = arith.mulf %431, %436 : vector<2x32xf32>
    %cst_123 = arith.constant dense<0.000000e+00> : vector<2x128xf32>
    %438 = tpu.matmul %437, %71, %cst_123 {dimension_numbers = #tpu.dot_dimension_numbers<[1], [0], [0], [1], [0, 0, 1, 1], [], []>} : vector<2x32xf32>, vector<32x128xf32>, vector<2x128xf32> -> vector<2x128xf32>
    %439 = vector.broadcast %5 : vector<1x128xf32> to vector<2x128xf32>
    %440 = arith.addf %438, %439 : vector<2x128xf32>
    %c14 = arith.constant 14 : index
    %c0_124 = arith.constant 0 : index
    %441 = vector.load %arg5[%c14, %c0_124] : memref<16x128xf32, #tpu.memory_space<vmem>>, vector<2x128xf32>
    tpu.vector_store %arg5[%c14, %c0_124], %440 {strides = array<i32>} : memref<16x128xf32, #tpu.memory_space<vmem>>, vector<2x128xf32>,
    return
  }
}

</mosaic_0001>

<llo_original>
// kernel: seq2seq_forward.1
$region0: #{seq2seq_forward.1}
  #allocation0 [shape = 'u32[]', space=smem, size = 0x4, offset = 0x4, fixed_abs, tag = 'smem constant byte address 0x4 - core index']
  #allocation1 [shape = 'u32[144,128]{1,0:T(1,128)}', space=vmem, size = 0x12000, scoped, tag = 'internal scratch']
  %s0 = inlined_call_operand.vmem [shape: f32[256,8], index: 0, kind: input, shape index: {}]
  %s1 = inlined_call_operand.vmem [shape: f32[16,16], index: 1, kind: input, shape index: {}]
  %s2 = inlined_call_operand.vmem [shape: f32[520,128], index: 2, kind: input, shape index: {}]
  %s3 = inlined_call_operand.vmem [shape: f32[624,128], index: 3, kind: input, shape index: {}]
  %s4 = inlined_call_operand.vmem [shape: f32[8,128], index: 4, kind: input, shape index: {}]
  %s5 = inlined_call_operand.vmem [shape: f32[16,128], index: 5, kind: output, shape index: {}]
  %s6 = sld [smem:[#allocation0]]
  $region30: #{seq2seq_forward.1} parent=0
    _
  %s8 = ssub.s32 1, %s6
  %s9 = scalar_select 0, %s8, %s6
  // Predicated region
  $region2: #{seq2seq_forward.1} parent=0 // pred_check
    _
  $region3: #{seq2seq_forward.1} parent=0 // pred_check_branch
    %11 = sbr.rel (0) target = $region5
  $region4: #{seq2seq_forward.1} parent=0 // pred_region
    _
  $region5: #{seq2seq_forward.1} parent=0 // pred_fallthru
    _
  // Predicated region
  $region6: #{seq2seq_forward.1} parent=0 // pred_check
    _
  $region7: #{seq2seq_forward.1} parent=0 // pred_check_branch
    %13 = sbr.rel (0) target = $region9
  $region8: #{seq2seq_forward.1} parent=0 // pred_region
    _
  $region9: #{seq2seq_forward.1} parent=0 // pred_fallthru
    _
  // Predicated region
  $region10: #{seq2seq_forward.1} parent=0 // pred_check
    _
  $region11: #{seq2seq_forward.1} parent=0 // pred_check_branch
    %15 = sbr.rel (0) target = $region13
  $region12: #{seq2seq_forward.1} parent=0 // pred_region
    _
  $region13: #{seq2seq_forward.1} parent=0 // pred_fallthru
    _
  // Predicated region
  $region14: #{seq2seq_forward.1} parent=0 // pred_check
    _
  $region15: #{seq2seq_forward.1} parent=0 // pred_check_branch
    %17 = sbr.rel (0) target = $region17
  $region16: #{seq2seq_forward.1} parent=0 // pred_region
    _
  $region17: #{seq2seq_forward.1} parent=0 // pred_fallthru
    _
  // Predicated region
  $region18: #{seq2seq_forward.1} parent=0 // pred_check
    _
  $region19: #{seq2seq_forward.1} parent=0 // pred_check_branch
    %19 = sbr.rel (0) target = $region21
  $region20: #{seq2seq_forward.1} parent=0 // pred_region
    _
  $region21: #{seq2seq_forward.1} parent=0 // pred_fallthru
    _
  %v21 = vld [vmem:[%s4] sm:$0x1]
  %v22 = vld [vmem:[%s4 + $0x1] sm:$0x1]
  %v23 = vld [vmem:[%s4 + $0x2] sm:$0x1]
  %v24 = vld [vmem:[%s4 + $0x3] sm:$0x1]
  %v25 = vld [vmem:[%s4 + $0x4] sm:$0x1]
  %v26 = vld [vmem:[%s4 + $0x5] sm:$0x1]
  %v27 = vld [vmem:[%s2] sm:$0xff]
  %v28 = vld [vmem:[%s0] sm:$0xff]
  %v29 = vld [vmem:[%s0 + $0x8] sm:$0xff]
  %v30 = vld [vmem:[%s0 + $0x10] sm:$0xff]
  %v31 = vld [vmem:[%s0 + $0x18] sm:$0xff]
  %v32 = vld [vmem:[%s0 + $0x20] sm:$0xff]
  %v33 = vld [vmem:[%s0 + $0x28] sm:$0xff]
  %v34 = vld [vmem:[%s0 + $0x30] sm:$0xff]
  %v35 = vld [vmem:[%s0 + $0x38] sm:$0xff]
  %v36 = vld [vmem:[%s0 + $0x40] sm:$0xff]
  %v37 = vld [vmem:[%s0 + $0x48] sm:$0xff]
  %v38 = vld [vmem:[%s0 + $0x50] sm:$0xff]
  %v39 = vld [vmem:[%s0 + $0x58] sm:$0xff]
  %v40 = vld [vmem:[%s0 + $0x60] sm:$0xff]
  %v41 = vld [vmem:[%s0 + $0x68] sm:$0xff]
  %v42 = vld [vmem:[%s0 + $0x70] sm:$0xff]
  %v43 = vld [vmem:[%s0 + $0x78] sm:$0xff]
  %v44 = vld [vmem:[%s0 + $0x80] sm:$0xff]
  %v45 = vld [vmem:[%s0 + $0x88] sm:$0xff]
  %v46 = vld [vmem:[%s0 + $0x90] sm:$0xff]
  %v47 = vld [vmem:[%s0 + $0x98] sm:$0xff]
  %v48 = vld [vmem:[%s0 + $0xa0] sm:$0xff]
  %v49 = vld [vmem:[%s0 + $0xa8] sm:$0xff]
  %v50 = vld [vmem:[%s0 + $0xb0] sm:$0xff]
  %v51 = vld [vmem:[%s0 + $0xb8] sm:$0xff]
  %v52 = vld [vmem:[%s0 + $0xc0] sm:$0xff]
  %v53 = vld [vmem:[%s0 + $0xc8] sm:$0xff]
  %v54 = vld [vmem:[%s0 + $0xd0] sm:$0xff]
  %v55 = vld [vmem:[%s0 + $0xd8] sm:$0xff]
  %v56 = vld [vmem:[%s0 + $0xe0] sm:$0xff]
  %v57 = vld [vmem:[%s0 + $0xe8] sm:$0xff]
  %v58 = vld [vmem:[%s0 + $0xf0] sm:$0xff]
  %v59 = vld [vmem:[%s0 + $0xf8] sm:$0xff]
  %v60 = vlaneseq
  %v61 = vshrl.u32 %v60, 7
  %v62 = vsub.s32 0, %v61
  %v63 = vrot.slane %v21, %v62
  %vm64 = vcmask 64512
  %v66 = vsel %vm64, %v28, 0
  %v69 = vsel %vm64, %v29, 0
  %v72 = vsel %vm64, %v30, 0
  %v75 = vsel %vm64, %v31, 0
  %v78 = vsel %vm64, %v32, 0
  %v81 = vsel %vm64, %v33, 0
  %v84 = vsel %vm64, %v34, 0
  %v87 = vsel %vm64, %v35, 0
  %v90 = vsel %vm64, %v36, 0
  %v93 = vsel %vm64, %v37, 0
  %v96 = vsel %vm64, %v38, 0
  %v99 = vsel %vm64, %v39, 0
  %v102 = vsel %vm64, %v40, 0
  %v105 = vsel %vm64, %v41, 0
  %v108 = vsel %vm64, %v42, 0
  %v111 = vsel %vm64, %v43, 0
  %v114 = vsel %vm64, %v44, 0
  %v117 = vsel %vm64, %v45, 0
  %v120 = vsel %vm64, %v46, 0
  %v123 = vsel %vm64, %v47, 0
  %v126 = vsel %vm64, %v48, 0
  %v129 = vsel %vm64, %v49, 0
  %v132 = vsel %vm64, %v50, 0
  %v135 = vsel %vm64, %v51, 0
  %v138 = vsel %vm64, %v52, 0
  %v141 = vsel %vm64, %v53, 0
  %v144 = vsel %vm64, %v54, 0
  %v147 = vsel %vm64, %v55, 0
  %v150 = vsel %vm64, %v56, 0
  %v153 = vsel %vm64, %v57, 0
  %v156 = vsel %vm64, %v58, 0
  %v159 = vsel %vm64, %v59, 0
  %161 = vmatprep.subr.mxu0 0.0
  %162 = vmatpush1.msra.mxu0 0.0
  %163 = vmatprep.subr.mxu0 0.0
  %164 = vmatpush1.msra.mxu0 0.0
  %165 = vmatprep.subr.mxu0 0.0
  %166 = vmatpush1.msra.mxu0 0.0
  %167 = vmatprep.subr.mxu0 0.0
  %168 = vmatpush1.msra.mxu0 0.0
  %169 = vmatprep.subr.mxu0 0.0
  %170 = vmatpush1.msra.mxu0 0.0
  %171 = vmatprep.subr.mxu0 0.0
  %172 = vmatpush1.msra.mxu0 0.0
  %173 = vmatprep.subr.mxu0 0.0
  %174 = vmatpush1.msra.mxu0 0.0
  %175 = vmatprep.subr.mxu0 0.0
  %176 = vmatpush1.msra.mxu0 0.0
  %177 = vmatprep.subr.mxu0 0.0
  %178 = vmatpush1.msra.mxu0 0.0
  %179 = vmatprep.subr.mxu0 0.0
  %180 = vmatpush1.msra.mxu0 0.0
  %181 = vmatprep.subr.mxu0 0.0
  %182 = vmatpush1.msra.mxu0 0.0
  %183 = vmatprep.subr.mxu0 0.0
  %184 = vmatpush1.msra.mxu0 0.0
  %185 = vmatprep.subr.mxu0 0.0
  %186 = vmatpush1.msra.mxu0 0.0
  %187 = vmatprep.subr.mxu0 0.0
  %188 = vmatpush1.msra.mxu0 0.0
  %189 = vmatprep.subr.mxu0 0.0
  %190 = vmatpush1.msra.mxu0 0.0
  %191 = vmatprep.subr.mxu0 0.0
  %192 = vmatpush1.msra.mxu0 %v27
  %193 = vmatprep.subr.mxu0 0.0
  %194 = vmatpush2.msra.mxu0 0.0
  %195 = vmatprep.subr.mxu0 0.0
  %196 = vmatpush2.msra.mxu0 0.0
  %197 = vmatprep.subr.mxu0 0.0
  %198 = vmatpush2.msra.mxu0 0.0
  %199 = vmatprep.subr.mxu0 0.0
  %200 = vmatpush2.msra.mxu0 0.0
  %201 = vmatprep.subr.mxu0 0.0
  %202 = vmatpush2.msra.mxu0 0.0
  %203 = vmatprep.subr.mxu0 0.0
  %204 = vmatpush2.msra.mxu0 0.0
  %205 = vmatprep.subr.mxu0 0.0
  %206 = vmatpush2.msra.mxu0 0.0
  %207 = vmatprep.subr.mxu0 0.0
  %208 = vmatpush2.msra.mxu0 0.0
  %209 = vmatprep.subr.mxu0 0.0
  %210 = vmatpush2.msra.mxu0 0.0
  %211 = vmatprep.subr.mxu0 0.0
  %212 = vmatpush2.msra.mxu0 0.0
  %213 = vmatprep.subr.mxu0 0.0
  %214 = vmatpush2.msra.mxu0 0.0
  %215 = vmatprep.subr.mxu0 0.0
  %216 = vmatpush2.msra.mxu0 0.0
  %217 = vmatprep.subr.mxu0 0.0
  %218 = vmatpush2.msra.mxu0 0.0
  %219 = vmatprep.subr.mxu0 0.0
  %220 = vmatpush2.msra.mxu0 0.0
  %221 = vmatprep.subr.mxu0 0.0
  %222 = vmatpush2.msra.mxu0 0.0
  %223 = vmatprep.subr.mxu0 0.0
  %224 = vmatpush2.msra.mxu0 0.0
  %225 = vmatprep.mubr.f32.mxu0 0.0
  %226 = vmatmul.mubr.f32.gmra.mxu0 %v66
  %v227 = vpop.f32.mrf.mxu0
  %v228 = vadd.f32 %v63, %v227
  %v229 = vpop.f32.mrf.mxu0
  %230 = vmatprep.mubr.f32.mxu0 0.0
  %231 = vmatmul.mubr.f32.gmra.mxu0 %v69
  %v232 = vpop.f32.mrf.mxu0
  %v233 = vadd.f32 %v63, %v232
  %v234 = vpop.f32.mrf.mxu0
  %235 = vmatprep.mubr.f32.mxu0 0.0
  %236 = vmatmul.mubr.f32.gmra.mxu0 %v72
  %v237 = vpop.f32.mrf.mxu0
  %v238 = vadd.f32 %v63, %v237
  %v239 = vpop.f32.mrf.mxu0
  %240 = vmatprep.mubr.f32.mxu0 0.0
  %241 = vmatmul.mubr.f32.gmra.mxu0 %v75
  %v242 = vpop.f32.mrf.mxu0
  %v243 = vadd.f32 %v63, %v242
  %v244 = vpop.f32.mrf.mxu0
  %245 = vmatprep.mubr.f32.mxu0 0.0
  %246 = vmatmul.mubr.f32.gmra.mxu0 %v78
  %v247 = vpop.f32.mrf.mxu0
  %v248 = vadd.f32 %v63, %v247
  %v249 = vpop.f32.mrf.mxu0
  %250 = vmatprep.mubr.f32.mxu0 0.0
  %251 = vmatmul.mubr.f32.gmra.mxu0 %v81
  %v252 = vpop.f32.mrf.mxu0
  %v253 = vadd.f32 %v63, %v252
  %v254 = vpop.f32.mrf.mxu0
  %255 = vmatprep.mubr.f32.mxu0 0.0
  %256 = vmatmul.mubr.f32.gmra.mxu0 %v84
  %v257 = vpop.f32.mrf.mxu0
  %v258 = vadd.f32 %v63, %v257
  %v259 = vpop.f32.mrf.mxu0
  %260 = vmatprep.mubr.f32.mxu0 0.0
  %261 = vmatmul.mubr.f32.gmra.mxu0 %v87
  %v262 = vpop.f32.mrf.mxu0
  %v263 = vadd.f32 %v63, %v262
  %v264 = vpop.f32.mrf.mxu0
  %265 = vmatprep.mubr.f32.mxu0 0.0
  %266 = vmatmul.mubr.f32.gmra.mxu0 %v90
  %v267 = vpop.f32.mrf.mxu0
  %v268 = vadd.f32 %v63, %v267
  %v269 = vpop.f32.mrf.mxu0
  %270 = vmatprep.mubr.f32.mxu0 0.0
  %271 = vmatmul.mubr.f32.gmra.mxu0 %v93
  %v272 = vpop.f32.mrf.mxu0
  %v273 = vadd.f32 %v63, %v272
  %v274 = vpop.f32.mrf.mxu0
  %275 = vmatprep.mubr.f32.mxu0 0.0
  %276 = vmatmul.mubr.f32.gmra.mxu0 %v96
  %v277 = vpop.f32.mrf.mxu0
  %v278 = vadd.f32 %v63, %v277
  %v279 = vpop.f32.mrf.mxu0
  %280 = vmatprep.mubr.f32.mxu0 0.0
  %281 = vmatmul.mubr.f32.gmra.mxu0 %v99
  %v282 = vpop.f32.mrf.mxu0
  %v283 = vadd.f32 %v63, %v282
  %v284 = vpop.f32.mrf.mxu0
  %285 = vmatprep.mubr.f32.mxu0 0.0
  %286 = vmatmul.mubr.f32.gmra.mxu0 %v102
  %v287 = vpop.f32.mrf.mxu0
  %v288 = vadd.f32 %v63, %v287
  %v289 = vpop.f32.mrf.mxu0
  %290 = vmatprep.mubr.f32.mxu0 0.0
  %291 = vmatmul.mubr.f32.gmra.mxu0 %v105
  %v292 = vpop.f32.mrf.mxu0
  %v293 = vadd.f32 %v63, %v292
  %v294 = vpop.f32.mrf.mxu0
  %295 = vmatprep.mubr.f32.mxu0 0.0
  %296 = vmatmul.mubr.f32.gmra.mxu0 %v108
  %v297 = vpop.f32.mrf.mxu0
  %v298 = vadd.f32 %v63, %v297
  %v299 = vpop.f32.mrf.mxu0
  %300 = vmatprep.mubr.f32.mxu0 0.0
  %301 = vmatmul.mubr.f32.gmra.mxu0 %v111
  %v302 = vpop.f32.mrf.mxu0
  %v303 = vadd.f32 %v63, %v302
  %v304 = vpop.f32.mrf.mxu0
  %305 = vmatprep.mubr.f32.mxu0 0.0
  %306 = vmatmul.mubr.f32.gmra.mxu0 %v114
  %v307 = vpop.f32.mrf.mxu0
  %v308 = vadd.f32 %v63, %v307
  %v309 = vpop.f32.mrf.mxu0
  %310 = vmatprep.mubr.f32.mxu0 0.0
  %311 = vmatmul.mubr.f32.gmra.mxu0 %v117
  %v312 = vpop.f32.mrf.mxu0
  %v313 = vadd.f32 %v63, %v312
  %v314 = vpop.f32.mrf.mxu0
  %315 = vmatprep.mubr.f32.mxu0 0.0
  %316 = vmatmul.mubr.f32.gmra.mxu0 %v120
  %v317 = vpop.f32.mrf.mxu0
  %v318 = vadd.f32 %v63, %v317
  %v319 = vpop.f32.mrf.mxu0
  %320 = vmatprep.mubr.f32.mxu0 0.0
  %321 = vmatmul.mubr.f32.gmra.mxu0 %v123
  %v322 = vpop.f32.mrf.mxu0
  %v323 = vadd.f32 %v63, %v322
  %v324 = vpop.f32.mrf.mxu0
  %325 = vmatprep.mubr.f32.mxu0 0.0
  %326 = vmatmul.mubr.f32.gmra.mxu0 %v126
  %v327 = vpop.f32.mrf.mxu0
  %v328 = vadd.f32 %v63, %v327
  %v329 = vpop.f32.mrf.mxu0
  %330 = vmatprep.mubr.f32.mxu0 0.0
  %331 = vmatmul.mubr.f32.gmra.mxu0 %v129
  %v332 = vpop.f32.mrf.mxu0
  %v333 = vadd.f32 %v63, %v332
  %v334 = vpop.f32.mrf.mxu0
  %335 = vmatprep.mubr.f32.mxu0 0.0
  %336 = vmatmul.mubr.f32.gmra.mxu0 %v132
  %v337 = vpop.f32.mrf.mxu0
  %v338 = vadd.f32 %v63, %v337
  %v339 = vpop.f32.mrf.mxu0
  %340 = vmatprep.mubr.f32.mxu0 0.0
  %341 = vmatmul.mubr.f32.gmra.mxu0 %v135
  %v342 = vpop.f32.mrf.mxu0
  %v343 = vadd.f32 %v63, %v342
  %v344 = vpop.f32.mrf.mxu0
  %345 = vmatprep.mubr.f32.mxu0 0.0
  %346 = vmatmul.mubr.f32.gmra.mxu0 %v138
  %v347 = vpop.f32.mrf.mxu0
  %v348 = vadd.f32 %v63, %v347
  %v349 = vpop.f32.mrf.mxu0
  %350 = vmatprep.mubr.f32.mxu0 0.0
  %351 = vmatmul.mubr.f32.gmra.mxu0 %v141
  %v352 = vpop.f32.mrf.mxu0
  %v353 = vadd.f32 %v63, %v352
  %v354 = vpop.f32.mrf.mxu0
  %355 = vmatprep.mubr.f32.mxu0 0.0
  %356 = vmatmul.mubr.f32.gmra.mxu0 %v144
  %v357 = vpop.f32.mrf.mxu0
  %v358 = vadd.f32 %v63, %v357
  %v359 = vpop.f32.mrf.mxu0
  %360 = vmatprep.mubr.f32.mxu0 0.0
  %361 = vmatmul.mubr.f32.gmra.mxu0 %v147
  %v362 = vpop.f32.mrf.mxu0
  %v363 = vadd.f32 %v63, %v362
  %v364 = vpop.f32.mrf.mxu0
  %365 = vmatprep.mubr.f32.mxu0 0.0
  %366 = vmatmul.mubr.f32.gmra.mxu0 %v150
  %v367 = vpop.f32.mrf.mxu0
  %v368 = vadd.f32 %v63, %v367
  %v369 = vpop.f32.mrf.mxu0
  %370 = vmatprep.mubr.f32.mxu0 0.0
  %371 = vmatmul.mubr.f32.gmra.mxu0 %v153
  %v372 = vpop.f32.mrf.mxu0
  %v373 = vadd.f32 %v63, %v372
  %v374 = vpop.f32.mrf.mxu0
  %375 = vmatprep.mubr.f32.mxu0 0.0
  %376 = vmatmul.mubr.f32.gmra.mxu0 %v156
  %v377 = vpop.f32.mrf.mxu0
  %v378 = vadd.f32 %v63, %v377
  %v379 = vpop.f32.mrf.mxu0
  %380 = vmatprep.mubr.f32.mxu0 0.0
  %381 = vmatmul.mubr.f32.gmra.mxu0 %v159
  %v382 = vpop.f32.mrf.mxu0
  %v383 = vadd.f32 %v63, %v382
  %v384 = vpop.f32.mrf.mxu0
  %385 = vdwg.mxu0
  %v386 = vmax.f32 %v228, 0.0
  %v387 = vmax.f32 %v233, 0.0
  %v388 = vmax.f32 %v238, 0.0
  %v389 = vmax.f32 %v243, 0.0
  %v390 = vmax.f32 %v248, 0.0
  %v391 = vmax.f32 %v253, 0.0
  %v392 = vmax.f32 %v258, 0.0
  %v393 = vmax.f32 %v263, 0.0
  %v394 = vmax.f32 %v268, 0.0
  %v395 = vmax.f32 %v273, 0.0
  %v396 = vmax.f32 %v278, 0.0
  %v397 = vmax.f32 %v283, 0.0
  %v398 = vmax.f32 %v288, 0.0
  %v399 = vmax.f32 %v293, 0.0
  %v400 = vmax.f32 %v298, 0.0
  %v401 = vmax.f32 %v303, 0.0
  %v402 = vmax.f32 %v308, 0.0
  %v403 = vmax.f32 %v313, 0.0
  %v404 = vmax.f32 %v318, 0.0
  %v405 = vmax.f32 %v323, 0.0
  %v406 = vmax.f32 %v328, 0.0
  %v407 = vmax.f32 %v333, 0.0
  %v408 = vmax.f32 %v338, 0.0
  %v409 = vmax.f32 %v343, 0.0
  %v410 = vmax.f32 %v348, 0.0
  %v411 = vmax.f32 %v353, 0.0
  %v412 = vmax.f32 %v358, 0.0
  %v413 = vmax.f32 %v363, 0.0
  %v414 = vmax.f32 %v368, 0.0
  %v415 = vmax.f32 %v373, 0.0
  %v416 = vmax.f32 %v378, 0.0
  %v417 = vmax.f32 %v383, 0.0
  %v418 = vmax.f32 %v386, %v388
  %v419 = vmax.f32 %v387, %v389
  %v420 = vmax.f32 %v390, %v392
  %v421 = vmax.f32 %v391, %v393
  %v422 = vmax.f32 %v394, %v396
  %v423 = vmax.f32 %v395, %v397
  %v424 = vmax.f32 %v398, %v400
  %v425 = vmax.f32 %v399, %v401
  %v426 = vmax.f32 %v402, %v404
  %v427 = vmax.f32 %v403, %v405
  %v428 = vmax.f32 %v406, %v408
  %v429 = vmax.f32 %v407, %v409
  %v430 = vmax.f32 %v410, %v412
  %v431 = vmax.f32 %v411, %v413
  %v432 = vmax.f32 %v414, %v416
  %v433 = vmax.f32 %v415, %v417
  %v434 = vld [vmem:[%s2 + $0x8] sm:$0xff]
  %v435 = vld [vmem:[%s2 + $0x10] sm:$0xff]
  %v436 = vld [vmem:[%s2 + $0x18] sm:$0xff]
  %v437 = vld [vmem:[%s2 + $0x20] sm:$0xff]
  %v438 = vld [vmem:[%s2 + $0x28] sm:$0xff]
  %v439 = vld [vmem:[%s2 + $0x30] sm:$0xff]
  %v440 = vld [vmem:[%s2 + $0x38] sm:$0xff]
  %v441 = vld [vmem:[%s2 + $0x40] sm:$0xff]
  %v442 = vld [vmem:[%s2 + $0x48] sm:$0xff]
  %v443 = vld [vmem:[%s2 + $0x50] sm:$0xff]
  %v444 = vld [vmem:[%s2 + $0x58] sm:$0xff]
  %v445 = vld [vmem:[%s2 + $0x60] sm:$0xff]
  %v446 = vld [vmem:[%s2 + $0x68] sm:$0xff]
  %v447 = vld [vmem:[%s2 + $0x70] sm:$0xff]
  %v448 = vld [vmem:[%s2 + $0x78] sm:$0xff]
  %v449 = vld [vmem:[%s2 + $0x80] sm:$0xff]
  %450 = vmatprep.subr.mxu0 0.0
  %451 = vmatpush1.msra.mxu0 %v449
  %452 = vmatprep.subr.mxu0 0.0
  %453 = vmatpush1.msra.mxu0 %v448
  %454 = vmatprep.subr.mxu0 0.0
  %455 = vmatpush1.msra.mxu0 %v447
  %456 = vmatprep.subr.mxu0 0.0
  %457 = vmatpush1.msra.mxu0 %v446
  %458 = vmatprep.subr.mxu0 0.0
  %459 = vmatpush1.msra.mxu0 %v445
  %460 = vmatprep.subr.mxu0 0.0
  %461 = vmatpush1.msra.mxu0 %v444
  %462 = vmatprep.subr.mxu0 0.0
  %463 = vmatpush1.msra.mxu0 %v443
  %464 = vmatprep.subr.mxu0 0.0
  %465 = vmatpush1.msra.mxu0 %v442
  %466 = vmatprep.subr.mxu0 0.0
  %467 = vmatpush1.msra.mxu0 %v441
  %468 = vmatprep.subr.mxu0 0.0
  %469 = vmatpush1.msra.mxu0 %v440
  %470 = vmatprep.subr.mxu0 0.0
  %471 = vmatpush1.msra.mxu0 %v439
  %472 = vmatprep.subr.mxu0 0.0
  %473 = vmatpush1.msra.mxu0 %v438
  %474 = vmatprep.subr.mxu0 0.0
  %475 = vmatpush1.msra.mxu0 %v437
  %476 = vmatprep.subr.mxu0 0.0
  %477 = vmatpush1.msra.mxu0 %v436
  %478 = vmatprep.subr.mxu0 0.0
  %479 = vmatpush1.msra.mxu0 %v435
  %480 = vmatprep.subr.mxu0 0.0
  %481 = vmatpush1.msra.mxu0 %v434
  %482 = vmatprep.subr.mxu0 0.0
  %483 = vmatpush2.msra.mxu0 0.0
  %484 = vmatprep.subr.mxu0 0.0
  %485 = vmatpush2.msra.mxu0 0.0
  %486 = vmatprep.subr.mxu0 0.0
  %487 = vmatpush2.msra.mxu0 0.0
  %488 = vmatprep.subr.mxu0 0.0
  %489 = vmatpush2.msra.mxu0 0.0
  %490 = vmatprep.subr.mxu0 0.0
  %491 = vmatpush2.msra.mxu0 0.0
  %492 = vmatprep.subr.mxu0 0.0
  %493 = vmatpush2.msra.mxu0 0.0
  %494 = vmatprep.subr.mxu0 0.0
  %495 = vmatpush2.msra.mxu0 0.0
  %496 = vmatprep.subr.mxu0 0.0
  %497 = vmatpush2.msra.mxu0 0.0
  %498 = vmatprep.subr.mxu0 0.0
  %499 = vmatpush2.msra.mxu0 0.0
  %500 = vmatprep.subr.mxu0 0.0
  %501 = vmatpush2.msra.mxu0 0.0
  %502 = vmatprep.subr.mxu0 0.0
  %503 = vmatpush2.msra.mxu0 0.0
  %504 = vmatprep.subr.mxu0 0.0
  %505 = vmatpush2.msra.mxu0 0.0
  %506 = vmatprep.subr.mxu0 0.0
  %507 = vmatpush2.msra.mxu0 0.0
  %508 = vmatprep.subr.mxu0 0.0
  %509 = vmatpush2.msra.mxu0 0.0
  %510 = vmatprep.subr.mxu0 0.0
  %511 = vmatpush2.msra.mxu0 0.0
  %512 = vmatprep.subr.mxu0 0.0
  %513 = vmatpush2.msra.mxu0 0.0
  %514 = vmatprep.mubr.f32.mxu0 0.0
  %515 = vmatmul.mubr.f32.gmra.mxu0 %v418
  %v516 = vpop.f32.mrf.mxu0
  %v517 = vadd.f32 0.0, %v516
  %v518 = vpop.f32.mrf.mxu0
  %519 = vmatprep.mubr.f32.mxu0 0.0
  %520 = vmatmul.mubr.f32.gmra.mxu0 %v419
  %v521 = vpop.f32.mrf.mxu0
  %v522 = vadd.f32 0.0, %v521
  %v523 = vpop.f32.mrf.mxu0
  %524 = vmatprep.mubr.f32.mxu0 0.0
  %525 = vmatmul.mubr.f32.gmra.mxu0 %v420
  %v526 = vpop.f32.mrf.mxu0
  %v527 = vadd.f32 0.0, %v526
  %v528 = vpop.f32.mrf.mxu0
  %529 = vmatprep.mubr.f32.mxu0 0.0
  %530 = vmatmul.mubr.f32.gmra.mxu0 %v421
  %v531 = vpop.f32.mrf.mxu0
  %v532 = vadd.f32 0.0, %v531
  %v533 = vpop.f32.mrf.mxu0
  %534 = vmatprep.mubr.f32.mxu0 0.0
  %535 = vmatmul.mubr.f32.gmra.mxu0 %v422
  %v536 = vpop.f32.mrf.mxu0
  %v537 = vadd.f32 0.0, %v536
  %v538 = vpop.f32.mrf.mxu0
  %539 = vmatprep.mubr.f32.mxu0 0.0
  %540 = vmatmul.mubr.f32.gmra.mxu0 %v423
  %v541 = vpop.f32.mrf.mxu0
  %v542 = vadd.f32 0.0, %v541
  %v543 = vpop.f32.mrf.mxu0
  %544 = vmatprep.mubr.f32.mxu0 0.0
  %545 = vmatmul.mubr.f32.gmra.mxu0 %v424
  %v546 = vpop.f32.mrf.mxu0
  %v547 = vadd.f32 0.0, %v546
  %v548 = vpop.f32.mrf.mxu0
  %549 = vmatprep.mubr.f32.mxu0 0.0
  %550 = vmatmul.mubr.f32.gmra.mxu0 %v425
  %v551 = vpop.f32.mrf.mxu0
  %v552 = vadd.f32 0.0, %v551
  %v553 = vpop.f32.mrf.mxu0
  %554 = vmatprep.mubr.f32.mxu0 0.0
  %555 = vmatmul.mubr.f32.gmra.mxu0 %v426
  %v556 = vpop.f32.mrf.mxu0
  %v557 = vadd.f32 0.0, %v556
  %v558 = vpop.f32.mrf.mxu0
  %559 = vmatprep.mubr.f32.mxu0 0.0
  %560 = vmatmul.mubr.f32.gmra.mxu0 %v427
  %v561 = vpop.f32.mrf.mxu0
  %v562 = vadd.f32 0.0, %v561
  %v563 = vpop.f32.mrf.mxu0
  %564 = vmatprep.mubr.f32.mxu0 0.0
  %565 = vmatmul.mubr.f32.gmra.mxu0 %v428
  %v566 = vpop.f32.mrf.mxu0
  %v567 = vadd.f32 0.0, %v566
  %v568 = vpop.f32.mrf.mxu0
  %569 = vmatprep.mubr.f32.mxu0 0.0
  %570 = vmatmul.mubr.f32.gmra.mxu0 %v429
  %v571 = vpop.f32.mrf.mxu0
  %v572 = vadd.f32 0.0, %v571
  %v573 = vpop.f32.mrf.mxu0
  %574 = vmatprep.mubr.f32.mxu0 0.0
  %575 = vmatmul.mubr.f32.gmra.mxu0 %v430
  %v576 = vpop.f32.mrf.mxu0
  %v577 = vadd.f32 0.0, %v576
  %v578 = vpop.f32.mrf.mxu0
  %579 = vmatprep.mubr.f32.mxu0 0.0
  %580 = vmatmul.mubr.f32.gmra.mxu0 %v431
  %v581 = vpop.f32.mrf.mxu0
  %v582 = vadd.f32 0.0, %v581
  %v583 = vpop.f32.mrf.mxu0
  %584 = vmatprep.mubr.f32.mxu0 0.0
  %585 = vmatmul.mubr.f32.gmra.mxu0 %v432
  %v586 = vpop.f32.mrf.mxu0
  %v587 = vadd.f32 0.0, %v586
  %v588 = vpop.f32.mrf.mxu0
  %589 = vmatprep.mubr.f32.mxu0 0.0
  %590 = vmatmul.mubr.f32.gmra.mxu0 %v433
  %v591 = vpop.f32.mrf.mxu0
  %v592 = vadd.f32 0.0, %v591
  %v593 = vpop.f32.mrf.mxu0
  %594 = vdwg.mxu0
  %v595 = vld [vmem:[%s2 + $0x88] sm:$0xff]
  %v596 = vld [vmem:[%s2 + $0x90] sm:$0xff]
  %v597 = vld [vmem:[%s2 + $0x98] sm:$0xff]
  %v598 = vld [vmem:[%s2 + $0xa0] sm:$0xff]
  %v599 = vld [vmem:[%s2 + $0xa8] sm:$0xff]
  %v600 = vld [vmem:[%s2 + $0xb0] sm:$0xff]
  %v601 = vld [vmem:[%s2 + $0xb8] sm:$0xff]
  %v602 = vld [vmem:[%s2 + $0xc0] sm:$0xff]
  %v603 = vld [vmem:[%s2 + $0xc8] sm:$0xff]
  %v604 = vld [vmem:[%s2 + $0xd0] sm:$0xff]
  %v605 = vld [vmem:[%s2 + $0xd8] sm:$0xff]
  %v606 = vld [vmem:[%s2 + $0xe0] sm:$0xff]
  %v607 = vld [vmem:[%s2 + $0xe8] sm:$0xff]
  %v608 = vld [vmem:[%s2 + $0xf0] sm:$0xff]
  %v609 = vld [vmem:[%s2 + $0xf8] sm:$0xff]
  %v610 = vld [vmem:[%s2 + $0x100] sm:$0xff]
  %611 = vmatprep.subr.mxu0 0.0
  %612 = vmatpush1.msra.mxu0 %v610
  %613 = vmatprep.subr.mxu0 0.0
  %614 = vmatpush1.msra.mxu0 %v609
  %615 = vmatprep.subr.mxu0 0.0
  %616 = vmatpush1.msra.mxu0 %v608
  %617 = vmatprep.subr.mxu0 0.0
  %618 = vmatpush1.msra.mxu0 %v607
  %619 = vmatprep.subr.mxu0 0.0
  %620 = vmatpush1.msra.mxu0 %v606
  %621 = vmatprep.subr.mxu0 0.0
  %622 = vmatpush1.msra.mxu0 %v605
  %623 = vmatprep.subr.mxu0 0.0
  %624 = vmatpush1.msra.mxu0 %v604
  %625 = vmatprep.subr.mxu0 0.0
  %626 = vmatpush1.msra.mxu0 %v603
  %627 = vmatprep.subr.mxu0 0.0
  %628 = vmatpush1.msra.mxu0 %v602
  %629 = vmatprep.subr.mxu0 0.0
  %630 = vmatpush1.msra.mxu0 %v601
  %631 = vmatprep.subr.mxu0 0.0
  %632 = vmatpush1.msra.mxu0 %v600
  %633 = vmatprep.subr.mxu0 0.0
  %634 = vmatpush1.msra.mxu0 %v599
  %635 = vmatprep.subr.mxu0 0.0
  %636 = vmatpush1.msra.mxu0 %v598
  %637 = vmatprep.subr.mxu0 0.0
  %638 = vmatpush1.msra.mxu0 %v597
  %639 = vmatprep.subr.mxu0 0.0
  %640 = vmatpush1.msra.mxu0 %v596
  %641 = vmatprep.subr.mxu0 0.0
  %642 = vmatpush1.msra.mxu0 %v595
  %643 = vmatprep.subr.mxu0 0.0
  %644 = vmatpush2.msra.mxu0 0.0
  %645 = vmatprep.subr.mxu0 0.0
  %646 = vmatpush2.msra.mxu0 0.0
  %647 = vmatprep.subr.mxu0 0.0
  %648 = vmatpush2.msra.mxu0 0.0
  %649 = vmatprep.subr.mxu0 0.0
  %650 = vmatpush2.msra.mxu0 0.0
  %651 = vmatprep.subr.mxu0 0.0
  %652 = vmatpush2.msra.mxu0 0.0
  %653 = vmatprep.subr.mxu0 0.0
  %654 = vmatpush2.msra.mxu0 0.0
  %655 = vmatprep.subr.mxu0 0.0
  %656 = vmatpush2.msra.mxu0 0.0
  %657 = vmatprep.subr.mxu0 0.0
  %658 = vmatpush2.msra.mxu0 0.0
  %659 = vmatprep.subr.mxu0 0.0
  %660 = vmatpush2.msra.mxu0 0.0
  %661 = vmatprep.subr.mxu0 0.0
  %662 = vmatpush2.msra.mxu0 0.0
  %663 = vmatprep.subr.mxu0 0.0
  %664 = vmatpush2.msra.mxu0 0.0
  %665 = vmatprep.subr.mxu0 0.0
  %666 = vmatpush2.msra.mxu0 0.0
  %667 = vmatprep.subr.mxu0 0.0
  %668 = vmatpush2.msra.mxu0 0.0
  %669 = vmatprep.subr.mxu0 0.0
  %670 = vmatpush2.msra.mxu0 0.0
  %671 = vmatprep.subr.mxu0 0.0
  %672 = vmatpush2.msra.mxu0 0.0
  %673 = vmatprep.subr.mxu0 0.0
  %674 = vmatpush2.msra.mxu0 0.0
  %675 = vmatprep.mubr.f32.mxu0 0.0
  %676 = vmatmul.mubr.f32.gmra.mxu0 %v418
  %v677 = vpop.f32.mrf.mxu0
  %v678 = vpop.f32.mrf.mxu0
  %679 = vmatprep.mubr.f32.mxu0 0.0
  %680 = vmatmul.mubr.f32.gmra.mxu0 %v419
  %v681 = vpop.f32.mrf.mxu0
  %v682 = vpop.f32.mrf.mxu0
  %683 = vmatprep.mubr.f32.mxu0 0.0
  %684 = vmatmul.mubr.f32.gmra.mxu0 %v420
  %v685 = vpop.f32.mrf.mxu0
  %v686 = vadd.f32 0.0, %v685
  %v687 = vpop.f32.mrf.mxu0
  %688 = vmatprep.mubr.f32.mxu0 0.0
  %689 = vmatmul.mubr.f32.gmra.mxu0 %v421
  %v690 = vpop.f32.mrf.mxu0
  %v691 = vadd.f32 0.0, %v690
  %v692 = vpop.f32.mrf.mxu0
  %693 = vmatprep.mubr.f32.mxu0 0.0
  %694 = vmatmul.mubr.f32.gmra.mxu0 %v422
  %v695 = vpop.f32.mrf.mxu0
  %v696 = vadd.f32 0.0, %v695
  %v697 = vpop.f32.mrf.mxu0
  %698 = vmatprep.mubr.f32.mxu0 0.0
  %699 = vmatmul.mubr.f32.gmra.mxu0 %v423
  %v700 = vpop.f32.mrf.mxu0
  %v701 = vadd.f32 0.0, %v700
  %v702 = vpop.f32.mrf.mxu0
  %703 = vmatprep.mubr.f32.mxu0 0.0
  %704 = vmatmul.mubr.f32.gmra.mxu0 %v424
  %v705 = vpop.f32.mrf.mxu0
  %v706 = vadd.f32 0.0, %v705
  %v707 = vpop.f32.mrf.mxu0
  %708 = vmatprep.mubr.f32.mxu0 0.0
  %709 = vmatmul.mubr.f32.gmra.mxu0 %v425
  %v710 = vpop.f32.mrf.mxu0
  %v711 = vadd.f32 0.0, %v710
  %v712 = vpop.f32.mrf.mxu0
  %713 = vmatprep.mubr.f32.mxu0 0.0
  %714 = vmatmul.mubr.f32.gmra.mxu0 %v426
  %v715 = vpop.f32.mrf.mxu0
  %v716 = vadd.f32 0.0, %v715
  %v717 = vpop.f32.mrf.mxu0
  %718 = vmatprep.mubr.f32.mxu0 0.0
  %719 = vmatmul.mubr.f32.gmra.mxu0 %v427
  %v720 = vpop.f32.mrf.mxu0
  %v721 = vadd.f32 0.0, %v720
  %v722 = vpop.f32.mrf.mxu0
  %723 = vmatprep.mubr.f32.mxu0 0.0
  %724 = vmatmul.mubr.f32.gmra.mxu0 %v428
  %v725 = vpop.f32.mrf.mxu0
  %v726 = vadd.f32 0.0, %v725
  %v727 = vpop.f32.mrf.mxu0
  %728 = vmatprep.mubr.f32.mxu0 0.0
  %729 = vmatmul.mubr.f32.gmra.mxu0 %v429
  %v730 = vpop.f32.mrf.mxu0
  %v731 = vadd.f32 0.0, %v730
  %v732 = vpop.f32.mrf.mxu0
  %733 = vmatprep.mubr.f32.mxu0 0.0
  %734 = vmatmul.mubr.f32.gmra.mxu0 %v430
  %v735 = vpop.f32.mrf.mxu0
  %v736 = vadd.f32 0.0, %v735
  %v737 = vpop.f32.mrf.mxu0
  %738 = vmatprep.mubr.f32.mxu0 0.0
  %739 = vmatmul.mubr.f32.gmra.mxu0 %v431
  %v740 = vpop.f32.mrf.mxu0
  %v741 = vadd.f32 0.0, %v740
  %v742 = vpop.f32.mrf.mxu0
  %743 = vmatprep.mubr.f32.mxu0 0.0
  %744 = vmatmul.mubr.f32.gmra.mxu0 %v432
  %v745 = vpop.f32.mrf.mxu0
  %v746 = vadd.f32 0.0, %v745
  %v747 = vpop.f32.mrf.mxu0
  %748 = vmatprep.mubr.f32.mxu0 0.0
  %749 = vmatmul.mubr.f32.gmra.mxu0 %v433
  %v750 = vpop.f32.mrf.mxu0
  %v751 = vadd.f32 0.0, %v750
  %v752 = vpop.f32.mrf.mxu0
  %753 = vdwg.mxu0
  %v754 = vadd.f32 %v517, %v686
  %v755 = vadd.f32 %v522, %v691
  %v756 = vadd.f32 %v527, %v696
  %v757 = vadd.f32 %v532, %v701
  %v758 = vadd.f32 %v537, %v706
  %v759 = vadd.f32 %v542, %v711
  %v760 = vadd.f32 %v547, %v716
  %v761 = vadd.f32 %v552, %v721
  %v762 = vadd.f32 %v557, %v726
  %v763 = vadd.f32 %v562, %v731
  %v764 = vadd.f32 %v567, %v736
  %v765 = vadd.f32 %v572, %v741
  %v766 = vadd.f32 %v577, %v746
  %v767 = vadd.f32 %v582, %v751
  %v768 = vlaneseq
  %v769 = vshrl.u32 %v768, 7
  %v770 = vsub.s32 0, %v769
  %v771 = vrot.slane %v22, %v770
  %v772 = vadd.f32 %v754, %v771
  %v773 = vadd.f32 %v755, %v771
  %v774 = vadd.f32 %v756, %v771
  %v775 = vadd.f32 %v757, %v771
  %v776 = vadd.f32 %v758, %v771
  %v777 = vadd.f32 %v759, %v771
  %v778 = vadd.f32 %v760, %v771
  %v779 = vadd.f32 %v761, %v771
  %v780 = vadd.f32 %v762, %v771
  %v781 = vadd.f32 %v763, %v771
  %v782 = vadd.f32 %v764, %v771
  %v783 = vadd.f32 %v765, %v771
  %v784 = vadd.f32 %v766, %v771
  %v785 = vadd.f32 %v767, %v771
  %v786 = vadd.f32 %v587, %v771
  %v787 = vadd.f32 %v592, %v771
  %v788 = vmax.f32 %v772, 0.0
  %v789 = vmax.f32 %v773, 0.0
  %v790 = vmax.f32 %v774, 0.0
  %v791 = vmax.f32 %v775, 0.0
  %v792 = vmax.f32 %v776, 0.0
  %v793 = vmax.f32 %v777, 0.0
  %v794 = vmax.f32 %v778, 0.0
  %v795 = vmax.f32 %v779, 0.0
  %v796 = vmax.f32 %v780, 0.0
  %v797 = vmax.f32 %v781, 0.0
  %v798 = vmax.f32 %v782, 0.0
  %v799 = vmax.f32 %v783, 0.0
  %v800 = vmax.f32 %v784, 0.0
  %v801 = vmax.f32 %v785, 0.0
  %v802 = vmax.f32 %v786, 0.0
  %v803 = vmax.f32 %v787, 0.0
  %v804 = vmax.f32 %v788, %v790
  %v805 = vmax.f32 %v789, %v791
  %v806 = vmax.f32 %v792, %v794
  %v807 = vmax.f32 %v793, %v795
  %v808 = vmax.f32 %v796, %v798
  %v809 = vmax.f32 %v797, %v799
  %v810 = vmax.f32 %v800, %v802
  %v811 = vmax.f32 %v801, %v803
  %v812 = vld [vmem:[%s2 + $0x108] sm:$0xff]
  %v813 = vld [vmem:[%s2 + $0x110] sm:$0xff]
  %v814 = vld [vmem:[%s2 + $0x118] sm:$0xff]
  %v815 = vld [vmem:[%s2 + $0x120] sm:$0xff]
  %v816 = vld [vmem:[%s2 + $0x128] sm:$0xff]
  %v817 = vld [vmem:[%s2 + $0x130] sm:$0xff]
  %v818 = vld [vmem:[%s2 + $0x138] sm:$0xff]
  %v819 = vld [vmem:[%s2 + $0x140] sm:$0xff]
  %v820 = vld [vmem:[%s2 + $0x148] sm:$0xff]
  %v821 = vld [vmem:[%s2 + $0x150] sm:$0xff]
  %v822 = vld [vmem:[%s2 + $0x158] sm:$0xff]
  %v823 = vld [vmem:[%s2 + $0x160] sm:$0xff]
  %v824 = vld [vmem:[%s2 + $0x168] sm:$0xff]
  %v825 = vld [vmem:[%s2 + $0x170] sm:$0xff]
  %v826 = vld [vmem:[%s2 + $0x178] sm:$0xff]
  %v827 = vld [vmem:[%s2 + $0x180] sm:$0xff]
  %828 = vmatprep.subr.mxu0 0.0
  %829 = vmatpush1.msra.mxu0 %v827
  %830 = vmatprep.subr.mxu0 0.0
  %831 = vmatpush1.msra.mxu0 %v826
  %832 = vmatprep.subr.mxu0 0.0
  %833 = vmatpush1.msra.mxu0 %v825
  %834 = vmatprep.subr.mxu0 0.0
  %835 = vmatpush1.msra.mxu0 %v824
  %836 = vmatprep.subr.mxu0 0.0
  %837 = vmatpush1.msra.mxu0 %v823
  %838 = vmatprep.subr.mxu0 0.0
  %839 = vmatpush1.msra.mxu0 %v822
  %840 = vmatprep.subr.mxu0 0.0
  %841 = vmatpush1.msra.mxu0 %v821
  %842 = vmatprep.subr.mxu0 0.0
  %843 = vmatpush1.msra.mxu0 %v820
  %844 = vmatprep.subr.mxu0 0.0
  %845 = vmatpush1.msra.mxu0 %v819
  %846 = vmatprep.subr.mxu0 0.0
  %847 = vmatpush1.msra.mxu0 %v818
  %848 = vmatprep.subr.mxu0 0.0
  %849 = vmatpush1.msra.mxu0 %v817
  %850 = vmatprep.subr.mxu0 0.0
  %851 = vmatpush1.msra.mxu0 %v816
  %852 = vmatprep.subr.mxu0 0.0
  %853 = vmatpush1.msra.mxu0 %v815
  %854 = vmatprep.subr.mxu0 0.0
  %855 = vmatpush1.msra.mxu0 %v814
  %856 = vmatprep.subr.mxu0 0.0
  %857 = vmatpush1.msra.mxu0 %v813
  %858 = vmatprep.subr.mxu0 0.0
  %859 = vmatpush1.msra.mxu0 %v812
  %860 = vmatprep.subr.mxu0 0.0
  %861 = vmatpush2.msra.mxu0 0.0
  %862 = vmatprep.subr.mxu0 0.0
  %863 = vmatpush2.msra.mxu0 0.0
  %864 = vmatprep.subr.mxu0 0.0
  %865 = vmatpush2.msra.mxu0 0.0
  %866 = vmatprep.subr.mxu0 0.0
  %867 = vmatpush2.msra.mxu0 0.0
  %868 = vmatprep.subr.mxu0 0.0
  %869 = vmatpush2.msra.mxu0 0.0
  %870 = vmatprep.subr.mxu0 0.0
  %871 = vmatpush2.msra.mxu0 0.0
  %872 = vmatprep.subr.mxu0 0.0
  %873 = vmatpush2.msra.mxu0 0.0
  %874 = vmatprep.subr.mxu0 0.0
  %875 = vmatpush2.msra.mxu0 0.0
  %876 = vmatprep.subr.mxu0 0.0
  %877 = vmatpush2.msra.mxu0 0.0
  %878 = vmatprep.subr.mxu0 0.0
  %879 = vmatpush2.msra.mxu0 0.0
  %880 = vmatprep.subr.mxu0 0.0
  %881 = vmatpush2.msra.mxu0 0.0
  %882 = vmatprep.subr.mxu0 0.0
  %883 = vmatpush2.msra.mxu0 0.0
  %884 = vmatprep.subr.mxu0 0.0
  %885 = vmatpush2.msra.mxu0 0.0
  %886 = vmatprep.subr.mxu0 0.0
  %887 = vmatpush2.msra.mxu0 0.0
  %888 = vmatprep.subr.mxu0 0.0
  %889 = vmatpush2.msra.mxu0 0.0
  %890 = vmatprep.subr.mxu0 0.0
  %891 = vmatpush2.msra.mxu0 0.0
  %892 = vmatprep.mubr.f32.mxu0 0.0
  %893 = vmatmul.mubr.f32.gmra.mxu0 %v804
  %v894 = vpop.f32.mrf.mxu0
  %v895 = vadd.f32 0.0, %v894
  %v896 = vpop.f32.mrf.mxu0
  %897 = vmatprep.mubr.f32.mxu0 0.0
  %898 = vmatmul.mubr.f32.gmra.mxu0 %v805
  %v899 = vpop.f32.mrf.mxu0
  %v900 = vadd.f32 0.0, %v899
  %v901 = vpop.f32.mrf.mxu0
  %902 = vmatprep.mubr.f32.mxu0 0.0
  %903 = vmatmul.mubr.f32.gmra.mxu0 %v806
  %v904 = vpop.f32.mrf.mxu0
  %v905 = vadd.f32 0.0, %v904
  %v906 = vpop.f32.mrf.mxu0
  %907 = vmatprep.mubr.f32.mxu0 0.0
  %908 = vmatmul.mubr.f32.gmra.mxu0 %v807
  %v909 = vpop.f32.mrf.mxu0
  %v910 = vadd.f32 0.0, %v909
  %v911 = vpop.f32.mrf.mxu0
  %912 = vmatprep.mubr.f32.mxu0 0.0
  %913 = vmatmul.mubr.f32.gmra.mxu0 %v808
  %v914 = vpop.f32.mrf.mxu0
  %v915 = vadd.f32 0.0, %v914
  %v916 = vpop.f32.mrf.mxu0
  %917 = vmatprep.mubr.f32.mxu0 0.0
  %918 = vmatmul.mubr.f32.gmra.mxu0 %v809
  %v919 = vpop.f32.mrf.mxu0
  %v920 = vadd.f32 0.0, %v919
  %v921 = vpop.f32.mrf.mxu0
  %922 = vmatprep.mubr.f32.mxu0 0.0
  %923 = vmatmul.mubr.f32.gmra.mxu0 %v810
  %v924 = vpop.f32.mrf.mxu0
  %v925 = vadd.f32 0.0, %v924
  %v926 = vpop.f32.mrf.mxu0
  %927 = vmatprep.mubr.f32.mxu0 0.0
  %928 = vmatmul.mubr.f32.gmra.mxu0 %v811
  %v929 = vpop.f32.mrf.mxu0
  %v930 = vadd.f32 0.0, %v929
  %v931 = vpop.f32.mrf.mxu0
  %932 = vdwg.mxu0
  %v933 = vld [vmem:[%s2 + $0x188] sm:$0xff]
  %v934 = vld [vmem:[%s2 + $0x190] sm:$0xff]
  %v935 = vld [vmem:[%s2 + $0x198] sm:$0xff]
  %v936 = vld [vmem:[%s2 + $0x1a0] sm:$0xff]
  %v937 = vld [vmem:[%s2 + $0x1a8] sm:$0xff]
  %v938 = vld [vmem:[%s2 + $0x1b0] sm:$0xff]
  %v939 = vld [vmem:[%s2 + $0x1b8] sm:$0xff]
  %v940 = vld [vmem:[%s2 + $0x1c0] sm:$0xff]
  %v941 = vld [vmem:[%s2 + $0x1c8] sm:$0xff]
  %v942 = vld [vmem:[%s2 + $0x1d0] sm:$0xff]
  %v943 = vld [vmem:[%s2 + $0x1d8] sm:$0xff]
  %v944 = vld [vmem:[%s2 + $0x1e0] sm:$0xff]
  %v945 = vld [vmem:[%s2 + $0x1e8] sm:$0xff]
  %v946 = vld [vmem:[%s2 + $0x1f0] sm:$0xff]
  %v947 = vld [vmem:[%s2 + $0x1f8] sm:$0xff]
  %v948 = vld [vmem:[%s2 + $0x200] sm:$0xff]
  %949 = vmatprep.subr.mxu0 0.0
  %950 = vmatpush1.msra.mxu0 %v948
  %951 = vmatprep.subr.mxu0 0.0
  %952 = vmatpush1.msra.mxu0 %v947
  %953 = vmatprep.subr.mxu0 0.0
  %954 = vmatpush1.msra.mxu0 %v946
  %955 = vmatprep.subr.mxu0 0.0
  %956 = vmatpush1.msra.mxu0 %v945
  %957 = vmatprep.subr.mxu0 0.0
  %958 = vmatpush1.msra.mxu0 %v944
  %959 = vmatprep.subr.mxu0 0.0
  %960 = vmatpush1.msra.mxu0 %v943
  %961 = vmatprep.subr.mxu0 0.0
  %962 = vmatpush1.msra.mxu0 %v942
  %963 = vmatprep.subr.mxu0 0.0
  %964 = vmatpush1.msra.mxu0 %v941
  %965 = vmatprep.subr.mxu0 0.0
  %966 = vmatpush1.msra.mxu0 %v940
  %967 = vmatprep.subr.mxu0 0.0
  %968 = vmatpush1.msra.mxu0 %v939
  %969 = vmatprep.subr.mxu0 0.0
  %970 = vmatpush1.msra.mxu0 %v938
  %971 = vmatprep.subr.mxu0 0.0
  %972 = vmatpush1.msra.mxu0 %v937
  %973 = vmatprep.subr.mxu0 0.0
  %974 = vmatpush1.msra.mxu0 %v936
  %975 = vmatprep.subr.mxu0 0.0
  %976 = vmatpush1.msra.mxu0 %v935
  %977 = vmatprep.subr.mxu0 0.0
  %978 = vmatpush1.msra.mxu0 %v934
  %979 = vmatprep.subr.mxu0 0.0
  %980 = vmatpush1.msra.mxu0 %v933
  %981 = vmatprep.subr.mxu0 0.0
  %982 = vmatpush2.msra.mxu0 0.0
  %983 = vmatprep.subr.mxu0 0.0
  %984 = vmatpush2.msra.mxu0 0.0
  %985 = vmatprep.subr.mxu0 0.0
  %986 = vmatpush2.msra.mxu0 0.0
  %987 = vmatprep.subr.mxu0 0.0
  %988 = vmatpush2.msra.mxu0 0.0
  %989 = vmatprep.subr.mxu0 0.0
  %990 = vmatpush2.msra.mxu0 0.0
  %991 = vmatprep.subr.mxu0 0.0
  %992 = vmatpush2.msra.mxu0 0.0
  %993 = vmatprep.subr.mxu0 0.0
  %994 = vmatpush2.msra.mxu0 0.0
  %995 = vmatprep.subr.mxu0 0.0
  %996 = vmatpush2.msra.mxu0 0.0
  %997 = vmatprep.subr.mxu0 0.0
  %998 = vmatpush2.msra.mxu0 0.0
  %999 = vmatprep.subr.mxu0 0.0
  %1000 = vmatpush2.msra.mxu0 0.0
  %1001 = vmatprep.subr.mxu0 0.0
  %1002 = vmatpush2.msra.mxu0 0.0
  %1003 = vmatprep.subr.mxu0 0.0
  %1004 = vmatpush2.msra.mxu0 0.0
  %1005 = vmatprep.subr.mxu0 0.0
  %1006 = vmatpush2.msra.mxu0 0.0
  %1007 = vmatprep.subr.mxu0 0.0
  %1008 = vmatpush2.msra.mxu0 0.0
  %1009 = vmatprep.subr.mxu0 0.0
  %1010 = vmatpush2.msra.mxu0 0.0
  %1011 = vmatprep.subr.mxu0 0.0
  %1012 = vmatpush2.msra.mxu0 0.0
  %1013 = vmatprep.mubr.f32.mxu0 0.0
  %1014 = vmatmul.mubr.f32.gmra.mxu0 %v804
  %v1015 = vpop.f32.mrf.mxu0
  %v1016 = vpop.f32.mrf.mxu0
  %1017 = vmatprep.mubr.f32.mxu0 0.0
  %1018 = vmatmul.mubr.f32.gmra.mxu0 %v805
  %v1019 = vpop.f32.mrf.mxu0
  %v1020 = vpop.f32.mrf.mxu0
  %1021 = vmatprep.mubr.f32.mxu0 0.0
  %1022 = vmatmul.mubr.f32.gmra.mxu0 %v806
  %v1023 = vpop.f32.mrf.mxu0
  %v1024 = vadd.f32 0.0, %v1023
  %v1025 = vpop.f32.mrf.mxu0
  %1026 = vmatprep.mubr.f32.mxu0 0.0
  %1027 = vmatmul.mubr.f32.gmra.mxu0 %v807
  %v1028 = vpop.f32.mrf.mxu0
  %v1029 = vadd.f32 0.0, %v1028
  %v1030 = vpop.f32.mrf.mxu0
  %1031 = vmatprep.mubr.f32.mxu0 0.0
  %1032 = vmatmul.mubr.f32.gmra.mxu0 %v808
  %v1033 = vpop.f32.mrf.mxu0
  %v1034 = vadd.f32 0.0, %v1033
  %v1035 = vpop.f32.mrf.mxu0
  %1036 = vmatprep.mubr.f32.mxu0 0.0
  %1037 = vmatmul.mubr.f32.gmra.mxu0 %v809
  %v1038 = vpop.f32.mrf.mxu0
  %v1039 = vadd.f32 0.0, %v1038
  %v1040 = vpop.f32.mrf.mxu0
  %1041 = vmatprep.mubr.f32.mxu0 0.0
  %1042 = vmatmul.mubr.f32.gmra.mxu0 %v810
  %v1043 = vpop.f32.mrf.mxu0
  %v1044 = vadd.f32 0.0, %v1043
  %v1045 = vpop.f32.mrf.mxu0
  %1046 = vmatprep.mubr.f32.mxu0 0.0
  %1047 = vmatmul.mubr.f32.gmra.mxu0 %v811
  %v1048 = vpop.f32.mrf.mxu0
  %v1049 = vadd.f32 0.0, %v1048
  %v1050 = vpop.f32.mrf.mxu0
  %1051 = vdwg.mxu0
  %v1052 = vadd.f32 %v895, %v1024
  %v1053 = vadd.f32 %v900, %v1029
  %v1054 = vadd.f32 %v905, %v1034
  %v1055 = vadd.f32 %v910, %v1039
  %v1056 = vadd.f32 %v915, %v1044
  %v1057 = vadd.f32 %v920, %v1049
  %v1058 = vlaneseq
  %v1059 = vshrl.u32 %v1058, 7
  %v1060 = vsub.s32 0, %v1059
  %v1061 = vrot.slane %v23, %v1060
  %v1062 = vadd.f32 %v1052, %v1061
  %v1063 = vadd.f32 %v1053, %v1061
  %v1064 = vadd.f32 %v1054, %v1061
  %v1065 = vadd.f32 %v1055, %v1061
  %v1066 = vadd.f32 %v1056, %v1061
  %v1067 = vadd.f32 %v1057, %v1061
  %v1068 = vadd.f32 %v925, %v1061
  %v1069 = vadd.f32 %v930, %v1061
  %v1070 = vmax.f32 %v1062, 0.0
  %v1071 = vmax.f32 %v1063, 0.0
  %v1072 = vmax.f32 %v1064, 0.0
  %v1073 = vmax.f32 %v1065, 0.0
  %v1074 = vmax.f32 %v1066, 0.0
  %v1075 = vmax.f32 %v1067, 0.0
  %v1076 = vmax.f32 %v1068, 0.0
  %v1077 = vmax.f32 %v1069, 0.0
  %v1078 = vld [vmem:[%s3] sm:$0xff]
  %v1079 = vld [vmem:[%s3 + $0x8] sm:$0xff]
  %v1080 = vld [vmem:[%s3 + $0x10] sm:$0xff]
  %v1081 = vld [vmem:[%s3 + $0x18] sm:$0xff]
  %v1082 = vld [vmem:[%s3 + $0x20] sm:$0xff]
  %v1083 = vld [vmem:[%s3 + $0x28] sm:$0xff]
  %v1084 = vld [vmem:[%s3 + $0x30] sm:$0xff]
  %v1085 = vld [vmem:[%s3 + $0x38] sm:$0xff]
  %v1086 = vld [vmem:[%s3 + $0x40] sm:$0xff]
  %v1087 = vld [vmem:[%s3 + $0x48] sm:$0xff]
  %v1088 = vld [vmem:[%s3 + $0x50] sm:$0xff]
  %v1089 = vld [vmem:[%s3 + $0x58] sm:$0xff]
  %v1090 = vld [vmem:[%s3 + $0x60] sm:$0xff]
  %v1091 = vld [vmem:[%s3 + $0x68] sm:$0xff]
  %v1092 = vld [vmem:[%s3 + $0x70] sm:$0xff]
  %v1093 = vld [vmem:[%s3 + $0x78] sm:$0xff]
  %v1094 = vld [vmem:[%s3 + $0x80] sm:$0xff]
  %v1095 = vld [vmem:[%s3 + $0x88] sm:$0xff]
  %v1096 = vld [vmem:[%s3 + $0x90] sm:$0xff]
  %v1097 = vld [vmem:[%s3 + $0x98] sm:$0xff]
  %v1098 = vld [vmem:[%s3 + $0xa0] sm:$0xff]
  %v1099 = vld [vmem:[%s3 + $0xa8] sm:$0xff]
  %v1100 = vld [vmem:[%s3 + $0xb0] sm:$0xff]
  %v1101 = vld [vmem:[%s3 + $0xb8] sm:$0xff]
  %v1102 = vld [vmem:[%s3 + $0xc0] sm:$0xff]
  %v1103 = vld [vmem:[%s3 + $0xc8] sm:$0xff]
  %v1104 = vld [vmem:[%s3 + $0xd0] sm:$0xff]
  %v1105 = vld [vmem:[%s3 + $0xd8] sm:$0xff]
  %v1106 = vld [vmem:[%s3 + $0xe0] sm:$0xff]
  %v1107 = vld [vmem:[%s3 + $0xe8] sm:$0xff]
  %v1108 = vld [vmem:[%s3 + $0xf0] sm:$0xff]
  %v1109 = vld [vmem:[%s3 + $0xf8] sm:$0xff]
  %1110 = vmatprep.subr.mxu0 0.0
  %1111 = vmatpush1.msra.mxu0 %v1109
  %1112 = vmatprep.subr.mxu0 0.0
  %1113 = vmatpush1.msra.mxu0 %v1108
  %1114 = vmatprep.subr.mxu0 0.0
  %1115 = vmatpush1.msra.mxu0 %v1107
  %1116 = vmatprep.subr.mxu0 0.0
  %1117 = vmatpush1.msra.mxu0 %v1106
  %1118 = vmatprep.subr.mxu0 0.0
  %1119 = vmatpush1.msra.mxu0 %v1105
  %1120 = vmatprep.subr.mxu0 0.0
  %1121 = vmatpush1.msra.mxu0 %v1104
  %1122 = vmatprep.subr.mxu0 0.0
  %1123 = vmatpush1.msra.mxu0 %v1103
  %1124 = vmatprep.subr.mxu0 0.0
  %1125 = vmatpush1.msra.mxu0 %v1102
  %1126 = vmatprep.subr.mxu0 0.0
  %1127 = vmatpush1.msra.mxu0 %v1101
  %1128 = vmatprep.subr.mxu0 0.0
  %1129 = vmatpush1.msra.mxu0 %v1100
  %1130 = vmatprep.subr.mxu0 0.0
  %1131 = vmatpush1.msra.mxu0 %v1099
  %1132 = vmatprep.subr.mxu0 0.0
  %1133 = vmatpush1.msra.mxu0 %v1098
  %1134 = vmatprep.subr.mxu0 0.0
  %1135 = vmatpush1.msra.mxu0 %v1097
  %1136 = vmatprep.subr.mxu0 0.0
  %1137 = vmatpush1.msra.mxu0 %v1096
  %1138 = vmatprep.subr.mxu0 0.0
  %1139 = vmatpush1.msra.mxu0 %v1095
  %1140 = vmatprep.subr.mxu0 0.0
  %1141 = vmatpush1.msra.mxu0 %v1094
  %1142 = vmatprep.subr.mxu0 0.0
  %1143 = vmatpush2.msra.mxu0 0.0
  %1144 = vmatprep.subr.mxu0 0.0
  %1145 = vmatpush2.msra.mxu0 0.0
  %1146 = vmatprep.subr.mxu0 0.0
  %1147 = vmatpush2.msra.mxu0 0.0
  %1148 = vmatprep.subr.mxu0 0.0
  %1149 = vmatpush2.msra.mxu0 0.0
  %1150 = vmatprep.subr.mxu0 0.0
  %1151 = vmatpush2.msra.mxu0 0.0
  %1152 = vmatprep.subr.mxu0 0.0
  %1153 = vmatpush2.msra.mxu0 0.0
  %1154 = vmatprep.subr.mxu0 0.0
  %1155 = vmatpush2.msra.mxu0 0.0
  %1156 = vmatprep.subr.mxu0 0.0
  %1157 = vmatpush2.msra.mxu0 0.0
  %1158 = vmatprep.subr.mxu0 0.0
  %1159 = vmatpush2.msra.mxu0 0.0
  %1160 = vmatprep.subr.mxu0 0.0
  %1161 = vmatpush2.msra.mxu0 0.0
  %1162 = vmatprep.subr.mxu0 0.0
  %1163 = vmatpush2.msra.mxu0 0.0
  %1164 = vmatprep.subr.mxu0 0.0
  %1165 = vmatpush2.msra.mxu0 0.0
  %1166 = vmatprep.subr.mxu0 0.0
  %1167 = vmatpush2.msra.mxu0 0.0
  %1168 = vmatprep.subr.mxu0 0.0
  %1169 = vmatpush2.msra.mxu0 0.0
  %1170 = vmatprep.subr.mxu0 0.0
  %1171 = vmatpush2.msra.mxu0 0.0
  %1172 = vmatprep.subr.mxu0 0.0
  %1173 = vmatpush2.msra.mxu0 0.0
  %1174 = vmatprep.mubr.f32.mxu0 0.0
  %1175 = vmatmul.mubr.f32.gmra.mxu0 %v1072
  %v1176 = vpop.f32.mrf.mxu0
  %v1177 = vadd.f32 0.0, %v1176
  %v1178 = vpop.f32.mrf.mxu0
  %1179 = vmatprep.mubr.f32.mxu0 0.0
  %1180 = vmatmul.mubr.f32.gmra.mxu0 %v1073
  %v1181 = vpop.f32.mrf.mxu0
  %v1182 = vadd.f32 0.0, %v1181
  %v1183 = vpop.f32.mrf.mxu0
  %1184 = vdwg.mxu0
  %v1185 = vld [vmem:[%s3 + $0x100] sm:$0xff]
  %v1186 = vld [vmem:[%s3 + $0x108] sm:$0xff]
  %v1187 = vld [vmem:[%s3 + $0x110] sm:$0xff]
  %v1188 = vld [vmem:[%s3 + $0x118] sm:$0xff]
  %v1189 = vld [vmem:[%s3 + $0x120] sm:$0xff]
  %v1190 = vld [vmem:[%s3 + $0x128] sm:$0xff]
  %v1191 = vld [vmem:[%s3 + $0x130] sm:$0xff]
  %v1192 = vld [vmem:[%s3 + $0x138] sm:$0xff]
  %v1193 = vld [vmem:[%s3 + $0x140] sm:$0xff]
  %v1194 = vld [vmem:[%s3 + $0x148] sm:$0xff]
  %v1195 = vld [vmem:[%s3 + $0x150] sm:$0xff]
  %v1196 = vld [vmem:[%s3 + $0x158] sm:$0xff]
  %v1197 = vld [vmem:[%s3 + $0x160] sm:$0xff]
  %v1198 = vld [vmem:[%s3 + $0x168] sm:$0xff]
  %v1199 = vld [vmem:[%s3 + $0x170] sm:$0xff]
  %v1200 = vld [vmem:[%s3 + $0x178] sm:$0xff]
  %v1201 = vld [vmem:[%s3 + $0x180] sm:$0xff]
  %v1202 = vld [vmem:[%s3 + $0x188] sm:$0xff]
  %v1203 = vld [vmem:[%s3 + $0x190] sm:$0xff]
  %v1204 = vld [vmem:[%s3 + $0x198] sm:$0xff]
  %v1205 = vld [vmem:[%s3 + $0x1a0] sm:$0xff]
  %v1206 = vld [vmem:[%s3 + $0x1a8] sm:$0xff]
  %v1207 = vld [vmem:[%s3 + $0x1b0] sm:$0xff]
  %v1208 = vld [vmem:[%s3 + $0x1b8] sm:$0xff]
  %v1209 = vld [vmem:[%s3 + $0x1c0] sm:$0xff]
  %v1210 = vld [vmem:[%s3 + $0x1c8] sm:$0xff]
  %v1211 = vld [vmem:[%s3 + $0x1d0] sm:$0xff]
  %v1212 = vld [vmem:[%s3 + $0x1d8] sm:$0xff]
  %v1213 = vld [vmem:[%s3 + $0x1e0] sm:$0xff]
  %v1214 = vld [vmem:[%s3 + $0x1e8] sm:$0xff]
  %v1215 = vld [vmem:[%s3 + $0x1f0] sm:$0xff]
  %v1216 = vld [vmem:[%s3 + $0x1f8] sm:$0xff]
  %1217 = vmatprep.subr.mxu0 0.0
  %1218 = vmatpush1.msra.mxu0 %v1216
  %1219 = vmatprep.subr.mxu0 0.0
  %1220 = vmatpush1.msra.mxu0 %v1215
  %1221 = vmatprep.subr.mxu0 0.0
  %1222 = vmatpush1.msra.mxu0 %v1214
  %1223 = vmatprep.subr.mxu0 0.0
  %1224 = vmatpush1.msra.mxu0 %v1213
  %1225 = vmatprep.subr.mxu0 0.0
  %1226 = vmatpush1.msra.mxu0 %v1212
  %1227 = vmatprep.subr.mxu0 0.0
  %1228 = vmatpush1.msra.mxu0 %v1211
  %1229 = vmatprep.subr.mxu0 0.0
  %1230 = vmatpush1.msra.mxu0 %v1210
  %1231 = vmatprep.subr.mxu0 0.0
  %1232 = vmatpush1.msra.mxu0 %v1209
  %1233 = vmatprep.subr.mxu0 0.0
  %1234 = vmatpush1.msra.mxu0 %v1208
  %1235 = vmatprep.subr.mxu0 0.0
  %1236 = vmatpush1.msra.mxu0 %v1207
  %1237 = vmatprep.subr.mxu0 0.0
  %1238 = vmatpush1.msra.mxu0 %v1206
  %1239 = vmatprep.subr.mxu0 0.0
  %1240 = vmatpush1.msra.mxu0 %v1205
  %1241 = vmatprep.subr.mxu0 0.0
  %1242 = vmatpush1.msra.mxu0 %v1204
  %1243 = vmatprep.subr.mxu0 0.0
  %1244 = vmatpush1.msra.mxu0 %v1203
  %1245 = vmatprep.subr.mxu0 0.0
  %1246 = vmatpush1.msra.mxu0 %v1202
  %1247 = vmatprep.subr.mxu0 0.0
  %1248 = vmatpush1.msra.mxu0 %v1201
  %1249 = vmatprep.subr.mxu0 0.0
  %1250 = vmatpush2.msra.mxu0 0.0
  %1251 = vmatprep.subr.mxu0 0.0
  %1252 = vmatpush2.msra.mxu0 0.0
  %1253 = vmatprep.subr.mxu0 0.0
  %1254 = vmatpush2.msra.mxu0 0.0
  %1255 = vmatprep.subr.mxu0 0.0
  %1256 = vmatpush2.msra.mxu0 0.0
  %1257 = vmatprep.subr.mxu0 0.0
  %1258 = vmatpush2.msra.mxu0 0.0
  %1259 = vmatprep.subr.mxu0 0.0
  %1260 = vmatpush2.msra.mxu0 0.0
  %1261 = vmatprep.subr.mxu0 0.0
  %1262 = vmatpush2.msra.mxu0 0.0
  %1263 = vmatprep.subr.mxu0 0.0
  %1264 = vmatpush2.msra.mxu0 0.0
  %1265 = vmatprep.subr.mxu0 0.0
  %1266 = vmatpush2.msra.mxu0 0.0
  %1267 = vmatprep.subr.mxu0 0.0
  %1268 = vmatpush2.msra.mxu0 0.0
  %1269 = vmatprep.subr.mxu0 0.0
  %1270 = vmatpush2.msra.mxu0 0.0
  %1271 = vmatprep.subr.mxu0 0.0
  %1272 = vmatpush2.msra.mxu0 0.0
  %1273 = vmatprep.subr.mxu0 0.0
  %1274 = vmatpush2.msra.mxu0 0.0
  %1275 = vmatprep.subr.mxu0 0.0
  %1276 = vmatpush2.msra.mxu0 0.0
  %1277 = vmatprep.subr.mxu0 0.0
  %1278 = vmatpush2.msra.mxu0 0.0
  %1279 = vmatprep.subr.mxu0 0.0
  %1280 = vmatpush2.msra.mxu0 0.0
  %1281 = vmatprep.mubr.f32.mxu0 0.0
  %1282 = vmatmul.mubr.f32.gmra.mxu0 %v1076
  %v1283 = vpop.f32.mrf.mxu0
  %v1284 = vadd.f32 0.0, %v1283
  %v1285 = vpop.f32.mrf.mxu0
  %1286 = vmatprep.mubr.f32.mxu0 0.0
  %1287 = vmatmul.mubr.f32.gmra.mxu0 %v1077
  %v1288 = vpop.f32.mrf.mxu0
  %v1289 = vadd.f32 0.0, %v1288
  %v1290 = vpop.f32.mrf.mxu0
  %1291 = vdwg.mxu0
  %1292 = vmatprep.subr.mxu0 0.0
  %1293 = vmatpush1.msra.mxu0 %v1093
  %1294 = vmatprep.subr.mxu0 0.0
  %1295 = vmatpush1.msra.mxu0 %v1092
  %1296 = vmatprep.subr.mxu0 0.0
  %1297 = vmatpush1.msra.mxu0 %v1091
  %1298 = vmatprep.subr.mxu0 0.0
  %1299 = vmatpush1.msra.mxu0 %v1090
  %1300 = vmatprep.subr.mxu0 0.0
  %1301 = vmatpush1.msra.mxu0 %v1089
  %1302 = vmatprep.subr.mxu0 0.0
  %1303 = vmatpush1.msra.mxu0 %v1088
  %1304 = vmatprep.subr.mxu0 0.0
  %1305 = vmatpush1.msra.mxu0 %v1087
  %1306 = vmatprep.subr.mxu0 0.0
  %1307 = vmatpush1.msra.mxu0 %v1086
  %1308 = vmatprep.subr.mxu0 0.0
  %1309 = vmatpush1.msra.mxu0 %v1085
  %1310 = vmatprep.subr.mxu0 0.0
  %1311 = vmatpush1.msra.mxu0 %v1084
  %1312 = vmatprep.subr.mxu0 0.0
  %1313 = vmatpush1.msra.mxu0 %v1083
  %1314 = vmatprep.subr.mxu0 0.0
  %1315 = vmatpush1.msra.mxu0 %v1082
  %1316 = vmatprep.subr.mxu0 0.0
  %1317 = vmatpush1.msra.mxu0 %v1081
  %1318 = vmatprep.subr.mxu0 0.0
  %1319 = vmatpush1.msra.mxu0 %v1080
  %1320 = vmatprep.subr.mxu0 0.0
  %1321 = vmatpush1.msra.mxu0 %v1079
  %1322 = vmatprep.subr.mxu0 0.0
  %1323 = vmatpush1.msra.mxu0 %v1078
  %1324 = vmatprep.subr.mxu0 0.0
  %1325 = vmatpush2.msra.mxu0 0.0
  %1326 = vmatprep.subr.mxu0 0.0
  %1327 = vmatpush2.msra.mxu0 0.0
  %1328 = vmatprep.subr.mxu0 0.0
  %1329 = vmatpush2.msra.mxu0 0.0
  %1330 = vmatprep.subr.mxu0 0.0
  %1331 = vmatpush2.msra.mxu0 0.0
  %1332 = vmatprep.subr.mxu0 0.0
  %1333 = vmatpush2.msra.mxu0 0.0
  %1334 = vmatprep.subr.mxu0 0.0
  %1335 = vmatpush2.msra.mxu0 0.0
  %1336 = vmatprep.subr.mxu0 0.0
  %1337 = vmatpush2.msra.mxu0 0.0
  %1338 = vmatprep.subr.mxu0 0.0
  %1339 = vmatpush2.msra.mxu0 0.0
  %1340 = vmatprep.subr.mxu0 0.0
  %1341 = vmatpush2.msra.mxu0 0.0
  %1342 = vmatprep.subr.mxu0 0.0
  %1343 = vmatpush2.msra.mxu0 0.0
  %1344 = vmatprep.subr.mxu0 0.0
  %1345 = vmatpush2.msra.mxu0 0.0
  %1346 = vmatprep.subr.mxu0 0.0
  %1347 = vmatpush2.msra.mxu0 0.0
  %1348 = vmatprep.subr.mxu0 0.0
  %1349 = vmatpush2.msra.mxu0 0.0
  %1350 = vmatprep.subr.mxu0 0.0
  %1351 = vmatpush2.msra.mxu0 0.0
  %1352 = vmatprep.subr.mxu0 0.0
  %1353 = vmatpush2.msra.mxu0 0.0
  %1354 = vmatprep.subr.mxu0 0.0
  %1355 = vmatpush2.msra.mxu0 0.0
  %1356 = vmatprep.mubr.f32.mxu0 0.0
  %1357 = vmatmul.mubr.f32.gmra.mxu0 %v1070
  %v1358 = vpop.f32.mrf.mxu0
  %v1359 = vadd.f32 %v1177, %v1358
  %v1360 = vpop.f32.mrf.mxu0
  %1361 = vmatprep.mubr.f32.mxu0 0.0
  %1362 = vmatmul.mubr.f32.gmra.mxu0 %v1071
  %v1363 = vpop.f32.mrf.mxu0
  %v1364 = vadd.f32 %v1182, %v1363
  %v1365 = vpop.f32.mrf.mxu0
  %1366 = vdwg.mxu0
  %1367 = vmatprep.subr.mxu0 0.0
  %1368 = vmatpush1.msra.mxu0 %v1200
  %1369 = vmatprep.subr.mxu0 0.0
  %1370 = vmatpush1.msra.mxu0 %v1199
  %1371 = vmatprep.subr.mxu0 0.0
  %1372 = vmatpush1.msra.mxu0 %v1198
  %1373 = vmatprep.subr.mxu0 0.0
  %1374 = vmatpush1.msra.mxu0 %v1197
  %1375 = vmatprep.subr.mxu0 0.0
  %1376 = vmatpush1.msra.mxu0 %v1196
  %1377 = vmatprep.subr.mxu0 0.0
  %1378 = vmatpush1.msra.mxu0 %v1195
  %1379 = vmatprep.subr.mxu0 0.0
  %1380 = vmatpush1.msra.mxu0 %v1194
  %1381 = vmatprep.subr.mxu0 0.0
  %1382 = vmatpush1.msra.mxu0 %v1193
  %1383 = vmatprep.subr.mxu0 0.0
  %1384 = vmatpush1.msra.mxu0 %v1192
  %1385 = vmatprep.subr.mxu0 0.0
  %1386 = vmatpush1.msra.mxu0 %v1191
  %1387 = vmatprep.subr.mxu0 0.0
  %1388 = vmatpush1.msra.mxu0 %v1190
  %1389 = vmatprep.subr.mxu0 0.0
  %1390 = vmatpush1.msra.mxu0 %v1189
  %1391 = vmatprep.subr.mxu0 0.0
  %1392 = vmatpush1.msra.mxu0 %v1188
  %1393 = vmatprep.subr.mxu0 0.0
  %1394 = vmatpush1.msra.mxu0 %v1187
  %1395 = vmatprep.subr.mxu0 0.0
  %1396 = vmatpush1.msra.mxu0 %v1186
  %1397 = vmatprep.subr.mxu0 0.0
  %1398 = vmatpush1.msra.mxu0 %v1185
  %1399 = vmatprep.subr.mxu0 0.0
  %1400 = vmatpush2.msra.mxu0 0.0
  %1401 = vmatprep.subr.mxu0 0.0
  %1402 = vmatpush2.msra.mxu0 0.0
  %1403 = vmatprep.subr.mxu0 0.0
  %1404 = vmatpush2.msra.mxu0 0.0
  %1405 = vmatprep.subr.mxu0 0.0
  %1406 = vmatpush2.msra.mxu0 0.0
  %1407 = vmatprep.subr.mxu0 0.0
  %1408 = vmatpush2.msra.mxu0 0.0
  %1409 = vmatprep.subr.mxu0 0.0
  %1410 = vmatpush2.msra.mxu0 0.0
  %1411 = vmatprep.subr.mxu0 0.0
  %1412 = vmatpush2.msra.mxu0 0.0
  %1413 = vmatprep.subr.mxu0 0.0
  %1414 = vmatpush2.msra.mxu0 0.0
  %1415 = vmatprep.subr.mxu0 0.0
  %1416 = vmatpush2.msra.mxu0 0.0
  %1417 = vmatprep.subr.mxu0 0.0
  %1418 = vmatpush2.msra.mxu0 0.0
  %1419 = vmatprep.subr.mxu0 0.0
  %1420 = vmatpush2.msra.mxu0 0.0
  %1421 = vmatprep.subr.mxu0 0.0
  %1422 = vmatpush2.msra.mxu0 0.0
  %1423 = vmatprep.subr.mxu0 0.0
  %1424 = vmatpush2.msra.mxu0 0.0
  %1425 = vmatprep.subr.mxu0 0.0
  %1426 = vmatpush2.msra.mxu0 0.0
  %1427 = vmatprep.subr.mxu0 0.0
  %1428 = vmatpush2.msra.mxu0 0.0
  %1429 = vmatprep.subr.mxu0 0.0
  %1430 = vmatpush2.msra.mxu0 0.0
  %1431 = vmatprep.mubr.f32.mxu0 0.0
  %1432 = vmatmul.mubr.f32.gmra.mxu0 %v1074
  %v1433 = vpop.f32.mrf.mxu0
  %v1434 = vadd.f32 %v1284, %v1433
  %v1435 = vpop.f32.mrf.mxu0
  %1436 = vmatprep.mubr.f32.mxu0 0.0
  %1437 = vmatmul.mubr.f32.gmra.mxu0 %v1075
  %v1438 = vpop.f32.mrf.mxu0
  %v1439 = vadd.f32 %v1289, %v1438
  %v1440 = vpop.f32.mrf.mxu0
  %1441 = vdwg.mxu0
  %v1442 = vadd.f32 %v1359, %v1434
  %v1443 = vadd.f32 %v1364, %v1439
  %v1444 = vlaneseq
  %v1445 = vshrl.u32 %v1444, 7
  %v1446 = vsub.s32 0, %v1445
  %v1447 = vrot.slane %v24, %v1446
  %v1448 = vadd.f32 %v1442, %v1447
  %v1449 = vadd.f32 %v1443, %v1447
  %v1450 = vld [vmem:[%s1] sm:$0xff]
  %v1451 = vld [vmem:[%s1 + $0x8] sm:$0xff]
  %v1452 = vld [vmem:[%s3 + $0x220] sm:$0xff]
  %v1453 = vld [vmem:[%s3 + $0x228] sm:$0xff]
  %v1454 = vlaneseq
  %v1455 = vshrl.u32 %v1454, 7
  %v1456 = vsub.s32 0, %v1455
  %v1457 = vrot.slane %v25, %v1456
  %vm1458 = vcmask 130048
  %v1460 = vsel %vm1458, %v1450, 0
  %v1463 = vsel %vm1458, %v1451, 0
  %1465 = vmatprep.subr.mxu0 0.0
  %1466 = vmatpush1.msra.mxu0 0.0
  %1467 = vmatprep.subr.mxu0 0.0
  %1468 = vmatpush1.msra.mxu0 0.0
  %1469 = vmatprep.subr.mxu0 0.0
  %1470 = vmatpush1.msra.mxu0 0.0
  %1471 = vmatprep.subr.mxu0 0.0
  %1472 = vmatpush1.msra.mxu0 0.0
  %1473 = vmatprep.subr.mxu0 0.0
  %1474 = vmatpush1.msra.mxu0 0.0
  %1475 = vmatprep.subr.mxu0 0.0
  %1476 = vmatpush1.msra.mxu0 0.0
  %1477 = vmatprep.subr.mxu0 0.0
  %1478 = vmatpush1.msra.mxu0 0.0
  %1479 = vmatprep.subr.mxu0 0.0
  %1480 = vmatpush1.msra.mxu0 0.0
  %1481 = vmatprep.subr.mxu0 0.0
  %1482 = vmatpush1.msra.mxu0 0.0
  %1483 = vmatprep.subr.mxu0 0.0
  %1484 = vmatpush1.msra.mxu0 0.0
  %1485 = vmatprep.subr.mxu0 0.0
  %1486 = vmatpush1.msra.mxu0 0.0
  %1487 = vmatprep.subr.mxu0 0.0
  %1488 = vmatpush1.msra.mxu0 0.0
  %1489 = vmatprep.subr.mxu0 0.0
  %1490 = vmatpush1.msra.mxu0 0.0
  %1491 = vmatprep.subr.mxu0 0.0
  %1492 = vmatpush1.msra.mxu0 0.0
  %1493 = vmatprep.subr.mxu0 0.0
  %1494 = vmatpush1.msra.mxu0 %v1453
  %1495 = vmatprep.subr.mxu0 0.0
  %1496 = vmatpush1.msra.mxu0 %v1452
  %1497 = vmatprep.subr.mxu0 0.0
  %1498 = vmatpush2.msra.mxu0 0.0
  %1499 = vmatprep.subr.mxu0 0.0
  %1500 = vmatpush2.msra.mxu0 0.0
  %1501 = vmatprep.subr.mxu0 0.0
  %1502 = vmatpush2.msra.mxu0 0.0
  %1503 = vmatprep.subr.mxu0 0.0
  %1504 = vmatpush2.msra.mxu0 0.0
  %1505 = vmatprep.subr.mxu0 0.0
  %1506 = vmatpush2.msra.mxu0 0.0
  %1507 = vmatprep.subr.mxu0 0.0
  %1508 = vmatpush2.msra.mxu0 0.0
  %1509 = vmatprep.subr.mxu0 0.0
  %1510 = vmatpush2.msra.mxu0 0.0
  %1511 = vmatprep.subr.mxu0 0.0
  %1512 = vmatpush2.msra.mxu0 0.0
  %1513 = vmatprep.subr.mxu0 0.0
  %1514 = vmatpush2.msra.mxu0 0.0
  %1515 = vmatprep.subr.mxu0 0.0
  %1516 = vmatpush2.msra.mxu0 0.0
  %1517 = vmatprep.subr.mxu0 0.0
  %1518 = vmatpush2.msra.mxu0 0.0
  %1519 = vmatprep.subr.mxu0 0.0
  %1520 = vmatpush2.msra.mxu0 0.0
  %1521 = vmatprep.subr.mxu0 0.0
  %1522 = vmatpush2.msra.mxu0 0.0
  %1523 = vmatprep.subr.mxu0 0.0
  %1524 = vmatpush2.msra.mxu0 0.0
  %1525 = vmatprep.subr.mxu0 0.0
  %1526 = vmatpush2.msra.mxu0 0.0
  %1527 = vmatprep.subr.mxu0 0.0
  %1528 = vmatpush2.msra.mxu0 0.0
  %1529 = vmatprep.mubr.f32.mxu0 0.0
  %1530 = vmatmul.mubr.f32.gmra.mxu0 %v1460
  %v1531 = vpop.f32.mrf.mxu0
  %v1532 = vadd.f32 %v1457, %v1531
  %v1533 = vpop.f32.mrf.mxu0
  %1534 = vmatprep.mubr.f32.mxu0 0.0
  %1535 = vmatmul.mubr.f32.gmra.mxu0 %v1463
  %v1536 = vpop.f32.mrf.mxu0
  %v1537 = vadd.f32 %v1457, %v1536
  %v1538 = vpop.f32.mrf.mxu0
  %1539 = vdwg.mxu0
  %v1540 = vld [vmem:[%s3 + $0x200] sm:$0xff]
  %v1541 = vld [vmem:[%s3 + $0x208] sm:$0xff]
  %v1542 = vld [vmem:[%s3 + $0x210] sm:$0xff]
  %v1543 = vld [vmem:[%s3 + $0x218] sm:$0xff]
  %v1544 = vpack.c.bf16 %v1541, %v1540
  %v1545 = vpack.c.bf16 %v1543, %v1542
  %v1546 = vld [vmem:[%s3 + $0x230] sm:$0xff]
  %v1547 = vld [vmem:[%s3 + $0x238] sm:$0xff]
  %v1548 = vld [vmem:[%s3 + $0x240] sm:$0xff]
  %v1549 = vld [vmem:[%s3 + $0x248] sm:$0xff]
  %v1550 = vpack.c.bf16 %v1547, %v1546
  %v1551 = vpack.c.bf16 %v1549, %v1548
  %v1552 = vld [vmem:[%s3 + $0x250] sm:$0xff]
  %v1553 = vld [vmem:[%s3 + $0x258] sm:$0xff]
  %v1554 = vld [vmem:[%s3 + $0x260] sm:$0xff]
  %v1555 = vld [vmem:[%s3 + $0x268] sm:$0xff]
  %vm1556 = vcmask 261120
  %v1558 = vsel %vm1556, 0, 0
  %1560 = vmatprep.subr.bf16.mxu0 0
  %1561 = vmatpush1.bf16.msra.mxu0 0
  %1562 = vmatprep.subr.bf16.mxu0 0
  %1563 = vmatpush1.bf16.msra.mxu0 0
  %1564 = vmatprep.subr.bf16.mxu0 0
  %1565 = vmatpush1.bf16.msra.mxu0 0
  %1566 = vmatprep.subr.bf16.mxu0 0
  %1567 = vmatpush1.bf16.msra.mxu0 0
  %1568 = vmatprep.subr.bf16.mxu0 0
  %1569 = vmatpush1.bf16.msra.mxu0 0
  %1570 = vmatprep.subr.bf16.mxu0 0
  %1571 = vmatpush1.bf16.msra.mxu0 0
  %1572 = vmatprep.subr.bf16.mxu0 0
  %1573 = vmatpush1.bf16.msra.mxu0 %v1545
  %1574 = vmatprep.subr.bf16.mxu0 0
  %1575 = vmatpush1.bf16.msra.mxu0 %v1544
  %1576 = vmatprep.subr.bf16.mxu0 0
  %1577 = vmatpush2.bf16.msra.mxu0 0
  %1578 = vmatprep.subr.bf16.mxu0 0
  %1579 = vmatpush2.bf16.msra.mxu0 0
  %1580 = vmatprep.subr.bf16.mxu0 0
  %1581 = vmatpush2.bf16.msra.mxu0 0
  %1582 = vmatprep.subr.bf16.mxu0 0
  %1583 = vmatpush2.bf16.msra.mxu0 0
  %1584 = vmatprep.subr.bf16.mxu0 0
  %1585 = vmatpush2.bf16.msra.mxu0 0
  %1586 = vmatprep.subr.bf16.mxu0 0
  %1587 = vmatpush2.bf16.msra.mxu0 0
  %1588 = vmatprep.subr.bf16.mxu0 0
  %1589 = vmatpush2.bf16.msra.mxu0 0
  %1590 = vmatprep.subr.bf16.mxu0 0
  %1591 = vmatpush2.bf16.msra.mxu0 0
  %1592 = vmatprep.mubr.bf16.mxu0 0
  %1593 = vmatmul.mubr.bf16.gmra.mxu0 %v1558
  %v1594 = vpop.f32.mrf.mxu0
  %v1595 = vadd.f32 0.0, %v1594
  %v1596 = vpop.f32.mrf.mxu0
  %v1597 = vpop.f32.mrf.mxu0
  %v1598 = vpop.f32.mrf.mxu0
  %1599 = vdwg.mxu0
  %v1600 = vadd.f32 %v1448, %v1595
  %v1601 = vmul.f32 %v1600, 0.5
  %v1602 = vtanh.pop %v1601
  %v1603 = vmul.f32 %v1602, 0.5
  %v1604 = vadd.f32 %v1603, 0.5
  %v1605 = vtanh.pop %v1600
  %v1606 = vmul.f32 %v1604, 0.0
  %1608 = vrot.lane.b32.xlu0 %v1605, 64
  %v1609 = vpop.permute.xlu0 %1608
  %v1611 = vmul.f32 %v1604, %v1609
  %1613 = vrot.lane.b32.xlu0 %v1611, 32
  %v1614 = vpop.permute.xlu0 %1613
  %v1616 = vadd.f32 %v1606, %v1614
  %v1617 = vtanh.pop %v1616
  %1619 = vrot.lane.b32.xlu0 %v1617, 64
  %v1620 = vpop.permute.xlu0 %1619
  %v1622 = vmul.f32 %v1604, %v1620
  %v1623 = vpack.c.bf16 %v1622, %v1622
  %1625 = vrot.lane.b32.xlu0 %v1623, 32
  %v1626 = vpop.permute.xlu0 %1625
  %v1628 = vsel %vm1556, %v1626, 0
  %1630 = vmatprep.subr.bf16.mxu0 0
  %1631 = vmatpush1.bf16.msra.mxu0 0
  %1632 = vmatprep.subr.bf16.mxu0 0
  %1633 = vmatpush1.bf16.msra.mxu0 0
  %1634 = vmatprep.subr.bf16.mxu0 0
  %1635 = vmatpush1.bf16.msra.mxu0 0
  %1636 = vmatprep.subr.bf16.mxu0 0
  %1637 = vmatpush1.bf16.msra.mxu0 0
  %1638 = vmatprep.subr.bf16.mxu0 0
  %1639 = vmatpush1.bf16.msra.mxu0 0
  %1640 = vmatprep.subr.bf16.mxu0 0
  %1641 = vmatpush1.bf16.msra.mxu0 0
  %1642 = vmatprep.subr.bf16.mxu0 0
  %1643 = vmatpush1.bf16.msra.mxu0 %v1545
  %1644 = vmatprep.subr.bf16.mxu0 0
  %1645 = vmatpush1.bf16.msra.mxu0 %v1544
  %1646 = vmatprep.subr.bf16.mxu0 0
  %1647 = vmatpush2.bf16.msra.mxu0 0
  %1648 = vmatprep.subr.bf16.mxu0 0
  %1649 = vmatpush2.bf16.msra.mxu0 0
  %1650 = vmatprep.subr.bf16.mxu0 0
  %1651 = vmatpush2.bf16.msra.mxu0 0
  %1652 = vmatprep.subr.bf16.mxu0 0
  %1653 = vmatpush2.bf16.msra.mxu0 0
  %1654 = vmatprep.subr.bf16.mxu0 0
  %1655 = vmatpush2.bf16.msra.mxu0 0
  %1656 = vmatprep.subr.bf16.mxu0 0
  %1657 = vmatpush2.bf16.msra.mxu0 0
  %1658 = vmatprep.subr.bf16.mxu0 0
  %1659 = vmatpush2.bf16.msra.mxu0 0
  %1660 = vmatprep.subr.bf16.mxu0 0
  %1661 = vmatpush2.bf16.msra.mxu0 0
  %1662 = vmatprep.mubr.bf16.mxu0 0
  %1663 = vmatmul.mubr.bf16.gmra.mxu0 %v1628
  %v1664 = vpop.f32.mrf.mxu0
  %v1665 = vadd.f32 0.0, %v1664
  %v1666 = vpop.f32.mrf.mxu0
  %v1667 = vpop.f32.mrf.mxu0
  %v1668 = vpop.f32.mrf.mxu0
  %1669 = vdwg.mxu0
  %v1671 = vrot.slane %v1665, 6
  %v1673 = vadd.f32 %v1448, %v1671
  %v1674 = vmul.f32 %v1673, 0.5
  %v1675 = vtanh.pop %v1674
  %v1676 = vmul.f32 %v1675, 0.5
  %v1677 = vadd.f32 %v1676, 0.5
  %v1678 = vtanh.pop %v1673
  %v1680 = vrot.slane %v1616, 6
  %v1682 = vmul.f32 %v1677, %v1680
  %1684 = vrot.lane.b32.xlu0 %v1678, 64
  %v1685 = vpop.permute.xlu0 %1684
  %v1687 = vmul.f32 %v1677, %v1685
  %1689 = vrot.lane.b32.xlu0 %v1687, 32
  %v1690 = vpop.permute.xlu0 %1689
  %v1692 = vadd.f32 %v1682, %v1690
  %v1693 = vtanh.pop %v1692
  %1695 = vrot.lane.b32.xlu0 %v1693, 64
  %v1696 = vpop.permute.xlu0 %1695
  %v1698 = vmul.f32 %v1677, %v1696
  %v1699 = vpack.c.bf16 %v1698, %v1698
  %v1701 = vrot.slane %v1699, 1
  %1702 = vrot.lane.b32.xlu0 %v1701, 32
  %v1703 = vpop.permute.xlu0 %1702
  %v1705 = vsel %vm1556, %v1703, 0
  %1707 = vmatprep.subr.bf16.mxu0 0
  %1708 = vmatpush1.bf16.msra.mxu0 0
  %1709 = vmatprep.subr.bf16.mxu0 0
  %1710 = vmatpush1.bf16.msra.mxu0 0
  %1711 = vmatprep.subr.bf16.mxu0 0
  %1712 = vmatpush1.bf16.msra.mxu0 0
  %1713 = vmatprep.subr.bf16.mxu0 0
  %1714 = vmatpush1.bf16.msra.mxu0 0
  %1715 = vmatprep.subr.bf16.mxu0 0
  %1716 = vmatpush1.bf16.msra.mxu0 0
  %1717 = vmatprep.subr.bf16.mxu0 0
  %1718 = vmatpush1.bf16.msra.mxu0 0
  %1719 = vmatprep.subr.bf16.mxu0 0
  %1720 = vmatpush1.bf16.msra.mxu0 %v1545
  %1721 = vmatprep.subr.bf16.mxu0 0
  %1722 = vmatpush1.bf16.msra.mxu0 %v1544
  %1723 = vmatprep.subr.bf16.mxu0 0
  %1724 = vmatpush2.bf16.msra.mxu0 0
  %1725 = vmatprep.subr.bf16.mxu0 0
  %1726 = vmatpush2.bf16.msra.mxu0 0
  %1727 = vmatprep.subr.bf16.mxu0 0
  %1728 = vmatpush2.bf16.msra.mxu0 0
  %1729 = vmatprep.subr.bf16.mxu0 0
  %1730 = vmatpush2.bf16.msra.mxu0 0
  %1731 = vmatprep.subr.bf16.mxu0 0
  %1732 = vmatpush2.bf16.msra.mxu0 0
  %1733 = vmatprep.subr.bf16.mxu0 0
  %1734 = vmatpush2.bf16.msra.mxu0 0
  %1735 = vmatprep.subr.bf16.mxu0 0
  %1736 = vmatpush2.bf16.msra.mxu0 0
  %1737 = vmatprep.subr.bf16.mxu0 0
  %1738 = vmatpush2.bf16.msra.mxu0 0
  %1739 = vmatprep.mubr.bf16.mxu0 0
  %1740 = vmatmul.mubr.bf16.gmra.mxu0 %v1705
  %v1741 = vpop.f32.mrf.mxu0
  %v1742 = vadd.f32 0.0, %v1741
  %v1743 = vpop.f32.mrf.mxu0
  %v1744 = vpop.f32.mrf.mxu0
  %v1745 = vpop.f32.mrf.mxu0
  %1746 = vdwg.mxu0
  %v1748 = vrot.slane %v1742, 4
  %v1750 = vadd.f32 %v1448, %v1748
  %v1751 = vmul.f32 %v1750, 0.5
  %v1752 = vtanh.pop %v1751
  %v1753 = vmul.f32 %v1752, 0.5
  %v1754 = vadd.f32 %v1753, 0.5
  %v1755 = vtanh.pop %v1750
  %v1757 = vrot.slane %v1692, 6
  %v1759 = vmul.f32 %v1754, %v1757
  %1761 = vrot.lane.b32.xlu0 %v1755, 64
  %v1762 = vpop.permute.xlu0 %1761
  %v1764 = vmul.f32 %v1754, %v1762
  %1766 = vrot.lane.b32.xlu0 %v1764, 32
  %v1767 = vpop.permute.xlu0 %1766
  %v1769 = vadd.f32 %v1759, %v1767
  %v1770 = vtanh.pop %v1769
  %1772 = vrot.lane.b32.xlu0 %v1770, 64
  %v1773 = vpop.permute.xlu0 %1772
  %v1775 = vmul.f32 %v1754, %v1773
  %v1776 = vpack.c.bf16 %v1775, %v1775
  %v1778 = vrot.slane %v1776, 2
  %1779 = vrot.lane.b32.xlu0 %v1778, 32
  %v1780 = vpop.permute.xlu0 %1779
  %v1782 = vsel %vm1556, %v1780, 0
  %1784 = vmatprep.subr.bf16.mxu0 0
  %1785 = vmatpush1.bf16.msra.mxu0 0
  %1786 = vmatprep.subr.bf16.mxu0 0
  %1787 = vmatpush1.bf16.msra.mxu0 0
  %1788 = vmatprep.subr.bf16.mxu0 0
  %1789 = vmatpush1.bf16.msra.mxu0 0
  %1790 = vmatprep.subr.bf16.mxu0 0
  %1791 = vmatpush1.bf16.msra.mxu0 0
  %1792 = vmatprep.subr.bf16.mxu0 0
  %1793 = vmatpush1.bf16.msra.mxu0 0
  %1794 = vmatprep.subr.bf16.mxu0 0
  %1795 = vmatpush1.bf16.msra.mxu0 0
  %1796 = vmatprep.subr.bf16.mxu0 0
  %1797 = vmatpush1.bf16.msra.mxu0 %v1545
  %1798 = vmatprep.subr.bf16.mxu0 0
  %1799 = vmatpush1.bf16.msra.mxu0 %v1544
  %1800 = vmatprep.subr.bf16.mxu0 0
  %1801 = vmatpush2.bf16.msra.mxu0 0
  %1802 = vmatprep.subr.bf16.mxu0 0
  %1803 = vmatpush2.bf16.msra.mxu0 0
  %1804 = vmatprep.subr.bf16.mxu0 0
  %1805 = vmatpush2.bf16.msra.mxu0 0
  %1806 = vmatprep.subr.bf16.mxu0 0
  %1807 = vmatpush2.bf16.msra.mxu0 0
  %1808 = vmatprep.subr.bf16.mxu0 0
  %1809 = vmatpush2.bf16.msra.mxu0 0
  %1810 = vmatprep.subr.bf16.mxu0 0
  %1811 = vmatpush2.bf16.msra.mxu0 0
  %1812 = vmatprep.subr.bf16.mxu0 0
  %1813 = vmatpush2.bf16.msra.mxu0 0
  %1814 = vmatprep.subr.bf16.mxu0 0
  %1815 = vmatpush2.bf16.msra.mxu0 0
  %1816 = vmatprep.mubr.bf16.mxu0 0
  %1817 = vmatmul.mubr.bf16.gmra.mxu0 %v1782
  %v1818 = vpop.f32.mrf.mxu0
  %v1819 = vadd.f32 0.0, %v1818
  %v1820 = vpop.f32.mrf.mxu0
  %v1821 = vpop.f32.mrf.mxu0
  %v1822 = vpop.f32.mrf.mxu0
  %1823 = vdwg.mxu0
  %v1825 = vrot.slane %v1819, 2
  %v1827 = vadd.f32 %v1448, %v1825
  %v1828 = vmul.f32 %v1827, 0.5
  %v1829 = vtanh.pop %v1828
  %v1830 = vmul.f32 %v1829, 0.5
  %v1831 = vadd.f32 %v1830, 0.5
  %v1832 = vtanh.pop %v1827
  %v1834 = vrot.slane %v1769, 6
  %v1836 = vmul.f32 %v1831, %v1834
  %1838 = vrot.lane.b32.xlu0 %v1832, 64
  %v1839 = vpop.permute.xlu0 %1838
  %v1841 = vmul.f32 %v1831, %v1839
  %1843 = vrot.lane.b32.xlu0 %v1841, 32
  %v1844 = vpop.permute.xlu0 %1843
  %v1846 = vadd.f32 %v1836, %v1844
  %v1847 = vtanh.pop %v1846
  %1849 = vrot.lane.b32.xlu0 %v1847, 64
  %v1850 = vpop.permute.xlu0 %1849
  %v1852 = vmul.f32 %v1831, %v1850
  %v1853 = vpack.c.bf16 %v1852, %v1852
  %v1855 = vrot.slane %v1853, 3
  %1856 = vrot.lane.b32.xlu0 %v1855, 32
  %v1857 = vpop.permute.xlu0 %1856
  %v1859 = vsel %vm1556, %v1857, 0
  %1861 = vmatprep.subr.bf16.mxu0 0
  %1862 = vmatpush1.bf16.msra.mxu0 0
  %1863 = vmatprep.subr.bf16.mxu0 0
  %1864 = vmatpush1.bf16.msra.mxu0 0
  %1865 = vmatprep.subr.bf16.mxu0 0
  %1866 = vmatpush1.bf16.msra.mxu0 0
  %1867 = vmatprep.subr.bf16.mxu0 0
  %1868 = vmatpush1.bf16.msra.mxu0 0
  %1869 = vmatprep.subr.bf16.mxu0 0
  %1870 = vmatpush1.bf16.msra.mxu0 0
  %1871 = vmatprep.subr.bf16.mxu0 0
  %1872 = vmatpush1.bf16.msra.mxu0 0
  %1873 = vmatprep.subr.bf16.mxu0 0
  %1874 = vmatpush1.bf16.msra.mxu0 %v1545
  %1875 = vmatprep.subr.bf16.mxu0 0
  %1876 = vmatpush1.bf16.msra.mxu0 %v1544
  %1877 = vmatprep.subr.bf16.mxu0 0
  %1878 = vmatpush2.bf16.msra.mxu0 0
  %1879 = vmatprep.subr.bf16.mxu0 0
  %1880 = vmatpush2.bf16.msra.mxu0 0
  %1881 = vmatprep.subr.bf16.mxu0 0
  %1882 = vmatpush2.bf16.msra.mxu0 0
  %1883 = vmatprep.subr.bf16.mxu0 0
  %1884 = vmatpush2.bf16.msra.mxu0 0
  %1885 = vmatprep.subr.bf16.mxu0 0
  %1886 = vmatpush2.bf16.msra.mxu0 0
  %1887 = vmatprep.subr.bf16.mxu0 0
  %1888 = vmatpush2.bf16.msra.mxu0 0
  %1889 = vmatprep.subr.bf16.mxu0 0
  %1890 = vmatpush2.bf16.msra.mxu0 0
  %1891 = vmatprep.subr.bf16.mxu0 0
  %1892 = vmatpush2.bf16.msra.mxu0 0
  %1893 = vmatprep.mubr.bf16.mxu0 0
  %1894 = vmatmul.mubr.bf16.gmra.mxu0 %v1859
  %v1895 = vpop.f32.mrf.mxu0
  %v1896 = vadd.f32 0.0, %v1895
  %v1897 = vpop.f32.mrf.mxu0
  %v1898 = vpop.f32.mrf.mxu0
  %v1899 = vpop.f32.mrf.mxu0
  %1900 = vdwg.mxu0
  %v1901 = vadd.f32 %v1449, %v1896
  %v1902 = vmul.f32 %v1901, 0.5
  %v1903 = vtanh.pop %v1902
  %v1904 = vmul.f32 %v1903, 0.5
  %v1905 = vadd.f32 %v1904, 0.5
  %v1906 = vtanh.pop %v1901
  %v1908 = vrot.slane %v1846, 6
  %v1910 = vmul.f32 %v1905, %v1908
  %1912 = vrot.lane.b32.xlu0 %v1906, 64
  %v1913 = vpop.permute.xlu0 %1912
  %v1915 = vmul.f32 %v1905, %v1913
  %1917 = vrot.lane.b32.xlu0 %v1915, 32
  %v1918 = vpop.permute.xlu0 %1917
  %v1920 = vadd.f32 %v1910, %v1918
  %v1921 = vtanh.pop %v1920
  %1923 = vrot.lane.b32.xlu0 %v1921, 64
  %v1924 = vpop.permute.xlu0 %1923
  %v1926 = vmul.f32 %v1905, %v1924
  %v1927 = vpack.c.bf16 %v1926, %v1926
  %1929 = vrot.lane.b32.xlu0 %v1927, 32
  %v1930 = vpop.permute.xlu0 %1929
  %v1932 = vsel %vm1556, %v1930, 0
  %1934 = vmatprep.subr.bf16.mxu0 0
  %1935 = vmatpush1.bf16.msra.mxu0 0
  %1936 = vmatprep.subr.bf16.mxu0 0
  %1937 = vmatpush1.bf16.msra.mxu0 0
  %1938 = vmatprep.subr.bf16.mxu0 0
  %1939 = vmatpush1.bf16.msra.mxu0 0
  %1940 = vmatprep.subr.bf16.mxu0 0
  %1941 = vmatpush1.bf16.msra.mxu0 0
  %1942 = vmatprep.subr.bf16.mxu0 0
  %1943 = vmatpush1.bf16.msra.mxu0 0
  %1944 = vmatprep.subr.bf16.mxu0 0
  %1945 = vmatpush1.bf16.msra.mxu0 0
  %1946 = vmatprep.subr.bf16.mxu0 0
  %1947 = vmatpush1.bf16.msra.mxu0 %v1545
  %1948 = vmatprep.subr.bf16.mxu0 0
  %1949 = vmatpush1.bf16.msra.mxu0 %v1544
  %1950 = vmatprep.subr.bf16.mxu0 0
  %1951 = vmatpush2.bf16.msra.mxu0 0
  %1952 = vmatprep.subr.bf16.mxu0 0
  %1953 = vmatpush2.bf16.msra.mxu0 0
  %1954 = vmatprep.subr.bf16.mxu0 0
  %1955 = vmatpush2.bf16.msra.mxu0 0
  %1956 = vmatprep.subr.bf16.mxu0 0
  %1957 = vmatpush2.bf16.msra.mxu0 0
  %1958 = vmatprep.subr.bf16.mxu0 0
  %1959 = vmatpush2.bf16.msra.mxu0 0
  %1960 = vmatprep.subr.bf16.mxu0 0
  %1961 = vmatpush2.bf16.msra.mxu0 0
  %1962 = vmatprep.subr.bf16.mxu0 0
  %1963 = vmatpush2.bf16.msra.mxu0 0
  %1964 = vmatprep.subr.bf16.mxu0 0
  %1965 = vmatpush2.bf16.msra.mxu0 0
  %1966 = vmatprep.mubr.bf16.mxu0 0
  %1967 = vmatmul.mubr.bf16.gmra.mxu0 %v1932
  %v1968 = vpop.f32.mrf.mxu0
  %v1969 = vadd.f32 0.0, %v1968
  %v1970 = vpop.f32.mrf.mxu0
  %v1971 = vpop.f32.mrf.mxu0
  %v1972 = vpop.f32.mrf.mxu0
  %1973 = vdwg.mxu0
  %v1975 = vrot.slane %v1969, 6
  %v1977 = vadd.f32 %v1449, %v1975
  %v1978 = vmul.f32 %v1977, 0.5
  %v1979 = vtanh.pop %v1978
  %v1980 = vmul.f32 %v1979, 0.5
  %v1981 = vadd.f32 %v1980, 0.5
  %v1982 = vtanh.pop %v1977
  %v1984 = vrot.slane %v1920, 6
  %v1986 = vmul.f32 %v1981, %v1984
  %1988 = vrot.lane.b32.xlu0 %v1982, 64
  %v1989 = vpop.permute.xlu0 %1988
  %v1991 = vmul.f32 %v1981, %v1989
  %1993 = vrot.lane.b32.xlu0 %v1991, 32
  %v1994 = vpop.permute.xlu0 %1993
  %v1996 = vadd.f32 %v1986, %v1994
  %v1997 = vtanh.pop %v1996
  %1999 = vrot.lane.b32.xlu0 %v1997, 64
  %v2000 = vpop.permute.xlu0 %1999
  %v2002 = vmul.f32 %v1981, %v2000
  %v2003 = vpack.c.bf16 %v2002, %v2002
  %v2005 = vrot.slane %v2003, 1
  %2006 = vrot.lane.b32.xlu0 %v2005, 32
  %v2007 = vpop.permute.xlu0 %2006
  %v2009 = vsel %vm1556, %v2007, 0
  %2011 = vmatprep.subr.bf16.mxu0 0
  %2012 = vmatpush1.bf16.msra.mxu0 0
  %2013 = vmatprep.subr.bf16.mxu0 0
  %2014 = vmatpush1.bf16.msra.mxu0 0
  %2015 = vmatprep.subr.bf16.mxu0 0
  %2016 = vmatpush1.bf16.msra.mxu0 0
  %2017 = vmatprep.subr.bf16.mxu0 0
  %2018 = vmatpush1.bf16.msra.mxu0 0
  %2019 = vmatprep.subr.bf16.mxu0 0
  %2020 = vmatpush1.bf16.msra.mxu0 0
  %2021 = vmatprep.subr.bf16.mxu0 0
  %2022 = vmatpush1.bf16.msra.mxu0 0
  %2023 = vmatprep.subr.bf16.mxu0 0
  %2024 = vmatpush1.bf16.msra.mxu0 %v1545
  %2025 = vmatprep.subr.bf16.mxu0 0
  %2026 = vmatpush1.bf16.msra.mxu0 %v1544
  %2027 = vmatprep.subr.bf16.mxu0 0
  %2028 = vmatpush2.bf16.msra.mxu0 0
  %2029 = vmatprep.subr.bf16.mxu0 0
  %2030 = vmatpush2.bf16.msra.mxu0 0
  %2031 = vmatprep.subr.bf16.mxu0 0
  %2032 = vmatpush2.bf16.msra.mxu0 0
  %2033 = vmatprep.subr.bf16.mxu0 0
  %2034 = vmatpush2.bf16.msra.mxu0 0
  %2035 = vmatprep.subr.bf16.mxu0 0
  %2036 = vmatpush2.bf16.msra.mxu0 0
  %2037 = vmatprep.subr.bf16.mxu0 0
  %2038 = vmatpush2.bf16.msra.mxu0 0
  %2039 = vmatprep.subr.bf16.mxu0 0
  %2040 = vmatpush2.bf16.msra.mxu0 0
  %2041 = vmatprep.subr.bf16.mxu0 0
  %2042 = vmatpush2.bf16.msra.mxu0 0
  %2043 = vmatprep.mubr.bf16.mxu0 0
  %2044 = vmatmul.mubr.bf16.gmra.mxu0 %v2009
  %v2045 = vpop.f32.mrf.mxu0
  %v2046 = vadd.f32 0.0, %v2045
  %v2047 = vpop.f32.mrf.mxu0
  %v2048 = vpop.f32.mrf.mxu0
  %v2049 = vpop.f32.mrf.mxu0
  %2050 = vdwg.mxu0
  %v2052 = vrot.slane %v2046, 4
  %v2054 = vadd.f32 %v1449, %v2052
  %v2055 = vmul.f32 %v2054, 0.5
  %v2056 = vtanh.pop %v2055
  %v2057 = vmul.f32 %v2056, 0.5
  %v2058 = vadd.f32 %v2057, 0.5
  %v2059 = vtanh.pop %v2054
  %v2061 = vrot.slane %v1996, 6
  %v2063 = vmul.f32 %v2058, %v2061
  %2065 = vrot.lane.b32.xlu0 %v2059, 64
  %v2066 = vpop.permute.xlu0 %2065
  %v2068 = vmul.f32 %v2058, %v2066
  %2070 = vrot.lane.b32.xlu0 %v2068, 32
  %v2071 = vpop.permute.xlu0 %2070
  %v2073 = vadd.f32 %v2063, %v2071
  %v2074 = vtanh.pop %v2073
  %2076 = vrot.lane.b32.xlu0 %v2074, 64
  %v2077 = vpop.permute.xlu0 %2076
  %v2079 = vmul.f32 %v2058, %v2077
  %v2080 = vpack.c.bf16 %v2079, %v2079
  %v2082 = vrot.slane %v2080, 2
  %2083 = vrot.lane.b32.xlu0 %v2082, 32
  %v2084 = vpop.permute.xlu0 %2083
  %v2086 = vsel %vm1556, %v2084, 0
  %2088 = vmatprep.subr.bf16.mxu0 0
  %2089 = vmatpush1.bf16.msra.mxu0 0
  %2090 = vmatprep.subr.bf16.mxu0 0
  %2091 = vmatpush1.bf16.msra.mxu0 0
  %2092 = vmatprep.subr.bf16.mxu0 0
  %2093 = vmatpush1.bf16.msra.mxu0 0
  %2094 = vmatprep.subr.bf16.mxu0 0
  %2095 = vmatpush1.bf16.msra.mxu0 0
  %2096 = vmatprep.subr.bf16.mxu0 0
  %2097 = vmatpush1.bf16.msra.mxu0 0
  %2098 = vmatprep.subr.bf16.mxu0 0
  %2099 = vmatpush1.bf16.msra.mxu0 0
  %2100 = vmatprep.subr.bf16.mxu0 0
  %2101 = vmatpush1.bf16.msra.mxu0 %v1545
  %2102 = vmatprep.subr.bf16.mxu0 0
  %2103 = vmatpush1.bf16.msra.mxu0 %v1544
  %2104 = vmatprep.subr.bf16.mxu0 0
  %2105 = vmatpush2.bf16.msra.mxu0 0
  %2106 = vmatprep.subr.bf16.mxu0 0
  %2107 = vmatpush2.bf16.msra.mxu0 0
  %2108 = vmatprep.subr.bf16.mxu0 0
  %2109 = vmatpush2.bf16.msra.mxu0 0
  %2110 = vmatprep.subr.bf16.mxu0 0
  %2111 = vmatpush2.bf16.msra.mxu0 0
  %2112 = vmatprep.subr.bf16.mxu0 0
  %2113 = vmatpush2.bf16.msra.mxu0 0
  %2114 = vmatprep.subr.bf16.mxu0 0
  %2115 = vmatpush2.bf16.msra.mxu0 0
  %2116 = vmatprep.subr.bf16.mxu0 0
  %2117 = vmatpush2.bf16.msra.mxu0 0
  %2118 = vmatprep.subr.bf16.mxu0 0
  %2119 = vmatpush2.bf16.msra.mxu0 0
  %2120 = vmatprep.mubr.bf16.mxu0 0
  %2121 = vmatmul.mubr.bf16.gmra.mxu0 %v2086
  %v2122 = vpop.f32.mrf.mxu0
  %v2123 = vadd.f32 0.0, %v2122
  %v2124 = vpop.f32.mrf.mxu0
  %v2125 = vpop.f32.mrf.mxu0
  %v2126 = vpop.f32.mrf.mxu0
  %2127 = vdwg.mxu0
  %v2129 = vrot.slane %v2123, 2
  %v2131 = vadd.f32 %v1449, %v2129
  %v2132 = vmul.f32 %v2131, 0.5
  %v2133 = vtanh.pop %v2132
  %v2134 = vmul.f32 %v2133, 0.5
  %v2135 = vadd.f32 %v2134, 0.5
  %v2136 = vtanh.pop %v2131
  %v2138 = vrot.slane %v2073, 6
  %v2140 = vmul.f32 %v2135, %v2138
  %2142 = vrot.lane.b32.xlu0 %v2136, 64
  %v2143 = vpop.permute.xlu0 %2142
  %v2145 = vmul.f32 %v2135, %v2143
  %2147 = vrot.lane.b32.xlu0 %v2145, 32
  %v2148 = vpop.permute.xlu0 %2147
  %v2150 = vadd.f32 %v2140, %v2148
  %v2151 = vtanh.pop %v2150
  %2153 = vrot.lane.b32.xlu0 %v2151, 64
  %v2154 = vpop.permute.xlu0 %2153
  %v2156 = vmul.f32 %v2135, %v2154
  %v2157 = vpack.c.bf16 %v2156, %v2156
  %v2159 = vrot.slane %v2157, 3
  %2160 = vrot.lane.b32.xlu0 %v2159, 32
  %v2161 = vpop.permute.xlu0 %2160
  %v2163 = vsel %vm1556, %v2161, 0
  %2165 = vmatprep.subr.bf16.mxu0 0
  %2166 = vmatpush1.bf16.msra.mxu0 0
  %2167 = vmatprep.subr.bf16.mxu0 0
  %2168 = vmatpush1.bf16.msra.mxu0 0
  %2169 = vmatprep.subr.bf16.mxu0 0
  %2170 = vmatpush1.bf16.msra.mxu0 0
  %2171 = vmatprep.subr.bf16.mxu0 0
  %2172 = vmatpush1.bf16.msra.mxu0 0
  %2173 = vmatprep.subr.bf16.mxu0 0
  %2174 = vmatpush1.bf16.msra.mxu0 0
  %2175 = vmatprep.subr.bf16.mxu0 0
  %2176 = vmatpush1.bf16.msra.mxu0 0
  %2177 = vmatprep.subr.bf16.mxu0 0
  %2178 = vmatpush1.bf16.msra.mxu0 %v1551
  %2179 = vmatprep.subr.bf16.mxu0 0
  %2180 = vmatpush1.bf16.msra.mxu0 %v1550
  %2181 = vmatprep.subr.bf16.mxu0 0
  %2182 = vmatpush2.bf16.msra.mxu0 0
  %2183 = vmatprep.subr.bf16.mxu0 0
  %2184 = vmatpush2.bf16.msra.mxu0 0
  %2185 = vmatprep.subr.bf16.mxu0 0
  %2186 = vmatpush2.bf16.msra.mxu0 0
  %2187 = vmatprep.subr.bf16.mxu0 0
  %2188 = vmatpush2.bf16.msra.mxu0 0
  %2189 = vmatprep.subr.bf16.mxu0 0
  %2190 = vmatpush2.bf16.msra.mxu0 0
  %2191 = vmatprep.subr.bf16.mxu0 0
  %2192 = vmatpush2.bf16.msra.mxu0 0
  %2193 = vmatprep.subr.bf16.mxu0 0
  %2194 = vmatpush2.bf16.msra.mxu0 0
  %2195 = vmatprep.subr.bf16.mxu0 0
  %2196 = vmatpush2.bf16.msra.mxu0 0
  %2197 = vmatprep.mubr.bf16.mxu0 0
  %2198 = vmatmul.mubr.bf16.gmra.mxu0 %v2163
  %v2199 = vpop.f32.mrf.mxu0
  %v2200 = vadd.f32 0.0, %v2199
  %v2201 = vpop.f32.mrf.mxu0
  %v2202 = vpop.f32.mrf.mxu0
  %v2203 = vpop.f32.mrf.mxu0
  %2204 = vdwg.mxu0
  %v2205 = vadd.f32 %v1532, %v2200
  %v2206 = vmul.f32 %v2205, 0.5
  %v2207 = vtanh.pop %v2206
  %v2208 = vmul.f32 %v2207, 0.5
  %v2209 = vadd.f32 %v2208, 0.5
  %v2210 = vtanh.pop %v2205
  %v2212 = vrot.slane %v2150, 6
  %v2214 = vmul.f32 %v2209, %v2212
  %2216 = vrot.lane.b32.xlu0 %v2210, 64
  %v2217 = vpop.permute.xlu0 %2216
  %v2219 = vmul.f32 %v2209, %v2217
  %2221 = vrot.lane.b32.xlu0 %v2219, 32
  %v2222 = vpop.permute.xlu0 %2221
  %v2224 = vadd.f32 %v2214, %v2222
  %v2225 = vtanh.pop %v2224
  %2227 = vrot.lane.b32.xlu0 %v2225, 64
  %v2228 = vpop.permute.xlu0 %2227
  %v2230 = vmul.f32 %v2209, %v2228
  %v2231 = vlaneseq
  %v2232 = vshrl.u32 %v2231, 7
  %v2233 = vsub.s32 0, %v2232
  %v2234 = vrot.slane %v26, %v2233
  %2236 = vrot.lane.b32.xlu0 %v2230, 32
  %v2237 = vpop.permute.xlu0 %2236
  %v2238 = vsel %vm1556, %v2237, 0
  %2240 = vmatprep.subr.mxu0 0.0
  %2241 = vmatpush1.msra.mxu0 0.0
  %2242 = vmatprep.subr.mxu0 0.0
  %2243 = vmatpush1.msra.mxu0 0.0
  %2244 = vmatprep.subr.mxu0 0.0
  %2245 = vmatpush1.msra.mxu0 0.0
  %2246 = vmatprep.subr.mxu0 0.0
  %2247 = vmatpush1.msra.mxu0 0.0
  %2248 = vmatprep.subr.mxu0 0.0
  %2249 = vmatpush1.msra.mxu0 0.0
  %2250 = vmatprep.subr.mxu0 0.0
  %2251 = vmatpush1.msra.mxu0 0.0
  %2252 = vmatprep.subr.mxu0 0.0
  %2253 = vmatpush1.msra.mxu0 0.0
  %2254 = vmatprep.subr.mxu0 0.0
  %2255 = vmatpush1.msra.mxu0 0.0
  %2256 = vmatprep.subr.mxu0 0.0
  %2257 = vmatpush1.msra.mxu0 0.0
  %2258 = vmatprep.subr.mxu0 0.0
  %2259 = vmatpush1.msra.mxu0 0.0
  %2260 = vmatprep.subr.mxu0 0.0
  %2261 = vmatpush1.msra.mxu0 0.0
  %2262 = vmatprep.subr.mxu0 0.0
  %2263 = vmatpush1.msra.mxu0 0.0
  %2264 = vmatprep.subr.mxu0 0.0
  %2265 = vmatpush1.msra.mxu0 %v1555
  %2266 = vmatprep.subr.mxu0 0.0
  %2267 = vmatpush1.msra.mxu0 %v1554
  %2268 = vmatprep.subr.mxu0 0.0
  %2269 = vmatpush1.msra.mxu0 %v1553
  %2270 = vmatprep.subr.mxu0 0.0
  %2271 = vmatpush1.msra.mxu0 %v1552
  %2272 = vmatprep.subr.mxu0 0.0
  %2273 = vmatpush2.msra.mxu0 0.0
  %2274 = vmatprep.subr.mxu0 0.0
  %2275 = vmatpush2.msra.mxu0 0.0
  %2276 = vmatprep.subr.mxu0 0.0
  %2277 = vmatpush2.msra.mxu0 0.0
  %2278 = vmatprep.subr.mxu0 0.0
  %2279 = vmatpush2.msra.mxu0 0.0
  %2280 = vmatprep.subr.mxu0 0.0
  %2281 = vmatpush2.msra.mxu0 0.0
  %2282 = vmatprep.subr.mxu0 0.0
  %2283 = vmatpush2.msra.mxu0 0.0
  %2284 = vmatprep.subr.mxu0 0.0
  %2285 = vmatpush2.msra.mxu0 0.0
  %2286 = vmatprep.subr.mxu0 0.0
  %2287 = vmatpush2.msra.mxu0 0.0
  %2288 = vmatprep.subr.mxu0 0.0
  %2289 = vmatpush2.msra.mxu0 0.0
  %2290 = vmatprep.subr.mxu0 0.0
  %2291 = vmatpush2.msra.mxu0 0.0
  %2292 = vmatprep.subr.mxu0 0.0
  %2293 = vmatpush2.msra.mxu0 0.0
  %2294 = vmatprep.subr.mxu0 0.0
  %2295 = vmatpush2.msra.mxu0 0.0
  %2296 = vmatprep.subr.mxu0 0.0
  %2297 = vmatpush2.msra.mxu0 0.0
  %2298 = vmatprep.subr.mxu0 0.0
  %2299 = vmatpush2.msra.mxu0 0.0
  %2300 = vmatprep.subr.mxu0 0.0
  %2301 = vmatpush2.msra.mxu0 0.0
  %2302 = vmatprep.subr.mxu0 0.0
  %2303 = vmatpush2.msra.mxu0 0.0
  %2304 = vmatprep.mubr.f32.mxu0 0.0
  %2305 = vmatmul.mubr.f32.gmra.mxu0 %v2238
  %v2306 = vpop.f32.mrf.mxu0
  %v2307 = vadd.f32 %v2234, %v2306
  %v2308 = vpop.f32.mrf.mxu0
  %2309 = vdwg.mxu0
  %2310 = vst [vmem:[%s5] sm:$0x3] %v2307
  %v2311 = vpack.c.bf16 %v2230, %v2230
  %2313 = vrot.lane.b32.xlu0 %v2311, 32
  %v2314 = vpop.permute.xlu0 %2313
  %v2316 = vsel %vm1556, %v2314, 0
  %2318 = vmatprep.subr.bf16.mxu0 0
  %2319 = vmatpush1.bf16.msra.mxu0 0
  %2320 = vmatprep.subr.bf16.mxu0 0
  %2321 = vmatpush1.bf16.msra.mxu0 0
  %2322 = vmatprep.subr.bf16.mxu0 0
  %2323 = vmatpush1.bf16.msra.mxu0 0
  %2324 = vmatprep.subr.bf16.mxu0 0
  %2325 = vmatpush1.bf16.msra.mxu0 0
  %2326 = vmatprep.subr.bf16.mxu0 0
  %2327 = vmatpush1.bf16.msra.mxu0 0
  %2328 = vmatprep.subr.bf16.mxu0 0
  %2329 = vmatpush1.bf16.msra.mxu0 0
  %2330 = vmatprep.subr.bf16.mxu0 0
  %2331 = vmatpush1.bf16.msra.mxu0 %v1551
  %2332 = vmatprep.subr.bf16.mxu0 0
  %2333 = vmatpush1.bf16.msra.mxu0 %v1550
  %2334 = vmatprep.subr.bf16.mxu0 0
  %2335 = vmatpush2.bf16.msra.mxu0 0
  %2336 = vmatprep.subr.bf16.mxu0 0
  %2337 = vmatpush2.bf16.msra.mxu0 0
  %2338 = vmatprep.subr.bf16.mxu0 0
  %2339 = vmatpush2.bf16.msra.mxu0 0
  %2340 = vmatprep.subr.bf16.mxu0 0
  %2341 = vmatpush2.bf16.msra.mxu0 0
  %2342 = vmatprep.subr.bf16.mxu0 0
  %2343 = vmatpush2.bf16.msra.mxu0 0
  %2344 = vmatprep.subr.bf16.mxu0 0
  %2345 = vmatpush2.bf16.msra.mxu0 0
  %2346 = vmatprep.subr.bf16.mxu0 0
  %2347 = vmatpush2.bf16.msra.mxu0 0
  %2348 = vmatprep.subr.bf16.mxu0 0
  %2349 = vmatpush2.bf16.msra.mxu0 0
  %2350 = vmatprep.mubr.bf16.mxu0 0
  %2351 = vmatmul.mubr.bf16.gmra.mxu0 %v2316
  %v2352 = vpop.f32.mrf.mxu0
  %v2353 = vadd.f32 0.0, %v2352
  %v2354 = vpop.f32.mrf.mxu0
  %v2355 = vpop.f32.mrf.mxu0
  %v2356 = vpop.f32.mrf.mxu0
  %2357 = vdwg.mxu0
  %v2359 = vrot.slane %v2353, 6
  %v2361 = vadd.f32 %v1532, %v2359
  %v2362 = vmul.f32 %v2361, 0.5
  %v2363 = vtanh.pop %v2362
  %v2364 = vmul.f32 %v2363, 0.5
  %v2365 = vadd.f32 %v2364, 0.5
  %v2366 = vtanh.pop %v2361
  %v2368 = vrot.slane %v2224, 6
  %v2370 = vmul.f32 %v2365, %v2368
  %2372 = vrot.lane.b32.xlu0 %v2366, 64
  %v2373 = vpop.permute.xlu0 %2372
  %v2375 = vmul.f32 %v2365, %v2373
  %2377 = vrot.lane.b32.xlu0 %v2375, 32
  %v2378 = vpop.permute.xlu0 %2377
  %v2380 = vadd.f32 %v2370, %v2378
  %v2381 = vtanh.pop %v2380
  %2383 = vrot.lane.b32.xlu0 %v2381, 64
  %v2384 = vpop.permute.xlu0 %2383
  %v2386 = vmul.f32 %v2365, %v2384
  %v2388 = vrot.slane %v2386, 2
  %2389 = vrot.lane.b32.xlu0 %v2388, 32
  %v2390 = vpop.permute.xlu0 %2389
  %v2391 = vsel %vm1556, %v2390, 0
  %2393 = vmatprep.subr.mxu0 0.0
  %2394 = vmatpush1.msra.mxu0 0.0
  %2395 = vmatprep.subr.mxu0 0.0
  %2396 = vmatpush1.msra.mxu0 0.0
  %2397 = vmatprep.subr.mxu0 0.0
  %2398 = vmatpush1.msra.mxu0 0.0
  %2399 = vmatprep.subr.mxu0 0.0
  %2400 = vmatpush1.msra.mxu0 0.0
  %2401 = vmatprep.subr.mxu0 0.0
  %2402 = vmatpush1.msra.mxu0 0.0
  %2403 = vmatprep.subr.mxu0 0.0
  %2404 = vmatpush1.msra.mxu0 0.0
  %2405 = vmatprep.subr.mxu0 0.0
  %2406 = vmatpush1.msra.mxu0 0.0
  %2407 = vmatprep.subr.mxu0 0.0
  %2408 = vmatpush1.msra.mxu0 0.0
  %2409 = vmatprep.subr.mxu0 0.0
  %2410 = vmatpush1.msra.mxu0 0.0
  %2411 = vmatprep.subr.mxu0 0.0
  %2412 = vmatpush1.msra.mxu0 0.0
  %2413 = vmatprep.subr.mxu0 0.0
  %2414 = vmatpush1.msra.mxu0 0.0
  %2415 = vmatprep.subr.mxu0 0.0
  %2416 = vmatpush1.msra.mxu0 0.0
  %2417 = vmatprep.subr.mxu0 0.0
  %2418 = vmatpush1.msra.mxu0 %v1555
  %2419 = vmatprep.subr.mxu0 0.0
  %2420 = vmatpush1.msra.mxu0 %v1554
  %2421 = vmatprep.subr.mxu0 0.0
  %2422 = vmatpush1.msra.mxu0 %v1553
  %2423 = vmatprep.subr.mxu0 0.0
  %2424 = vmatpush1.msra.mxu0 %v1552
  %2425 = vmatprep.subr.mxu0 0.0
  %2426 = vmatpush2.msra.mxu0 0.0
  %2427 = vmatprep.subr.mxu0 0.0
  %2428 = vmatpush2.msra.mxu0 0.0
  %2429 = vmatprep.subr.mxu0 0.0
  %2430 = vmatpush2.msra.mxu0 0.0
  %2431 = vmatprep.subr.mxu0 0.0
  %2432 = vmatpush2.msra.mxu0 0.0
  %2433 = vmatprep.subr.mxu0 0.0
  %2434 = vmatpush2.msra.mxu0 0.0
  %2435 = vmatprep.subr.mxu0 0.0
  %2436 = vmatpush2.msra.mxu0 0.0
  %2437 = vmatprep.subr.mxu0 0.0
  %2438 = vmatpush2.msra.mxu0 0.0
  %2439 = vmatprep.subr.mxu0 0.0
  %2440 = vmatpush2.msra.mxu0 0.0
  %2441 = vmatprep.subr.mxu0 0.0
  %2442 = vmatpush2.msra.mxu0 0.0
  %2443 = vmatprep.subr.mxu0 0.0
  %2444 = vmatpush2.msra.mxu0 0.0
  %2445 = vmatprep.subr.mxu0 0.0
  %2446 = vmatpush2.msra.mxu0 0.0
  %2447 = vmatprep.subr.mxu0 0.0
  %2448 = vmatpush2.msra.mxu0 0.0
  %2449 = vmatprep.subr.mxu0 0.0
  %2450 = vmatpush2.msra.mxu0 0.0
  %2451 = vmatprep.subr.mxu0 0.0
  %2452 = vmatpush2.msra.mxu0 0.0
  %2453 = vmatprep.subr.mxu0 0.0
  %2454 = vmatpush2.msra.mxu0 0.0
  %2455 = vmatprep.subr.mxu0 0.0
  %2456 = vmatpush2.msra.mxu0 0.0
  %2457 = vmatprep.mubr.f32.mxu0 0.0
  %2458 = vmatmul.mubr.f32.gmra.mxu0 %v2391
  %v2459 = vpop.f32.mrf.mxu0
  %v2460 = vadd.f32 %v2234, %v2459
  %v2461 = vpop.f32.mrf.mxu0
  %2462 = vdwg.mxu0
  %2463 = vst [vmem:[%s5 + $0x2] sm:$0x3] %v2460
  %v2464 = vpack.c.bf16 %v2386, %v2386
  %v2466 = vrot.slane %v2464, 1
  %2467 = vrot.lane.b32.xlu0 %v2466, 32
  %v2468 = vpop.permute.xlu0 %2467
  %v2470 = vsel %vm1556, %v2468, 0
  %2472 = vmatprep.subr.bf16.mxu0 0
  %2473 = vmatpush1.bf16.msra.mxu0 0
  %2474 = vmatprep.subr.bf16.mxu0 0
  %2475 = vmatpush1.bf16.msra.mxu0 0
  %2476 = vmatprep.subr.bf16.mxu0 0
  %2477 = vmatpush1.bf16.msra.mxu0 0
  %2478 = vmatprep.subr.bf16.mxu0 0
  %2479 = vmatpush1.bf16.msra.mxu0 0
  %2480 = vmatprep.subr.bf16.mxu0 0
  %2481 = vmatpush1.bf16.msra.mxu0 0
  %2482 = vmatprep.subr.bf16.mxu0 0
  %2483 = vmatpush1.bf16.msra.mxu0 0
  %2484 = vmatprep.subr.bf16.mxu0 0
  %2485 = vmatpush1.bf16.msra.mxu0 %v1551
  %2486 = vmatprep.subr.bf16.mxu0 0
  %2487 = vmatpush1.bf16.msra.mxu0 %v1550
  %2488 = vmatprep.subr.bf16.mxu0 0
  %2489 = vmatpush2.bf16.msra.mxu0 0
  %2490 = vmatprep.subr.bf16.mxu0 0
  %2491 = vmatpush2.bf16.msra.mxu0 0
  %2492 = vmatprep.subr.bf16.mxu0 0
  %2493 = vmatpush2.bf16.msra.mxu0 0
  %2494 = vmatprep.subr.bf16.mxu0 0
  %2495 = vmatpush2.bf16.msra.mxu0 0
  %2496 = vmatprep.subr.bf16.mxu0 0
  %2497 = vmatpush2.bf16.msra.mxu0 0
  %2498 = vmatprep.subr.bf16.mxu0 0
  %2499 = vmatpush2.bf16.msra.mxu0 0
  %2500 = vmatprep.subr.bf16.mxu0 0
  %2501 = vmatpush2.bf16.msra.mxu0 0
  %2502 = vmatprep.subr.bf16.mxu0 0
  %2503 = vmatpush2.bf16.msra.mxu0 0
  %2504 = vmatprep.mubr.bf16.mxu0 0
  %2505 = vmatmul.mubr.bf16.gmra.mxu0 %v2470
  %v2506 = vpop.f32.mrf.mxu0
  %v2507 = vadd.f32 0.0, %v2506
  %v2508 = vpop.f32.mrf.mxu0
  %v2509 = vpop.f32.mrf.mxu0
  %v2510 = vpop.f32.mrf.mxu0
  %2511 = vdwg.mxu0
  %v2513 = vrot.slane %v2507, 4
  %v2515 = vadd.f32 %v1532, %v2513
  %v2516 = vmul.f32 %v2515, 0.5
  %v2517 = vtanh.pop %v2516
  %v2518 = vmul.f32 %v2517, 0.5
  %v2519 = vadd.f32 %v2518, 0.5
  %v2520 = vtanh.pop %v2515
  %v2522 = vrot.slane %v2380, 6
  %v2524 = vmul.f32 %v2519, %v2522
  %2526 = vrot.lane.b32.xlu0 %v2520, 64
  %v2527 = vpop.permute.xlu0 %2526
  %v2529 = vmul.f32 %v2519, %v2527
  %2531 = vrot.lane.b32.xlu0 %v2529, 32
  %v2532 = vpop.permute.xlu0 %2531
  %v2534 = vadd.f32 %v2524, %v2532
  %v2535 = vtanh.pop %v2534
  %2537 = vrot.lane.b32.xlu0 %v2535, 64
  %v2538 = vpop.permute.xlu0 %2537
  %v2540 = vmul.f32 %v2519, %v2538
  %v2542 = vrot.slane %v2540, 4
  %2543 = vrot.lane.b32.xlu0 %v2542, 32
  %v2544 = vpop.permute.xlu0 %2543
  %v2545 = vsel %vm1556, %v2544, 0
  %2547 = vmatprep.subr.mxu0 0.0
  %2548 = vmatpush1.msra.mxu0 0.0
  %2549 = vmatprep.subr.mxu0 0.0
  %2550 = vmatpush1.msra.mxu0 0.0
  %2551 = vmatprep.subr.mxu0 0.0
  %2552 = vmatpush1.msra.mxu0 0.0
  %2553 = vmatprep.subr.mxu0 0.0
  %2554 = vmatpush1.msra.mxu0 0.0
  %2555 = vmatprep.subr.mxu0 0.0
  %2556 = vmatpush1.msra.mxu0 0.0
  %2557 = vmatprep.subr.mxu0 0.0
  %2558 = vmatpush1.msra.mxu0 0.0
  %2559 = vmatprep.subr.mxu0 0.0
  %2560 = vmatpush1.msra.mxu0 0.0
  %2561 = vmatprep.subr.mxu0 0.0
  %2562 = vmatpush1.msra.mxu0 0.0
  %2563 = vmatprep.subr.mxu0 0.0
  %2564 = vmatpush1.msra.mxu0 0.0
  %2565 = vmatprep.subr.mxu0 0.0
  %2566 = vmatpush1.msra.mxu0 0.0
  %2567 = vmatprep.subr.mxu0 0.0
  %2568 = vmatpush1.msra.mxu0 0.0
  %2569 = vmatprep.subr.mxu0 0.0
  %2570 = vmatpush1.msra.mxu0 0.0
  %2571 = vmatprep.subr.mxu0 0.0
  %2572 = vmatpush1.msra.mxu0 %v1555
  %2573 = vmatprep.subr.mxu0 0.0
  %2574 = vmatpush1.msra.mxu0 %v1554
  %2575 = vmatprep.subr.mxu0 0.0
  %2576 = vmatpush1.msra.mxu0 %v1553
  %2577 = vmatprep.subr.mxu0 0.0
  %2578 = vmatpush1.msra.mxu0 %v1552
  %2579 = vmatprep.subr.mxu0 0.0
  %2580 = vmatpush2.msra.mxu0 0.0
  %2581 = vmatprep.subr.mxu0 0.0
  %2582 = vmatpush2.msra.mxu0 0.0
  %2583 = vmatprep.subr.mxu0 0.0
  %2584 = vmatpush2.msra.mxu0 0.0
  %2585 = vmatprep.subr.mxu0 0.0
  %2586 = vmatpush2.msra.mxu0 0.0
  %2587 = vmatprep.subr.mxu0 0.0
  %2588 = vmatpush2.msra.mxu0 0.0
  %2589 = vmatprep.subr.mxu0 0.0
  %2590 = vmatpush2.msra.mxu0 0.0
  %2591 = vmatprep.subr.mxu0 0.0
  %2592 = vmatpush2.msra.mxu0 0.0
  %2593 = vmatprep.subr.mxu0 0.0
  %2594 = vmatpush2.msra.mxu0 0.0
  %2595 = vmatprep.subr.mxu0 0.0
  %2596 = vmatpush2.msra.mxu0 0.0
  %2597 = vmatprep.subr.mxu0 0.0
  %2598 = vmatpush2.msra.mxu0 0.0
  %2599 = vmatprep.subr.mxu0 0.0
  %2600 = vmatpush2.msra.mxu0 0.0
  %2601 = vmatprep.subr.mxu0 0.0
  %2602 = vmatpush2.msra.mxu0 0.0
  %2603 = vmatprep.subr.mxu0 0.0
  %2604 = vmatpush2.msra.mxu0 0.0
  %2605 = vmatprep.subr.mxu0 0.0
  %2606 = vmatpush2.msra.mxu0 0.0
  %2607 = vmatprep.subr.mxu0 0.0
  %2608 = vmatpush2.msra.mxu0 0.0
  %2609 = vmatprep.subr.mxu0 0.0
  %2610 = vmatpush2.msra.mxu0 0.0
  %2611 = vmatprep.mubr.f32.mxu0 0.0
  %2612 = vmatmul.mubr.f32.gmra.mxu0 %v2545
  %v2613 = vpop.f32.mrf.mxu0
  %v2614 = vadd.f32 %v2234, %v2613
  %v2615 = vpop.f32.mrf.mxu0
  %2616 = vdwg.mxu0
  %2617 = vst [vmem:[%s5 + $0x4] sm:$0x3] %v2614
  %v2618 = vpack.c.bf16 %v2540, %v2540
  %v2620 = vrot.slane %v2618, 2
  %2621 = vrot.lane.b32.xlu0 %v2620, 32
  %v2622 = vpop.permute.xlu0 %2621
  %v2624 = vsel %vm1556, %v2622, 0
  %2626 = vmatprep.subr.bf16.mxu0 0
  %2627 = vmatpush1.bf16.msra.mxu0 0
  %2628 = vmatprep.subr.bf16.mxu0 0
  %2629 = vmatpush1.bf16.msra.mxu0 0
  %2630 = vmatprep.subr.bf16.mxu0 0
  %2631 = vmatpush1.bf16.msra.mxu0 0
  %2632 = vmatprep.subr.bf16.mxu0 0
  %2633 = vmatpush1.bf16.msra.mxu0 0
  %2634 = vmatprep.subr.bf16.mxu0 0
  %2635 = vmatpush1.bf16.msra.mxu0 0
  %2636 = vmatprep.subr.bf16.mxu0 0
  %2637 = vmatpush1.bf16.msra.mxu0 0
  %2638 = vmatprep.subr.bf16.mxu0 0
  %2639 = vmatpush1.bf16.msra.mxu0 %v1551
  %2640 = vmatprep.subr.bf16.mxu0 0
  %2641 = vmatpush1.bf16.msra.mxu0 %v1550
  %2642 = vmatprep.subr.bf16.mxu0 0
  %2643 = vmatpush2.bf16.msra.mxu0 0
  %2644 = vmatprep.subr.bf16.mxu0 0
  %2645 = vmatpush2.bf16.msra.mxu0 0
  %2646 = vmatprep.subr.bf16.mxu0 0
  %2647 = vmatpush2.bf16.msra.mxu0 0
  %2648 = vmatprep.subr.bf16.mxu0 0
  %2649 = vmatpush2.bf16.msra.mxu0 0
  %2650 = vmatprep.subr.bf16.mxu0 0
  %2651 = vmatpush2.bf16.msra.mxu0 0
  %2652 = vmatprep.subr.bf16.mxu0 0
  %2653 = vmatpush2.bf16.msra.mxu0 0
  %2654 = vmatprep.subr.bf16.mxu0 0
  %2655 = vmatpush2.bf16.msra.mxu0 0
  %2656 = vmatprep.subr.bf16.mxu0 0
  %2657 = vmatpush2.bf16.msra.mxu0 0
  %2658 = vmatprep.mubr.bf16.mxu0 0
  %2659 = vmatmul.mubr.bf16.gmra.mxu0 %v2624
  %v2660 = vpop.f32.mrf.mxu0
  %v2661 = vadd.f32 0.0, %v2660
  %v2662 = vpop.f32.mrf.mxu0
  %v2663 = vpop.f32.mrf.mxu0
  %v2664 = vpop.f32.mrf.mxu0
  %2665 = vdwg.mxu0
  %v2667 = vrot.slane %v2661, 2
  %v2669 = vadd.f32 %v1532, %v2667
  %v2670 = vmul.f32 %v2669, 0.5
  %v2671 = vtanh.pop %v2670
  %v2672 = vmul.f32 %v2671, 0.5
  %v2673 = vadd.f32 %v2672, 0.5
  %v2674 = vtanh.pop %v2669
  %v2676 = vrot.slane %v2534, 6
  %v2678 = vmul.f32 %v2673, %v2676
  %2680 = vrot.lane.b32.xlu0 %v2674, 64
  %v2681 = vpop.permute.xlu0 %2680
  %v2683 = vmul.f32 %v2673, %v2681
  %2685 = vrot.lane.b32.xlu0 %v2683, 32
  %v2686 = vpop.permute.xlu0 %2685
  %v2688 = vadd.f32 %v2678, %v2686
  %v2689 = vtanh.pop %v2688
  %2691 = vrot.lane.b32.xlu0 %v2689, 64
  %v2692 = vpop.permute.xlu0 %2691
  %v2694 = vmul.f32 %v2673, %v2692
  %v2696 = vrot.slane %v2694, 6
  %2697 = vrot.lane.b32.xlu0 %v2696, 32
  %v2698 = vpop.permute.xlu0 %2697
  %v2699 = vsel %vm1556, %v2698, 0
  %2701 = vmatprep.subr.mxu0 0.0
  %2702 = vmatpush1.msra.mxu0 0.0
  %2703 = vmatprep.subr.mxu0 0.0
  %2704 = vmatpush1.msra.mxu0 0.0
  %2705 = vmatprep.subr.mxu0 0.0
  %2706 = vmatpush1.msra.mxu0 0.0
  %2707 = vmatprep.subr.mxu0 0.0
  %2708 = vmatpush1.msra.mxu0 0.0
  %2709 = vmatprep.subr.mxu0 0.0
  %2710 = vmatpush1.msra.mxu0 0.0
  %2711 = vmatprep.subr.mxu0 0.0
  %2712 = vmatpush1.msra.mxu0 0.0
  %2713 = vmatprep.subr.mxu0 0.0
  %2714 = vmatpush1.msra.mxu0 0.0
  %2715 = vmatprep.subr.mxu0 0.0
  %2716 = vmatpush1.msra.mxu0 0.0
  %2717 = vmatprep.subr.mxu0 0.0
  %2718 = vmatpush1.msra.mxu0 0.0
  %2719 = vmatprep.subr.mxu0 0.0
  %2720 = vmatpush1.msra.mxu0 0.0
  %2721 = vmatprep.subr.mxu0 0.0
  %2722 = vmatpush1.msra.mxu0 0.0
  %2723 = vmatprep.subr.mxu0 0.0
  %2724 = vmatpush1.msra.mxu0 0.0
  %2725 = vmatprep.subr.mxu0 0.0
  %2726 = vmatpush1.msra.mxu0 %v1555
  %2727 = vmatprep.subr.mxu0 0.0
  %2728 = vmatpush1.msra.mxu0 %v1554
  %2729 = vmatprep.subr.mxu0 0.0
  %2730 = vmatpush1.msra.mxu0 %v1553
  %2731 = vmatprep.subr.mxu0 0.0
  %2732 = vmatpush1.msra.mxu0 %v1552
  %2733 = vmatprep.subr.mxu0 0.0
  %2734 = vmatpush2.msra.mxu0 0.0
  %2735 = vmatprep.subr.mxu0 0.0
  %2736 = vmatpush2.msra.mxu0 0.0
  %2737 = vmatprep.subr.mxu0 0.0
  %2738 = vmatpush2.msra.mxu0 0.0
  %2739 = vmatprep.subr.mxu0 0.0
  %2740 = vmatpush2.msra.mxu0 0.0
  %2741 = vmatprep.subr.mxu0 0.0
  %2742 = vmatpush2.msra.mxu0 0.0
  %2743 = vmatprep.subr.mxu0 0.0
  %2744 = vmatpush2.msra.mxu0 0.0
  %2745 = vmatprep.subr.mxu0 0.0
  %2746 = vmatpush2.msra.mxu0 0.0
  %2747 = vmatprep.subr.mxu0 0.0
  %2748 = vmatpush2.msra.mxu0 0.0
  %2749 = vmatprep.subr.mxu0 0.0
  %2750 = vmatpush2.msra.mxu0 0.0
  %2751 = vmatprep.subr.mxu0 0.0
  %2752 = vmatpush2.msra.mxu0 0.0
  %2753 = vmatprep.subr.mxu0 0.0
  %2754 = vmatpush2.msra.mxu0 0.0
  %2755 = vmatprep.subr.mxu0 0.0
  %2756 = vmatpush2.msra.mxu0 0.0
  %2757 = vmatprep.subr.mxu0 0.0
  %2758 = vmatpush2.msra.mxu0 0.0
  %2759 = vmatprep.subr.mxu0 0.0
  %2760 = vmatpush2.msra.mxu0 0.0
  %2761 = vmatprep.subr.mxu0 0.0
  %2762 = vmatpush2.msra.mxu0 0.0
  %2763 = vmatprep.subr.mxu0 0.0
  %2764 = vmatpush2.msra.mxu0 0.0
  %2765 = vmatprep.mubr.f32.mxu0 0.0
  %2766 = vmatmul.mubr.f32.gmra.mxu0 %v2699
  %v2767 = vpop.f32.mrf.mxu0
  %v2768 = vadd.f32 %v2234, %v2767
  %v2769 = vpop.f32.mrf.mxu0
  %2770 = vdwg.mxu0
  %2771 = vst [vmem:[%s5 + $0x6] sm:$0x3] %v2768
  %v2772 = vpack.c.bf16 %v2694, %v2694
  %v2774 = vrot.slane %v2772, 3
  %2775 = vrot.lane.b32.xlu0 %v2774, 32
  %v2776 = vpop.permute.xlu0 %2775
  %v2778 = vsel %vm1556, %v2776, 0
  %2780 = vmatprep.subr.bf16.mxu0 0
  %2781 = vmatpush1.bf16.msra.mxu0 0
  %2782 = vmatprep.subr.bf16.mxu0 0
  %2783 = vmatpush1.bf16.msra.mxu0 0
  %2784 = vmatprep.subr.bf16.mxu0 0
  %2785 = vmatpush1.bf16.msra.mxu0 0
  %2786 = vmatprep.subr.bf16.mxu0 0
  %2787 = vmatpush1.bf16.msra.mxu0 0
  %2788 = vmatprep.subr.bf16.mxu0 0
  %2789 = vmatpush1.bf16.msra.mxu0 0
  %2790 = vmatprep.subr.bf16.mxu0 0
  %2791 = vmatpush1.bf16.msra.mxu0 0
  %2792 = vmatprep.subr.bf16.mxu0 0
  %2793 = vmatpush1.bf16.msra.mxu0 %v1551
  %2794 = vmatprep.subr.bf16.mxu0 0
  %2795 = vmatpush1.bf16.msra.mxu0 %v1550
  %2796 = vmatprep.subr.bf16.mxu0 0
  %2797 = vmatpush2.bf16.msra.mxu0 0
  %2798 = vmatprep.subr.bf16.mxu0 0
  %2799 = vmatpush2.bf16.msra.mxu0 0
  %2800 = vmatprep.subr.bf16.mxu0 0
  %2801 = vmatpush2.bf16.msra.mxu0 0
  %2802 = vmatprep.subr.bf16.mxu0 0
  %2803 = vmatpush2.bf16.msra.mxu0 0
  %2804 = vmatprep.subr.bf16.mxu0 0
  %2805 = vmatpush2.bf16.msra.mxu0 0
  %2806 = vmatprep.subr.bf16.mxu0 0
  %2807 = vmatpush2.bf16.msra.mxu0 0
  %2808 = vmatprep.subr.bf16.mxu0 0
  %2809 = vmatpush2.bf16.msra.mxu0 0
  %2810 = vmatprep.subr.bf16.mxu0 0
  %2811 = vmatpush2.bf16.msra.mxu0 0
  %2812 = vmatprep.mubr.bf16.mxu0 0
  %2813 = vmatmul.mubr.bf16.gmra.mxu0 %v2778
  %v2814 = vpop.f32.mrf.mxu0
  %v2815 = vadd.f32 0.0, %v2814
  %v2816 = vpop.f32.mrf.mxu0
  %v2817 = vpop.f32.mrf.mxu0
  %v2818 = vpop.f32.mrf.mxu0
  %2819 = vdwg.mxu0
  %v2820 = vadd.f32 %v1537, %v2815
  %v2821 = vmul.f32 %v2820, 0.5
  %v2822 = vtanh.pop %v2821
  %v2823 = vmul.f32 %v2822, 0.5
  %v2824 = vadd.f32 %v2823, 0.5
  %v2825 = vtanh.pop %v2820
  %v2827 = vrot.slane %v2688, 6
  %v2829 = vmul.f32 %v2824, %v2827
  %2831 = vrot.lane.b32.xlu0 %v2825, 64
  %v2832 = vpop.permute.xlu0 %2831
  %v2834 = vmul.f32 %v2824, %v2832
  %2836 = vrot.lane.b32.xlu0 %v2834, 32
  %v2837 = vpop.permute.xlu0 %2836
  %v2839 = vadd.f32 %v2829, %v2837
  %v2840 = vtanh.pop %v2839
  %2842 = vrot.lane.b32.xlu0 %v2840, 64
  %v2843 = vpop.permute.xlu0 %2842
  %v2845 = vmul.f32 %v2824, %v2843
  %2847 = vrot.lane.b32.xlu0 %v2845, 32
  %v2848 = vpop.permute.xlu0 %2847
  %v2849 = vsel %vm1556, %v2848, 0
  %2851 = vmatprep.subr.mxu0 0.0
  %2852 = vmatpush1.msra.mxu0 0.0
  %2853 = vmatprep.subr.mxu0 0.0
  %2854 = vmatpush1.msra.mxu0 0.0
  %2855 = vmatprep.subr.mxu0 0.0
  %2856 = vmatpush1.msra.mxu0 0.0
  %2857 = vmatprep.subr.mxu0 0.0
  %2858 = vmatpush1.msra.mxu0 0.0
  %2859 = vmatprep.subr.mxu0 0.0
  %2860 = vmatpush1.msra.mxu0 0.0
  %2861 = vmatprep.subr.mxu0 0.0
  %2862 = vmatpush1.msra.mxu0 0.0
  %2863 = vmatprep.subr.mxu0 0.0
  %2864 = vmatpush1.msra.mxu0 0.0
  %2865 = vmatprep.subr.mxu0 0.0
  %2866 = vmatpush1.msra.mxu0 0.0
  %2867 = vmatprep.subr.mxu0 0.0
  %2868 = vmatpush1.msra.mxu0 0.0
  %2869 = vmatprep.subr.mxu0 0.0
  %2870 = vmatpush1.msra.mxu0 0.0
  %2871 = vmatprep.subr.mxu0 0.0
  %2872 = vmatpush1.msra.mxu0 0.0
  %2873 = vmatprep.subr.mxu0 0.0
  %2874 = vmatpush1.msra.mxu0 0.0
  %2875 = vmatprep.subr.mxu0 0.0
  %2876 = vmatpush1.msra.mxu0 %v1555
  %2877 = vmatprep.subr.mxu0 0.0
  %2878 = vmatpush1.msra.mxu0 %v1554
  %2879 = vmatprep.subr.mxu0 0.0
  %2880 = vmatpush1.msra.mxu0 %v1553
  %2881 = vmatprep.subr.mxu0 0.0
  %2882 = vmatpush1.msra.mxu0 %v1552
  %2883 = vmatprep.subr.mxu0 0.0
  %2884 = vmatpush2.msra.mxu0 0.0
  %2885 = vmatprep.subr.mxu0 0.0
  %2886 = vmatpush2.msra.mxu0 0.0
  %2887 = vmatprep.subr.mxu0 0.0
  %2888 = vmatpush2.msra.mxu0 0.0
  %2889 = vmatprep.subr.mxu0 0.0
  %2890 = vmatpush2.msra.mxu0 0.0
  %2891 = vmatprep.subr.mxu0 0.0
  %2892 = vmatpush2.msra.mxu0 0.0
  %2893 = vmatprep.subr.mxu0 0.0
  %2894 = vmatpush2.msra.mxu0 0.0
  %2895 = vmatprep.subr.mxu0 0.0
  %2896 = vmatpush2.msra.mxu0 0.0
  %2897 = vmatprep.subr.mxu0 0.0
  %2898 = vmatpush2.msra.mxu0 0.0
  %2899 = vmatprep.subr.mxu0 0.0
  %2900 = vmatpush2.msra.mxu0 0.0
  %2901 = vmatprep.subr.mxu0 0.0
  %2902 = vmatpush2.msra.mxu0 0.0
  %2903 = vmatprep.subr.mxu0 0.0
  %2904 = vmatpush2.msra.mxu0 0.0
  %2905 = vmatprep.subr.mxu0 0.0
  %2906 = vmatpush2.msra.mxu0 0.0
  %2907 = vmatprep.subr.mxu0 0.0
  %2908 = vmatpush2.msra.mxu0 0.0
  %2909 = vmatprep.subr.mxu0 0.0
  %2910 = vmatpush2.msra.mxu0 0.0
  %2911 = vmatprep.subr.mxu0 0.0
  %2912 = vmatpush2.msra.mxu0 0.0
  %2913 = vmatprep.subr.mxu0 0.0
  %2914 = vmatpush2.msra.mxu0 0.0
  %2915 = vmatprep.mubr.f32.mxu0 0.0
  %2916 = vmatmul.mubr.f32.gmra.mxu0 %v2849
  %v2917 = vpop.f32.mrf.mxu0
  %v2918 = vadd.f32 %v2234, %v2917
  %v2919 = vpop.f32.mrf.mxu0
  %2920 = vdwg.mxu0
  %2921 = vst [vmem:[%s5 + $0x8] sm:$0x3] %v2918
  %v2922 = vpack.c.bf16 %v2845, %v2845
  %2924 = vrot.lane.b32.xlu0 %v2922, 32
  %v2925 = vpop.permute.xlu0 %2924
  %v2927 = vsel %vm1556, %v2925, 0
  %2929 = vmatprep.subr.bf16.mxu0 0
  %2930 = vmatpush1.bf16.msra.mxu0 0
  %2931 = vmatprep.subr.bf16.mxu0 0
  %2932 = vmatpush1.bf16.msra.mxu0 0
  %2933 = vmatprep.subr.bf16.mxu0 0
  %2934 = vmatpush1.bf16.msra.mxu0 0
  %2935 = vmatprep.subr.bf16.mxu0 0
  %2936 = vmatpush1.bf16.msra.mxu0 0
  %2937 = vmatprep.subr.bf16.mxu0 0
  %2938 = vmatpush1.bf16.msra.mxu0 0
  %2939 = vmatprep.subr.bf16.mxu0 0
  %2940 = vmatpush1.bf16.msra.mxu0 0
  %2941 = vmatprep.subr.bf16.mxu0 0
  %2942 = vmatpush1.bf16.msra.mxu0 %v1551
  %2943 = vmatprep.subr.bf16.mxu0 0
  %2944 = vmatpush1.bf16.msra.mxu0 %v1550
  %2945 = vmatprep.subr.bf16.mxu0 0
  %2946 = vmatpush2.bf16.msra.mxu0 0
  %2947 = vmatprep.subr.bf16.mxu0 0
  %2948 = vmatpush2.bf16.msra.mxu0 0
  %2949 = vmatprep.subr.bf16.mxu0 0
  %2950 = vmatpush2.bf16.msra.mxu0 0
  %2951 = vmatprep.subr.bf16.mxu0 0
  %2952 = vmatpush2.bf16.msra.mxu0 0
  %2953 = vmatprep.subr.bf16.mxu0 0
  %2954 = vmatpush2.bf16.msra.mxu0 0
  %2955 = vmatprep.subr.bf16.mxu0 0
  %2956 = vmatpush2.bf16.msra.mxu0 0
  %2957 = vmatprep.subr.bf16.mxu0 0
  %2958 = vmatpush2.bf16.msra.mxu0 0
  %2959 = vmatprep.subr.bf16.mxu0 0
  %2960 = vmatpush2.bf16.msra.mxu0 0
  %2961 = vmatprep.mubr.bf16.mxu0 0
  %2962 = vmatmul.mubr.bf16.gmra.mxu0 %v2927
  %v2963 = vpop.f32.mrf.mxu0
  %v2964 = vadd.f32 0.0, %v2963
  %v2965 = vpop.f32.mrf.mxu0
  %v2966 = vpop.f32.mrf.mxu0
  %v2967 = vpop.f32.mrf.mxu0
  %2968 = vdwg.mxu0
  %v2970 = vrot.slane %v2964, 6
  %v2972 = vadd.f32 %v1537, %v2970
  %v2973 = vmul.f32 %v2972, 0.5
  %v2974 = vtanh.pop %v2973
  %v2975 = vmul.f32 %v2974, 0.5
  %v2976 = vadd.f32 %v2975, 0.5
  %v2977 = vtanh.pop %v2972
  %v2979 = vrot.slane %v2839, 6
  %v2981 = vmul.f32 %v2976, %v2979
  %2983 = vrot.lane.b32.xlu0 %v2977, 64
  %v2984 = vpop.permute.xlu0 %2983
  %v2986 = vmul.f32 %v2976, %v2984
  %2988 = vrot.lane.b32.xlu0 %v2986, 32
  %v2989 = vpop.permute.xlu0 %2988
  %v2991 = vadd.f32 %v2981, %v2989
  %v2992 = vtanh.pop %v2991
  %2994 = vrot.lane.b32.xlu0 %v2992, 64
  %v2995 = vpop.permute.xlu0 %2994
  %v2997 = vmul.f32 %v2976, %v2995
  %v2999 = vrot.slane %v2997, 2
  %3000 = vrot.lane.b32.xlu0 %v2999, 32
  %v3001 = vpop.permute.xlu0 %3000
  %v3002 = vsel %vm1556, %v3001, 0
  %3004 = vmatprep.subr.mxu0 0.0
  %3005 = vmatpush1.msra.mxu0 0.0
  %3006 = vmatprep.subr.mxu0 0.0
  %3007 = vmatpush1.msra.mxu0 0.0
  %3008 = vmatprep.subr.mxu0 0.0
  %3009 = vmatpush1.msra.mxu0 0.0
  %3010 = vmatprep.subr.mxu0 0.0
  %3011 = vmatpush1.msra.mxu0 0.0
  %3012 = vmatprep.subr.mxu0 0.0
  %3013 = vmatpush1.msra.mxu0 0.0
  %3014 = vmatprep.subr.mxu0 0.0
  %3015 = vmatpush1.msra.mxu0 0.0
  %3016 = vmatprep.subr.mxu0 0.0
  %3017 = vmatpush1.msra.mxu0 0.0
  %3018 = vmatprep.subr.mxu0 0.0
  %3019 = vmatpush1.msra.mxu0 0.0
  %3020 = vmatprep.subr.mxu0 0.0
  %3021 = vmatpush1.msra.mxu0 0.0
  %3022 = vmatprep.subr.mxu0 0.0
  %3023 = vmatpush1.msra.mxu0 0.0
  %3024 = vmatprep.subr.mxu0 0.0
  %3025 = vmatpush1.msra.mxu0 0.0
  %3026 = vmatprep.subr.mxu0 0.0
  %3027 = vmatpush1.msra.mxu0 0.0
  %3028 = vmatprep.subr.mxu0 0.0
  %3029 = vmatpush1.msra.mxu0 %v1555
  %3030 = vmatprep.subr.mxu0 0.0
  %3031 = vmatpush1.msra.mxu0 %v1554
  %3032 = vmatprep.subr.mxu0 0.0
  %3033 = vmatpush1.msra.mxu0 %v1553
  %3034 = vmatprep.subr.mxu0 0.0
  %3035 = vmatpush1.msra.mxu0 %v1552
  %3036 = vmatprep.subr.mxu0 0.0
  %3037 = vmatpush2.msra.mxu0 0.0
  %3038 = vmatprep.subr.mxu0 0.0
  %3039 = vmatpush2.msra.mxu0 0.0
  %3040 = vmatprep.subr.mxu0 0.0
  %3041 = vmatpush2.msra.mxu0 0.0
  %3042 = vmatprep.subr.mxu0 0.0
  %3043 = vmatpush2.msra.mxu0 0.0
  %3044 = vmatprep.subr.mxu0 0.0
  %3045 = vmatpush2.msra.mxu0 0.0
  %3046 = vmatprep.subr.mxu0 0.0
  %3047 = vmatpush2.msra.mxu0 0.0
  %3048 = vmatprep.subr.mxu0 0.0
  %3049 = vmatpush2.msra.mxu0 0.0
  %3050 = vmatprep.subr.mxu0 0.0
  %3051 = vmatpush2.msra.mxu0 0.0
  %3052 = vmatprep.subr.mxu0 0.0
  %3053 = vmatpush2.msra.mxu0 0.0
  %3054 = vmatprep.subr.mxu0 0.0
  %3055 = vmatpush2.msra.mxu0 0.0
  %3056 = vmatprep.subr.mxu0 0.0
  %3057 = vmatpush2.msra.mxu0 0.0
  %3058 = vmatprep.subr.mxu0 0.0
  %3059 = vmatpush2.msra.mxu0 0.0
  %3060 = vmatprep.subr.mxu0 0.0
  %3061 = vmatpush2.msra.mxu0 0.0
  %3062 = vmatprep.subr.mxu0 0.0
  %3063 = vmatpush2.msra.mxu0 0.0
  %3064 = vmatprep.subr.mxu0 0.0
  %3065 = vmatpush2.msra.mxu0 0.0
  %3066 = vmatprep.subr.mxu0 0.0
  %3067 = vmatpush2.msra.mxu0 0.0
  %3068 = vmatprep.mubr.f32.mxu0 0.0
  %3069 = vmatmul.mubr.f32.gmra.mxu0 %v3002
  %v3070 = vpop.f32.mrf.mxu0
  %v3071 = vadd.f32 %v2234, %v3070
  %v3072 = vpop.f32.mrf.mxu0
  %3073 = vdwg.mxu0
  %3074 = vst [vmem:[%s5 + $0xa] sm:$0x3] %v3071
  %v3075 = vpack.c.bf16 %v2997, %v2997
  %v3077 = vrot.slane %v3075, 1
  %3078 = vrot.lane.b32.xlu0 %v3077, 32
  %v3079 = vpop.permute.xlu0 %3078
  %v3081 = vsel %vm1556, %v3079, 0
  %3083 = vmatprep.subr.bf16.mxu0 0
  %3084 = vmatpush1.bf16.msra.mxu0 0
  %3085 = vmatprep.subr.bf16.mxu0 0
  %3086 = vmatpush1.bf16.msra.mxu0 0
  %3087 = vmatprep.subr.bf16.mxu0 0
  %3088 = vmatpush1.bf16.msra.mxu0 0
  %3089 = vmatprep.subr.bf16.mxu0 0
  %3090 = vmatpush1.bf16.msra.mxu0 0
  %3091 = vmatprep.subr.bf16.mxu0 0
  %3092 = vmatpush1.bf16.msra.mxu0 0
  %3093 = vmatprep.subr.bf16.mxu0 0
  %3094 = vmatpush1.bf16.msra.mxu0 0
  %3095 = vmatprep.subr.bf16.mxu0 0
  %3096 = vmatpush1.bf16.msra.mxu0 %v1551
  %3097 = vmatprep.subr.bf16.mxu0 0
  %3098 = vmatpush1.bf16.msra.mxu0 %v1550
  %3099 = vmatprep.subr.bf16.mxu0 0
  %3100 = vmatpush2.bf16.msra.mxu0 0
  %3101 = vmatprep.subr.bf16.mxu0 0
  %3102 = vmatpush2.bf16.msra.mxu0 0
  %3103 = vmatprep.subr.bf16.mxu0 0
  %3104 = vmatpush2.bf16.msra.mxu0 0
  %3105 = vmatprep.subr.bf16.mxu0 0
  %3106 = vmatpush2.bf16.msra.mxu0 0
  %3107 = vmatprep.subr.bf16.mxu0 0
  %3108 = vmatpush2.bf16.msra.mxu0 0
  %3109 = vmatprep.subr.bf16.mxu0 0
  %3110 = vmatpush2.bf16.msra.mxu0 0
  %3111 = vmatprep.subr.bf16.mxu0 0
  %3112 = vmatpush2.bf16.msra.mxu0 0
  %3113 = vmatprep.subr.bf16.mxu0 0
  %3114 = vmatpush2.bf16.msra.mxu0 0
  %3115 = vmatprep.mubr.bf16.mxu0 0
  %3116 = vmatmul.mubr.bf16.gmra.mxu0 %v3081
  %v3117 = vpop.f32.mrf.mxu0
  %v3118 = vadd.f32 0.0, %v3117
  %v3119 = vpop.f32.mrf.mxu0
  %v3120 = vpop.f32.mrf.mxu0
  %v3121 = vpop.f32.mrf.mxu0
  %3122 = vdwg.mxu0
  %v3124 = vrot.slane %v3118, 4
  %v3126 = vadd.f32 %v1537, %v3124
  %v3127 = vmul.f32 %v3126, 0.5
  %v3128 = vtanh.pop %v3127
  %v3129 = vmul.f32 %v3128, 0.5
  %v3130 = vadd.f32 %v3129, 0.5
  %v3131 = vtanh.pop %v3126
  %v3133 = vrot.slane %v2991, 6
  %v3135 = vmul.f32 %v3130, %v3133
  %3137 = vrot.lane.b32.xlu0 %v3131, 64
  %v3138 = vpop.permute.xlu0 %3137
  %v3140 = vmul.f32 %v3130, %v3138
  %3142 = vrot.lane.b32.xlu0 %v3140, 32
  %v3143 = vpop.permute.xlu0 %3142
  %v3145 = vadd.f32 %v3135, %v3143
  %v3146 = vtanh.pop %v3145
  %3148 = vrot.lane.b32.xlu0 %v3146, 64
  %v3149 = vpop.permute.xlu0 %3148
  %v3151 = vmul.f32 %v3130, %v3149
  %v3153 = vrot.slane %v3151, 4
  %3154 = vrot.lane.b32.xlu0 %v3153, 32
  %v3155 = vpop.permute.xlu0 %3154
  %v3156 = vsel %vm1556, %v3155, 0
  %3158 = vmatprep.subr.mxu0 0.0
  %3159 = vmatpush1.msra.mxu0 0.0
  %3160 = vmatprep.subr.mxu0 0.0
  %3161 = vmatpush1.msra.mxu0 0.0
  %3162 = vmatprep.subr.mxu0 0.0
  %3163 = vmatpush1.msra.mxu0 0.0
  %3164 = vmatprep.subr.mxu0 0.0
  %3165 = vmatpush1.msra.mxu0 0.0
  %3166 = vmatprep.subr.mxu0 0.0
  %3167 = vmatpush1.msra.mxu0 0.0
  %3168 = vmatprep.subr.mxu0 0.0
  %3169 = vmatpush1.msra.mxu0 0.0
  %3170 = vmatprep.subr.mxu0 0.0
  %3171 = vmatpush1.msra.mxu0 0.0
  %3172 = vmatprep.subr.mxu0 0.0
  %3173 = vmatpush1.msra.mxu0 0.0
  %3174 = vmatprep.subr.mxu0 0.0
  %3175 = vmatpush1.msra.mxu0 0.0
  %3176 = vmatprep.subr.mxu0 0.0
  %3177 = vmatpush1.msra.mxu0 0.0
  %3178 = vmatprep.subr.mxu0 0.0
  %3179 = vmatpush1.msra.mxu0 0.0
  %3180 = vmatprep.subr.mxu0 0.0
  %3181 = vmatpush1.msra.mxu0 0.0
  %3182 = vmatprep.subr.mxu0 0.0
  %3183 = vmatpush1.msra.mxu0 %v1555
  %3184 = vmatprep.subr.mxu0 0.0
  %3185 = vmatpush1.msra.mxu0 %v1554
  %3186 = vmatprep.subr.mxu0 0.0
  %3187 = vmatpush1.msra.mxu0 %v1553
  %3188 = vmatprep.subr.mxu0 0.0
  %3189 = vmatpush1.msra.mxu0 %v1552
  %3190 = vmatprep.subr.mxu0 0.0
  %3191 = vmatpush2.msra.mxu0 0.0
  %3192 = vmatprep.subr.mxu0 0.0
  %3193 = vmatpush2.msra.mxu0 0.0
  %3194 = vmatprep.subr.mxu0 0.0
  %3195 = vmatpush2.msra.mxu0 0.0
  %3196 = vmatprep.subr.mxu0 0.0
  %3197 = vmatpush2.msra.mxu0 0.0
  %3198 = vmatprep.subr.mxu0 0.0
  %3199 = vmatpush2.msra.mxu0 0.0
  %3200 = vmatprep.subr.mxu0 0.0
  %3201 = vmatpush2.msra.mxu0 0.0
  %3202 = vmatprep.subr.mxu0 0.0
  %3203 = vmatpush2.msra.mxu0 0.0
  %3204 = vmatprep.subr.mxu0 0.0
  %3205 = vmatpush2.msra.mxu0 0.0
  %3206 = vmatprep.subr.mxu0 0.0
  %3207 = vmatpush2.msra.mxu0 0.0
  %3208 = vmatprep.subr.mxu0 0.0
  %3209 = vmatpush2.msra.mxu0 0.0
  %3210 = vmatprep.subr.mxu0 0.0
  %3211 = vmatpush2.msra.mxu0 0.0
  %3212 = vmatprep.subr.mxu0 0.0
  %3213 = vmatpush2.msra.mxu0 0.0
  %3214 = vmatprep.subr.mxu0 0.0
  %3215 = vmatpush2.msra.mxu0 0.0
  %3216 = vmatprep.subr.mxu0 0.0
  %3217 = vmatpush2.msra.mxu0 0.0
  %3218 = vmatprep.subr.mxu0 0.0
  %3219 = vmatpush2.msra.mxu0 0.0
  %3220 = vmatprep.subr.mxu0 0.0
  %3221 = vmatpush2.msra.mxu0 0.0
  %3222 = vmatprep.mubr.f32.mxu0 0.0
  %3223 = vmatmul.mubr.f32.gmra.mxu0 %v3156
  %v3224 = vpop.f32.mrf.mxu0
  %v3225 = vadd.f32 %v2234, %v3224
  %v3226 = vpop.f32.mrf.mxu0
  %3227 = vdwg.mxu0
  %3228 = vst [vmem:[%s5 + $0xc] sm:$0x3] %v3225
  %v3229 = vpack.c.bf16 %v3151, %v3151
  %v3231 = vrot.slane %v3229, 2
  %3232 = vrot.lane.b32.xlu0 %v3231, 32
  %v3233 = vpop.permute.xlu0 %3232
  %v3235 = vsel %vm1556, %v3233, 0
  %3237 = vmatprep.subr.bf16.mxu0 0
  %3238 = vmatpush1.bf16.msra.mxu0 0
  %3239 = vmatprep.subr.bf16.mxu0 0
  %3240 = vmatpush1.bf16.msra.mxu0 0
  %3241 = vmatprep.subr.bf16.mxu0 0
  %3242 = vmatpush1.bf16.msra.mxu0 0
  %3243 = vmatprep.subr.bf16.mxu0 0
  %3244 = vmatpush1.bf16.msra.mxu0 0
  %3245 = vmatprep.subr.bf16.mxu0 0
  %3246 = vmatpush1.bf16.msra.mxu0 0
  %3247 = vmatprep.subr.bf16.mxu0 0
  %3248 = vmatpush1.bf16.msra.mxu0 0
  %3249 = vmatprep.subr.bf16.mxu0 0
  %3250 = vmatpush1.bf16.msra.mxu0 %v1551
  %3251 = vmatprep.subr.bf16.mxu0 0
  %3252 = vmatpush1.bf16.msra.mxu0 %v1550
  %3253 = vmatprep.subr.bf16.mxu0 0
  %3254 = vmatpush2.bf16.msra.mxu0 0
  %3255 = vmatprep.subr.bf16.mxu0 0
  %3256 = vmatpush2.bf16.msra.mxu0 0
  %3257 = vmatprep.subr.bf16.mxu0 0
  %3258 = vmatpush2.bf16.msra.mxu0 0
  %3259 = vmatprep.subr.bf16.mxu0 0
  %3260 = vmatpush2.bf16.msra.mxu0 0
  %3261 = vmatprep.subr.bf16.mxu0 0
  %3262 = vmatpush2.bf16.msra.mxu0 0
  %3263 = vmatprep.subr.bf16.mxu0 0
  %3264 = vmatpush2.bf16.msra.mxu0 0
  %3265 = vmatprep.subr.bf16.mxu0 0
  %3266 = vmatpush2.bf16.msra.mxu0 0
  %3267 = vmatprep.subr.bf16.mxu0 0
  %3268 = vmatpush2.bf16.msra.mxu0 0
  %3269 = vmatprep.mubr.bf16.mxu0 0
  %3270 = vmatmul.mubr.bf16.gmra.mxu0 %v3235
  %v3271 = vpop.f32.mrf.mxu0
  %v3272 = vadd.f32 0.0, %v3271
  %v3273 = vpop.f32.mrf.mxu0
  %v3274 = vpop.f32.mrf.mxu0
  %v3275 = vpop.f32.mrf.mxu0
  %3276 = vdwg.mxu0
  %v3278 = vrot.slane %v3272, 2
  %v3280 = vadd.f32 %v1537, %v3278
  %v3281 = vmul.f32 %v3280, 0.5
  %v3282 = vtanh.pop %v3281
  %v3283 = vmul.f32 %v3282, 0.5
  %v3284 = vadd.f32 %v3283, 0.5
  %v3285 = vtanh.pop %v3280
  %v3287 = vrot.slane %v3145, 6
  %v3289 = vmul.f32 %v3284, %v3287
  %3291 = vrot.lane.b32.xlu0 %v3285, 64
  %v3292 = vpop.permute.xlu0 %3291
  %v3294 = vmul.f32 %v3284, %v3292
  %3296 = vrot.lane.b32.xlu0 %v3294, 32
  %v3297 = vpop.permute.xlu0 %3296
  %v3299 = vadd.f32 %v3289, %v3297
  %v3300 = vtanh.pop %v3299
  %3302 = vrot.lane.b32.xlu0 %v3300, 64
  %v3303 = vpop.permute.xlu0 %3302
  %v3305 = vmul.f32 %v3284, %v3303
  %v3307 = vrot.slane %v3305, 6
  %3308 = vrot.lane.b32.xlu0 %v3307, 32
  %v3309 = vpop.permute.xlu0 %3308
  %v3310 = vsel %vm1556, %v3309, 0
  %3312 = vmatprep.subr.mxu0 0.0
  %3313 = vmatpush1.msra.mxu0 0.0
  %3314 = vmatprep.subr.mxu0 0.0
  %3315 = vmatpush1.msra.mxu0 0.0
  %3316 = vmatprep.subr.mxu0 0.0
  %3317 = vmatpush1.msra.mxu0 0.0
  %3318 = vmatprep.subr.mxu0 0.0
  %3319 = vmatpush1.msra.mxu0 0.0
  %3320 = vmatprep.subr.mxu0 0.0
  %3321 = vmatpush1.msra.mxu0 0.0
  %3322 = vmatprep.subr.mxu0 0.0
  %3323 = vmatpush1.msra.mxu0 0.0
  %3324 = vmatprep.subr.mxu0 0.0
  %3325 = vmatpush1.msra.mxu0 0.0
  %3326 = vmatprep.subr.mxu0 0.0
  %3327 = vmatpush1.msra.mxu0 0.0
  %3328 = vmatprep.subr.mxu0 0.0
  %3329 = vmatpush1.msra.mxu0 0.0
  %3330 = vmatprep.subr.mxu0 0.0
  %3331 = vmatpush1.msra.mxu0 0.0
  %3332 = vmatprep.subr.mxu0 0.0
  %3333 = vmatpush1.msra.mxu0 0.0
  %3334 = vmatprep.subr.mxu0 0.0
  %3335 = vmatpush1.msra.mxu0 0.0
  %3336 = vmatprep.subr.mxu0 0.0
  %3337 = vmatpush1.msra.mxu0 %v1555
  %3338 = vmatprep.subr.mxu0 0.0
  %3339 = vmatpush1.msra.mxu0 %v1554
  %3340 = vmatprep.subr.mxu0 0.0
  %3341 = vmatpush1.msra.mxu0 %v1553
  %3342 = vmatprep.subr.mxu0 0.0
  %3343 = vmatpush1.msra.mxu0 %v1552
  %3344 = vmatprep.subr.mxu0 0.0
  %3345 = vmatpush2.msra.mxu0 0.0
  %3346 = vmatprep.subr.mxu0 0.0
  %3347 = vmatpush2.msra.mxu0 0.0
  %3348 = vmatprep.subr.mxu0 0.0
  %3349 = vmatpush2.msra.mxu0 0.0
  %3350 = vmatprep.subr.mxu0 0.0
  %3351 = vmatpush2.msra.mxu0 0.0
  %3352 = vmatprep.subr.mxu0 0.0
  %3353 = vmatpush2.msra.mxu0 0.0
  %3354 = vmatprep.subr.mxu0 0.0
  %3355 = vmatpush2.msra.mxu0 0.0
  %3356 = vmatprep.subr.mxu0 0.0
  %3357 = vmatpush2.msra.mxu0 0.0
  %3358 = vmatprep.subr.mxu0 0.0
  %3359 = vmatpush2.msra.mxu0 0.0
  %3360 = vmatprep.subr.mxu0 0.0
  %3361 = vmatpush2.msra.mxu0 0.0
  %3362 = vmatprep.subr.mxu0 0.0
  %3363 = vmatpush2.msra.mxu0 0.0
  %3364 = vmatprep.subr.mxu0 0.0
  %3365 = vmatpush2.msra.mxu0 0.0
  %3366 = vmatprep.subr.mxu0 0.0
  %3367 = vmatpush2.msra.mxu0 0.0
  %3368 = vmatprep.subr.mxu0 0.0
  %3369 = vmatpush2.msra.mxu0 0.0
  %3370 = vmatprep.subr.mxu0 0.0
  %3371 = vmatpush2.msra.mxu0 0.0
  %3372 = vmatprep.subr.mxu0 0.0
  %3373 = vmatpush2.msra.mxu0 0.0
  %3374 = vmatprep.subr.mxu0 0.0
  %3375 = vmatpush2.msra.mxu0 0.0
  %3376 = vmatprep.mubr.f32.mxu0 0.0
  %3377 = vmatmul.mubr.f32.gmra.mxu0 %v3310
  %v3378 = vpop.f32.mrf.mxu0
  %v3379 = vadd.f32 %v2234, %v3378
  %v3380 = vpop.f32.mrf.mxu0
  %3381 = vdwg.mxu0
  %3382 = vst [vmem:[%s5 + $0xe] sm:$0x3] %v3379
  // Predicated region
  $region22: #{seq2seq_forward.1} parent=0 // pred_check
    _
  $region23: #{seq2seq_forward.1} parent=0 // pred_check_branch
    %3384 = sbr.rel (0) target = $region25
  $region24: #{seq2seq_forward.1} parent=0 // pred_region
    _
  $region25: #{seq2seq_forward.1} parent=0 // pred_fallthru
    _
  // Predicated region
  $region26: #{seq2seq_forward.1} parent=0 // pred_check
    _
  $region27: #{seq2seq_forward.1} parent=0 // pred_check_branch
    %3386 = sbr.rel (0) target = $region29
  $region28: #{seq2seq_forward.1} parent=0 // pred_region
    _
  $region29: #{seq2seq_forward.1} parent=0 // pred_fallthru
    _

</llo_original>
